<compile_context>
chip_gen: v6e
topology: v6e:2x2x1
jax: 0.10.0
libtpu: 0.0.40
codegen_flags: <defaults>
</compile_context>

<pallas_src>
import numpy as np

import jax
import jax.numpy as jnp
from jax.experimental import pallas as pl
from jax.experimental.pallas import tpu as pltpu

# ----------------------------- config ---------------------------------------
KERNEL_SIZE = 5
PADDING = 2
STRIDE = 2
ENCODER_CHANNELS = (8, 16, 32)
CHANNEL_IN = 3
IMG = 16                       # input spatial size
FC_INPUT = 2                   # spatial size after 3 stride-2 convs (16->8->4->2)
FC_OUTPUT = 32
Z_SIZE = 16
BN_EPS = 1e-5
BATCH = 2
HEAD_PAD = 128                 # lane-dense fused [mu | logvar | zero-pad] width

# MXU operand dtype for all GEMMs (accumulation is always fp32).
MATMUL_DTYPE = jnp.bfloat16


def _out_size(hin):
    return (hin + 2 * PADDING - KERNEL_SIZE) // STRIDE + 1


_sp = []
_h = IMG
for _c in ENCODER_CHANNELS:
    _h = _out_size(_h)
    _sp.append(_h)
assert _sp[-1] == FC_INPUT
# Per conv layer: (C, S) with S = Ho*Wo (channel blocks contiguous in CHW flatten).
LAYER_CS = tuple((c, s * s) for c, s in zip(ENCODER_CHANNELS, _sp))


# --------------------------- fused Pallas kernel -----------------------------
def encoder_kernel(x_ref,
                   w0, p0, b0,
                   w1, p1, b1,
                   w2, p2, b2,
                   wfc, wh, pv, out_ref):
    """Entire Encoder forward in one kernel invocation, everything in VMEM.

    x_ref : (N, 3*16*16) fp32, NCHW-flattened input
    w_i   : (Fin_i, C_i*S_i) MATMUL_DTYPE dense Toeplitz conv matrices
    p_i   : (C_i*S_i, C_i)   0/1 channel-pooling matrix   (MATMUL_DTYPE)
    b_i   : (C_i, C_i*S_i)   0/1 channel-broadcast matrix (MATMUL_DTYPE)
    wfc   : (128, 32)        fc weight (transposed)
    wh    : (32, 128)        fused, lane-padded [mu_w.T | var_w.T | 0] head
    pv    : (9, 128) fp32    packed per-channel vectors:
              rows 2i / 2i+1 : bn_i gamma / beta  (first C_i lanes)
              row 6 / 7      : fc-BN gamma / beta (first 32 lanes)
              row 8          : [mu_b | var_b | 0] (128 lanes)
    out   : (N, 128) fp32    [mu | logvar | 0]
    """
    n = x_ref.shape[0]

    def conv_bn_relu(x, w_ref, pool_ref, bcast_ref, gamma, beta, c, s):
        # Conv as a dense Toeplitz GEMM: (n, Fin) @ (Fin, C*S).
        y = jnp.dot(x.astype(MATMUL_DTYPE), w_ref[...],
                    preferred_element_type=jnp.float32)                # (n, C*S)
        inv_cnt = 1.0 / float(n * s)                                   # 1/(N*Ho*Wo)
        # Per-channel batch statistics via two INDEPENDENT 0/1 pooling matmuls
        # (they issue back-to-back on the MXU): mean and E[y^2].
        sum_y = jnp.sum(y, axis=0, keepdims=True)                      # (1, C*S) fp32
        sum_y2 = jnp.sum(y * y, axis=0, keepdims=True)                 # (1, C*S) fp32
        mean_c = jnp.dot(sum_y.astype(MATMUL_DTYPE), pool_ref[...],
                         preferred_element_type=jnp.float32) * inv_cnt  # (1, C)
        ey2_c = jnp.dot(sum_y2.astype(MATMUL_DTYPE), pool_ref[...],
                        preferred_element_type=jnp.float32) * inv_cnt   # (1, C)
        var_c = jnp.maximum(ey2_c - mean_c * mean_c, 0.0)               # biased var
        # Fold gamma / rsqrt / beta / mean into a per-channel affine ...
        scale_c = gamma * jax.lax.rsqrt(var_c + BN_EPS)                 # (1, C)
        shift_c = beta - mean_c * scale_c                               # (1, C)
        # ... and broadcast it with two independent 0/1 matmuls.
        scale_cols = jnp.dot(scale_c.astype(MATMUL_DTYPE), bcast_ref[...],
                             preferred_element_type=jnp.float32)        # (1, C*S)
        shift_cols = jnp.dot(shift_c.astype(MATMUL_DTYPE), bcast_ref[...],
                             preferred_element_type=jnp.float32)        # (1, C*S)
        return jnp.maximum(y * scale_cols + shift_cols, 0.0)            # (n, C*S)

    x = x_ref[...]                                    # (N, 768) fp32, NCHW-flat
    for i, (w_ref, pool_ref, bcast_ref) in enumerate(
            ((w0, p0, b0), (w1, p1, b1), (w2, p2, b2))):
        c, s = LAYER_CS[i]
        gamma = pv[2 * i:2 * i + 1, 0:c]
        beta = pv[2 * i + 1:2 * i + 2, 0:c]
        x = conv_bn_relu(x, w_ref, pool_ref, bcast_ref, gamma, beta, c, s)
        # shapes: (N,512) -> (N,256) -> (N,128)

    # fc: Linear(bias=False) + BatchNorm1d(batch stats) + ReLU.  x is already
    # in PyTorch's NCHW flatten order, so fc_w.T applies directly.
    h = jnp.dot(x.astype(MATMUL_DTYPE), wfc[...],
                preferred_element_type=jnp.float32)                    # (N, 32)
    hm = jnp.mean(h, axis=0, keepdims=True)
    d = h - hm
    hv = jnp.mean(d * d, axis=0, keepdims=True)
    gfc = pv[6:7, 0:FC_OUTPUT]
    bfc = pv[7:8, 0:FC_OUTPUT]
    h = jnp.maximum(d * (gfc * jax.lax.rsqrt(hv + BN_EPS)) + bfc, 0.0)

    # Fused lane-dense [mu | logvar | 0-pad] head -> single (N, 128) store.
    out_ref[...] = jnp.dot(h.astype(MATMUL_DTYPE), wh[...],
                           preferred_element_type=jnp.float32) + pv[8:9, :]


_VMEM = pl.BlockSpec(memory_space=pltpu.MemorySpace.VMEM)

_TRANSCENDENTALS = sum(c for c, _ in LAYER_CS) + FC_OUTPUT   # rsqrt lanes


@jax.jit
def encoder_forward(prep, x_nchw):
    """x_nchw: (N, 3, IMG, IMG) fp32 -> (mu, logvar), each (N, Z_SIZE) fp32."""
    n = x_nchw.shape[0]
    x_flat = x_nchw.reshape(n, -1)      # NCHW flatten: free, lane dim = 768
    # Advisory cost estimate so XLA schedules the custom call sensibly.
    gemm_ws = (prep[0], prep[3], prep[6], prep[9], prep[10])
    flops = sum(2 * n * int(w.shape[0]) * int(w.shape[1]) for w in gemm_ws)
    for c, s in LAYER_CS:
        flops += 8 * c * c * s          # 2 pool + 2 bcast M=1 stats matmuls
    bytes_accessed = (x_flat.size * x_flat.dtype.itemsize
                      + sum(int(a.size) * a.dtype.itemsize for a in prep)
                      + n * HEAD_PAD * 4)
    # Total VMEM footprint (weights + activations) is ~1.2 MiB, far below the
    # scoped limit on v5e/v6e/v7x, so a single grid-less call is optimal here.
    # If batch N is ever scaled up: add a grid over batch rows with
    # dimension_semantics=("parallel",), keep every weight index_map constant
    # (block 0) so weights are not re-streamed, and size the batch tile for
    # v7x's 64 MiB VMEM (~1-2K rows) rather than v5e/v6e's 128 MiB.
    out = pl.pallas_call(
        encoder_kernel,
        out_shape=jax.ShapeDtypeStruct((n, HEAD_PAD), jnp.float32),
        in_specs=[_VMEM] * (1 + len(prep)),
        out_specs=_VMEM,
        cost_estimate=pl.CostEstimate(flops=flops,
                                      transcendentals=_TRANSCENDENTALS,
                                      bytes_accessed=bytes_accessed),
    )(x_flat, *prep)
    return out[:, :Z_SIZE], out[:, Z_SIZE:2 * Z_SIZE]


# ------------------------- parameter preparation -----------------------------
def _conv_dense_matrix(w, hin, win, stride, pad):
    """Dense (Cin*Hin*Win, Cout*Ho*Wo) matrix equivalent to Conv2d(stride, pad,
    bias=False) on NCHW-flattened input, producing NCHW-flattened output."""
    cout, cin, kh, kw = w.shape
    ho = (hin + 2 * pad - kh) // stride + 1
    wo = (win + 2 * pad - kw) // stride + 1
    dense = np.zeros((cin, hin, win, cout, ho, wo), np.float32)
    for ci in range(cin):
        for r in range(kh):
            for c in range(kw):
                for oh in range(ho):
                    ih = oh * stride + r - pad
                    if ih < 0 or ih >= hin:
                        continue
                    for ow in range(wo):
                        iw = ow * stride + c - pad
                        if iw < 0 or iw >= win:
                            continue
                        dense[ci, ih, iw, :, oh, ow] += w[:, ci, r, c]
    return dense.reshape(cin * hin * win, cout * ho * wo)


def prepare_params(params):
    """One-time (host-side) conversion of PyTorch-layout params into kernel
    operands: conv -> dense Toeplitz GEMM matrices (NCHW flatten baked in),
    0/1 pooling / broadcast matrices in MATMUL_DTYPE, transposed fc weight,
    fused lane-padded [mu | logvar] head, and one packed (9,128) vector array
    holding every tiny per-channel parameter."""
    prep = []
    cin, hin = CHANNEL_IN, IMG
    for i, cout in enumerate(ENCODER_CHANNELS):
        w = np.asarray(params[f"conv{i}_w"], np.float32)
        dense = _conv_dense_matrix(w, hin, hin, STRIDE, PADDING)
        ho = (hin + 2 * PADDING - KERNEL_SIZE) // STRIDE + 1
        s = ho * ho
        # Guard the BN-statistics layout assumptions (per review).
        assert dense.shape == (cin * hin * hin, cout * s)
        assert LAYER_CS[i] == (cout, s) and (cout * s) % cout == 0
        pool = np.repeat(np.eye(cout, dtype=np.float32), s, axis=0)   # (C*S, C)
        bcast = pool.T.copy()                                          # (C, C*S)
        prep += [jnp.asarray(dense, dtype=MATMUL_DTYPE),
                 jnp.asarray(pool, dtype=MATMUL_DTYPE),
                 jnp.asarray(bcast, dtype=MATMUL_DTYPE)]
        cin, hin = cout, ho

    wfc = np.asarray(params["fc_w"], np.float32).T                    # (Fin, 32)
    w_head = np.zeros((FC_OUTPUT, HEAD_PAD), np.float32)
    w_head[:, :Z_SIZE] = np.asarray(params["mu_w"], np.float32).T
    w_head[:, Z_SIZE:2 * Z_SIZE] = np.asarray(params["var_w"], np.float32).T
    prep += [jnp.asarray(wfc, dtype=MATMUL_DTYPE),
             jnp.asarray(w_head, dtype=MATMUL_DTYPE)]

    pv = np.zeros((9, HEAD_PAD), np.float32)
    for i, c in enumerate(ENCODER_CHANNELS):
        pv[2 * i, :c] = np.asarray(params[f"bn{i}_gamma"], np.float32)
        pv[2 * i + 1, :c] = np.asarray(params[f"bn{i}_beta"], np.float32)
    pv[6, :FC_OUTPUT] = np.asarray(params["fc_bn_gamma"], np.float32)
    pv[7, :FC_OUTPUT] = np.asarray(params["fc_bn_beta"], np.float32)
    pv[8, :Z_SIZE] = np.asarray(params["mu_b"], np.float32)
    pv[8, Z_SIZE:2 * Z_SIZE] = np.asarray(params["var_b"], np.float32)
    prep.append(jnp.asarray(pv))
    return tuple(prep)


def init_params(key):
    """Deterministic synthetic parameters matching the PyTorch module shapes."""
    params = {}
    keys = jax.random.split(key, 16)
    ki = 0
    cin = CHANNEL_IN
    for i, cout in enumerate(ENCODER_CHANNELS):
        params[f"conv{i}_w"] = jax.random.normal(
            keys[ki], (cout, cin, KERNEL_SIZE, KERNEL_SIZE), jnp.float32) * 0.05
        ki += 1
        params[f"bn{i}_gamma"] = 1.0 + 0.1 * jax.random.normal(
            keys[ki], (cout,), jnp.float32)
        ki += 1
        params[f"bn{i}_beta"] = 0.05 * jax.random.normal(
            keys[ki], (cout,), jnp.float32)
        ki += 1
        cin = cout

    fin = FC_INPUT * FC_INPUT * ENCODER_CHANNELS[-1]
    params["fc_w"] = jax.random.normal(keys[ki], (FC_OUTPUT, fin),
                                       jnp.float32) * 0.05
    ki += 1
    params["fc_bn_gamma"] = 1.0 + 0.1 * jax.random.normal(
        keys[ki], (FC_OUTPUT,), jnp.float32)
    ki += 1
    params["fc_bn_beta"] = 0.05 * jax.random.normal(
        keys[ki], (FC_OUTPUT,), jnp.float32)
    ki += 1
    params["mu_w"] = jax.random.normal(keys[ki], (Z_SIZE, FC_OUTPUT),
                                       jnp.float32) * 0.05
    ki += 1
    params["mu_b"] = 0.01 * jax.random.normal(keys[ki], (Z_SIZE,), jnp.float32)
    ki += 1
    params["var_w"] = jax.random.normal(keys[ki], (Z_SIZE, FC_OUTPUT),
                                        jnp.float32) * 0.05
    ki += 1
    params["var_b"] = 0.01 * jax.random.normal(keys[ki], (Z_SIZE,), jnp.float32)
    return params


# ------------------------- host-side self-checks -----------------------------
def _selfcheck_dense_matrices(params):
    """float64 numpy check: the dense Toeplitz matrices reproduce Conv2d
    (stride=2, pad=2, bias=False) exactly.  Pure host-side, no TPU involved."""
    rng = np.random.RandomState(0)
    cin, hin = CHANNEL_IN, IMG
    for i, cout in enumerate(ENCODER_CHANNELS):
        w32 = np.asarray(params[f"conv{i}_w"], np.float32)
        w = w32.astype(np.float64)
        dense = _conv_dense_matrix(w32, hin, hin, STRIDE, PADDING).astype(np.float64)
        ho = (hin + 2 * PADDING - KERNEL_SIZE) // STRIDE + 1
        x = rng.randn(2, cin, hin, hin)
        xp = np.zeros((2, cin, hin + 2 * PADDING, hin + 2 * PADDING))
        xp[:, :, PADDING:PADDING + hin, PADDING:PADDING + hin] = x
        ref = np.zeros((2, cout, ho, ho))
        for oh in range(ho):
            for ow in range(ho):
                patch = xp[:, :, oh * STRIDE:oh * STRIDE + KERNEL_SIZE,
                           ow * STRIDE:ow * STRIDE + KERNEL_SIZE]
                ref[:, :, oh, ow] = np.einsum("ncij,ocij->no", patch, w)
        got = x.reshape(2, -1) @ dense
        assert np.allclose(got, ref.reshape(2, -1), atol=1e-9), \
            f"dense conv matrix mismatch at layer {i}"
        cin, hin = cout, ho


def _reference_forward(params, x_nchw):
    """float64 numpy reference of the PyTorch Encoder forward (training-mode BN)."""
    x = np.asarray(x_nchw, np.float64).reshape(x_nchw.shape[0], -1)
    cin, hin = CHANNEL_IN, IMG
    for i, cout in enumerate(ENCODER_CHANNELS):
        dense = _conv_dense_matrix(np.asarray(params[f"conv{i}_w"], np.float32),
                                   hin, hin, STRIDE, PADDING).astype(np.float64)
        ho = (hin + 2 * PADDING - KERNEL_SIZE) // STRIDE + 1
        s = ho * ho
        y = (x @ dense).reshape(-1, cout, s)
        mean = y.mean(axis=(0, 2), keepdims=True)
        var = y.var(axis=(0, 2), keepdims=True)          # biased, training-mode BN
        g = np.asarray(params[f"bn{i}_gamma"], np.float64)[None, :, None]
        b = np.asarray(params[f"bn{i}_beta"], np.float64)[None, :, None]
        z = (y - mean) / np.sqrt(var + BN_EPS) * g + b
        x = np.maximum(z, 0.0).reshape(x.shape[0], cout * s)
        cin, hin = cout, ho
    h = x @ np.asarray(params["fc_w"], np.float64).T
    hm = h.mean(axis=0, keepdims=True)
    hv = h.var(axis=0, keepdims=True)
    h = ((h - hm) / np.sqrt(hv + BN_EPS)
         * np.asarray(params["fc_bn_gamma"], np.float64)
         + np.asarray(params["fc_bn_beta"], np.float64))
    h = np.maximum(h, 0.0)
    mu = h @ np.asarray(params["mu_w"], np.float64).T + np.asarray(params["mu_b"], np.float64)
    logvar = h @ np.asarray(params["var_w"], np.float64).T + np.asarray(params["var_b"], np.float64)
    return mu, logvar


# ------------------------------ main -----------------------------------------
if __name__ == "__main__":
    key = jax.random.PRNGKey(0)
    pkey, xkey = jax.random.split(key)
    params = init_params(pkey)

    # Verify the conv -> dense-GEMM lowering on the host before running on TPU.
    _selfcheck_dense_matrices(params)

    prep = prepare_params(params)
    x = jax.random.normal(xkey, (BATCH, CHANNEL_IN, IMG, IMG), jnp.float32)

    mu, logvar = encoder_forward(prep, x)
    jax.block_until_ready((mu, logvar))

    assert mu.shape == (BATCH, Z_SIZE) and logvar.shape == (BATCH, Z_SIZE)
    assert mu.dtype == jnp.float32 and logvar.dtype == jnp.float32
    assert bool(jnp.all(jnp.isfinite(mu))) and bool(jnp.all(jnp.isfinite(logvar)))

    # Loose-tolerance check against a float64 host reference (bf16 MXU operands
    # + batch-stat BN over tiny populations -> a few-percent relative error).
    mu_ref, logvar_ref = _reference_forward(params, np.asarray(x))
    assert np.allclose(np.asarray(mu), mu_ref, rtol=5e-2, atol=5e-2), \
        "mu mismatch vs reference"
    assert np.allclose(np.asarray(logvar), logvar_ref, rtol=5e-2, atol=5e-2), \
        "logvar mismatch vs reference"

    print("KERNEL_OK")
</pallas_src>

<mosaic_0001>
module attributes {stable_mosaic.version = 11 : i64} {
  func.func @encoder_kernel(%arg0: memref<2x768xf32, #tpu.memory_space<vmem>>, %arg1: memref<768x512xbf16, #tpu.memory_space<vmem>>, %arg2: memref<512x8xbf16, #tpu.memory_space<vmem>>, %arg3: memref<8x512xbf16, #tpu.memory_space<vmem>>, %arg4: memref<512x256xbf16, #tpu.memory_space<vmem>>, %arg5: memref<256x16xbf16, #tpu.memory_space<vmem>>, %arg6: memref<16x256xbf16, #tpu.memory_space<vmem>>, %arg7: memref<256x128xbf16, #tpu.memory_space<vmem>>, %arg8: memref<128x32xbf16, #tpu.memory_space<vmem>>, %arg9: memref<32x128xbf16, #tpu.memory_space<vmem>>, %arg10: memref<128x32xbf16, #tpu.memory_space<vmem>>, %arg11: memref<32x128xbf16, #tpu.memory_space<vmem>>, %arg12: memref<9x128xf32, #tpu.memory_space<vmem>>, %arg13: memref<2x128xf32, #tpu.memory_space<vmem>>) attributes {dimension_semantics = [], scalar_prefetch = 0 : i64, scratch_operands = 0 : i64, tpu.core_type = #tpu.core_type<tc>} {
    %c0 = arith.constant 0 : index
    %c0_0 = arith.constant 0 : index
    %0 = vector.load %arg0[%c0, %c0_0] : memref<2x768xf32, #tpu.memory_space<vmem>>, vector<2x768xf32>
    %c0_1 = arith.constant 0 : index
    %c0_2 = arith.constant 0 : index
    %1 = vector.load %arg12[%c0_1, %c0_2] : memref<9x128xf32, #tpu.memory_space<vmem>>, vector<1x8xf32>
    %c1 = arith.constant 1 : index
    %c0_3 = arith.constant 0 : index
    %2 = vector.load %arg12[%c1, %c0_3] : memref<9x128xf32, #tpu.memory_space<vmem>>, vector<1x8xf32>
    %3 = arith.truncf %0 : vector<2x768xf32> to vector<2x768xbf16>
    %c0_4 = arith.constant 0 : index
    %c0_5 = arith.constant 0 : index
    %4 = vector.load %arg1[%c0_4, %c0_5] : memref<768x512xbf16, #tpu.memory_space<vmem>>, vector<768x512xbf16>
    %cst = arith.constant dense<0.000000e+00> : vector<2x512xf32>
    %5 = tpu.matmul %3, %4, %cst {dimension_numbers = #tpu.dot_dimension_numbers<[1], [0], [0], [1], [0, 0, 1, 1], [], []>} : vector<2x768xbf16>, vector<768x512xbf16>, vector<2x512xf32> -> vector<2x512xf32>
    %cst_6 = arith.constant dense<0.000000e+00> : vector<512xf32>
    %6 = vector.multi_reduction <add>, %5, %cst_6 [0] : vector<2x512xf32> to vector<512xf32>
    %7 = vector.shape_cast %6 : vector<512xf32> to vector<1x512xf32>
    %8 = arith.mulf %5, %5 : vector<2x512xf32>
    %cst_7 = arith.constant dense<0.000000e+00> : vector<512xf32>
    %9 = vector.multi_reduction <add>, %8, %cst_7 [0] : vector<2x512xf32> to vector<512xf32>
    %10 = vector.shape_cast %9 : vector<512xf32> to vector<1x512xf32>
    %11 = arith.truncf %7 : vector<1x512xf32> to vector<1x512xbf16>
    %c0_8 = arith.constant 0 : index
    %c0_9 = arith.constant 0 : index
    %12 = vector.load %arg2[%c0_8, %c0_9] : memref<512x8xbf16, #tpu.memory_space<vmem>>, vector<512x8xbf16>
    %cst_10 = arith.constant dense<0.000000e+00> : vector<1x8xf32>
    %13 = tpu.matmul %11, %12, %cst_10 {dimension_numbers = #tpu.dot_dimension_numbers<[1], [0], [0], [1], [0, 0, 1, 1], [], []>} : vector<1x512xbf16>, vector<512x8xbf16>, vector<1x8xf32> -> vector<1x8xf32>
    %cst_11 = arith.constant 7.812500e-03 : f32
    %14 = vector.broadcast %cst_11 : f32 to vector<1x8xf32>
    %15 = arith.mulf %13, %14 : vector<1x8xf32>
    %16 = arith.truncf %10 : vector<1x512xf32> to vector<1x512xbf16>
    %c0_12 = arith.constant 0 : index
    %c0_13 = arith.constant 0 : index
    %17 = vector.load %arg2[%c0_12, %c0_13] : memref<512x8xbf16, #tpu.memory_space<vmem>>, vector<512x8xbf16>
    %cst_14 = arith.constant dense<0.000000e+00> : vector<1x8xf32>
    %18 = tpu.matmul %16, %17, %cst_14 {dimension_numbers = #tpu.dot_dimension_numbers<[1], [0], [0], [1], [0, 0, 1, 1], [], []>} : vector<1x512xbf16>, vector<512x8xbf16>, vector<1x8xf32> -> vector<1x8xf32>
    %cst_15 = arith.constant 7.812500e-03 : f32
    %19 = vector.broadcast %cst_15 : f32 to vector<1x8xf32>
    %20 = arith.mulf %18, %19 : vector<1x8xf32>
    %21 = arith.mulf %15, %15 : vector<1x8xf32>
    %22 = arith.subf %20, %21 : vector<1x8xf32>
    %cst_16 = arith.constant 0.000000e+00 : f32
    %23 = vector.broadcast %cst_16 : f32 to vector<1x8xf32>
    %24 = arith.maximumf %22, %23 : vector<1x8xf32>
    %cst_17 = arith.constant 9.99999974E-6 : f32
    %25 = vector.broadcast %cst_17 : f32 to vector<1x8xf32>
    %26 = arith.addf %24, %25 : vector<1x8xf32>
    %27 = math.rsqrt %26 : vector<1x8xf32>
    %28 = arith.mulf %1, %27 : vector<1x8xf32>
    %29 = arith.mulf %15, %28 : vector<1x8xf32>
    %30 = arith.subf %2, %29 : vector<1x8xf32>
    %31 = arith.truncf %28 : vector<1x8xf32> to vector<1x8xbf16>
    %c0_18 = arith.constant 0 : index
    %c0_19 = arith.constant 0 : index
    %32 = vector.load %arg3[%c0_18, %c0_19] : memref<8x512xbf16, #tpu.memory_space<vmem>>, vector<8x512xbf16>
    %cst_20 = arith.constant dense<0.000000e+00> : vector<1x512xf32>
    %33 = tpu.matmul %31, %32, %cst_20 {dimension_numbers = #tpu.dot_dimension_numbers<[1], [0], [0], [1], [0, 0, 1, 1], [], []>} : vector<1x8xbf16>, vector<8x512xbf16>, vector<1x512xf32> -> vector<1x512xf32>
    %34 = arith.truncf %30 : vector<1x8xf32> to vector<1x8xbf16>
    %c0_21 = arith.constant 0 : index
    %c0_22 = arith.constant 0 : index
    %35 = vector.load %arg3[%c0_21, %c0_22] : memref<8x512xbf16, #tpu.memory_space<vmem>>, vector<8x512xbf16>
    %cst_23 = arith.constant dense<0.000000e+00> : vector<1x512xf32>
    %36 = tpu.matmul %34, %35, %cst_23 {dimension_numbers = #tpu.dot_dimension_numbers<[1], [0], [0], [1], [0, 0, 1, 1], [], []>} : vector<1x8xbf16>, vector<8x512xbf16>, vector<1x512xf32> -> vector<1x512xf32>
    %37 = vector.broadcast %33 : vector<1x512xf32> to vector<2x512xf32>
    %38 = arith.mulf %5, %37 : vector<2x512xf32>
    %39 = vector.broadcast %36 : vector<1x512xf32> to vector<2x512xf32>
    %40 = arith.addf %38, %39 : vector<2x512xf32>
    %cst_24 = arith.constant 0.000000e+00 : f32
    %41 = vector.broadcast %cst_24 : f32 to vector<2x512xf32>
    %42 = arith.maximumf %40, %41 : vector<2x512xf32>
    %c2 = arith.constant 2 : index
    %c0_25 = arith.constant 0 : index
    %43 = vector.load %arg12[%c2, %c0_25] : memref<9x128xf32, #tpu.memory_space<vmem>>, vector<1x16xf32>
    %c3 = arith.constant 3 : index
    %c0_26 = arith.constant 0 : index
    %44 = vector.load %arg12[%c3, %c0_26] : memref<9x128xf32, #tpu.memory_space<vmem>>, vector<1x16xf32>
    %45 = arith.truncf %42 : vector<2x512xf32> to vector<2x512xbf16>
    %c0_27 = arith.constant 0 : index
    %c0_28 = arith.constant 0 : index
    %46 = vector.load %arg4[%c0_27, %c0_28] : memref<512x256xbf16, #tpu.memory_space<vmem>>, vector<512x256xbf16>
    %cst_29 = arith.constant dense<0.000000e+00> : vector<2x256xf32>
    %47 = tpu.matmul %45, %46, %cst_29 {dimension_numbers = #tpu.dot_dimension_numbers<[1], [0], [0], [1], [0, 0, 1, 1], [], []>} : vector<2x512xbf16>, vector<512x256xbf16>, vector<2x256xf32> -> vector<2x256xf32>
    %cst_30 = arith.constant dense<0.000000e+00> : vector<256xf32>
    %48 = vector.multi_reduction <add>, %47, %cst_30 [0] : vector<2x256xf32> to vector<256xf32>
    %49 = vector.shape_cast %48 : vector<256xf32> to vector<1x256xf32>
    %50 = arith.mulf %47, %47 : vector<2x256xf32>
    %cst_31 = arith.constant dense<0.000000e+00> : vector<256xf32>
    %51 = vector.multi_reduction <add>, %50, %cst_31 [0] : vector<2x256xf32> to vector<256xf32>
    %52 = vector.shape_cast %51 : vector<256xf32> to vector<1x256xf32>
    %53 = arith.truncf %49 : vector<1x256xf32> to vector<1x256xbf16>
    %c0_32 = arith.constant 0 : index
    %c0_33 = arith.constant 0 : index
    %54 = vector.load %arg5[%c0_32, %c0_33] : memref<256x16xbf16, #tpu.memory_space<vmem>>, vector<256x16xbf16>
    %cst_34 = arith.constant dense<0.000000e+00> : vector<1x16xf32>
    %55 = tpu.matmul %53, %54, %cst_34 {dimension_numbers = #tpu.dot_dimension_numbers<[1], [0], [0], [1], [0, 0, 1, 1], [], []>} : vector<1x256xbf16>, vector<256x16xbf16>, vector<1x16xf32> -> vector<1x16xf32>
    %cst_35 = arith.constant 3.125000e-02 : f32
    %56 = vector.broadcast %cst_35 : f32 to vector<1x16xf32>
    %57 = arith.mulf %55, %56 : vector<1x16xf32>
    %58 = arith.truncf %52 : vector<1x256xf32> to vector<1x256xbf16>
    %c0_36 = arith.constant 0 : index
    %c0_37 = arith.constant 0 : index
    %59 = vector.load %arg5[%c0_36, %c0_37] : memref<256x16xbf16, #tpu.memory_space<vmem>>, vector<256x16xbf16>
    %cst_38 = arith.constant dense<0.000000e+00> : vector<1x16xf32>
    %60 = tpu.matmul %58, %59, %cst_38 {dimension_numbers = #tpu.dot_dimension_numbers<[1], [0], [0], [1], [0, 0, 1, 1], [], []>} : vector<1x256xbf16>, vector<256x16xbf16>, vector<1x16xf32> -> vector<1x16xf32>
    %cst_39 = arith.constant 3.125000e-02 : f32
    %61 = vector.broadcast %cst_39 : f32 to vector<1x16xf32>
    %62 = arith.mulf %60, %61 : vector<1x16xf32>
    %63 = arith.mulf %57, %57 : vector<1x16xf32>
    %64 = arith.subf %62, %63 : vector<1x16xf32>
    %cst_40 = arith.constant 0.000000e+00 : f32
    %65 = vector.broadcast %cst_40 : f32 to vector<1x16xf32>
    %66 = arith.maximumf %64, %65 : vector<1x16xf32>
    %cst_41 = arith.constant 9.99999974E-6 : f32
    %67 = vector.broadcast %cst_41 : f32 to vector<1x16xf32>
    %68 = arith.addf %66, %67 : vector<1x16xf32>
    %69 = math.rsqrt %68 : vector<1x16xf32>
    %70 = arith.mulf %43, %69 : vector<1x16xf32>
    %71 = arith.mulf %57, %70 : vector<1x16xf32>
    %72 = arith.subf %44, %71 : vector<1x16xf32>
    %73 = arith.truncf %70 : vector<1x16xf32> to vector<1x16xbf16>
    %c0_42 = arith.constant 0 : index
    %c0_43 = arith.constant 0 : index
    %74 = vector.load %arg6[%c0_42, %c0_43] : memref<16x256xbf16, #tpu.memory_space<vmem>>, vector<16x256xbf16>
    %cst_44 = arith.constant dense<0.000000e+00> : vector<1x256xf32>
    %75 = tpu.matmul %73, %74, %cst_44 {dimension_numbers = #tpu.dot_dimension_numbers<[1], [0], [0], [1], [0, 0, 1, 1], [], []>} : vector<1x16xbf16>, vector<16x256xbf16>, vector<1x256xf32> -> vector<1x256xf32>
    %76 = arith.truncf %72 : vector<1x16xf32> to vector<1x16xbf16>
    %c0_45 = arith.constant 0 : index
    %c0_46 = arith.constant 0 : index
    %77 = vector.load %arg6[%c0_45, %c0_46] : memref<16x256xbf16, #tpu.memory_space<vmem>>, vector<16x256xbf16>
    %cst_47 = arith.constant dense<0.000000e+00> : vector<1x256xf32>
    %78 = tpu.matmul %76, %77, %cst_47 {dimension_numbers = #tpu.dot_dimension_numbers<[1], [0], [0], [1], [0, 0, 1, 1], [], []>} : vector<1x16xbf16>, vector<16x256xbf16>, vector<1x256xf32> -> vector<1x256xf32>
    %79 = vector.broadcast %75 : vector<1x256xf32> to vector<2x256xf32>
    %80 = arith.mulf %47, %79 : vector<2x256xf32>
    %81 = vector.broadcast %78 : vector<1x256xf32> to vector<2x256xf32>
    %82 = arith.addf %80, %81 : vector<2x256xf32>
    %cst_48 = arith.constant 0.000000e+00 : f32
    %83 = vector.broadcast %cst_48 : f32 to vector<2x256xf32>
    %84 = arith.maximumf %82, %83 : vector<2x256xf32>
    %c4 = arith.constant 4 : index
    %c0_49 = arith.constant 0 : index
    %85 = vector.load %arg12[%c4, %c0_49] : memref<9x128xf32, #tpu.memory_space<vmem>>, vector<1x32xf32>
    %c5 = arith.constant 5 : index
    %c0_50 = arith.constant 0 : index
    %86 = vector.load %arg12[%c5, %c0_50] : memref<9x128xf32, #tpu.memory_space<vmem>>, vector<1x32xf32>
    %87 = arith.truncf %84 : vector<2x256xf32> to vector<2x256xbf16>
    %c0_51 = arith.constant 0 : index
    %c0_52 = arith.constant 0 : index
    %88 = vector.load %arg7[%c0_51, %c0_52] : memref<256x128xbf16, #tpu.memory_space<vmem>>, vector<256x128xbf16>
    %cst_53 = arith.constant dense<0.000000e+00> : vector<2x128xf32>
    %89 = tpu.matmul %87, %88, %cst_53 {dimension_numbers = #tpu.dot_dimension_numbers<[1], [0], [0], [1], [0, 0, 1, 1], [], []>} : vector<2x256xbf16>, vector<256x128xbf16>, vector<2x128xf32> -> vector<2x128xf32>
    %cst_54 = arith.constant dense<0.000000e+00> : vector<128xf32>
    %90 = vector.multi_reduction <add>, %89, %cst_54 [0] : vector<2x128xf32> to vector<128xf32>
    %91 = vector.shape_cast %90 : vector<128xf32> to vector<1x128xf32>
    %92 = arith.mulf %89, %89 : vector<2x128xf32>
    %cst_55 = arith.constant dense<0.000000e+00> : vector<128xf32>
    %93 = vector.multi_reduction <add>, %92, %cst_55 [0] : vector<2x128xf32> to vector<128xf32>
    %94 = vector.shape_cast %93 : vector<128xf32> to vector<1x128xf32>
    %95 = arith.truncf %91 : vector<1x128xf32> to vector<1x128xbf16>
    %c0_56 = arith.constant 0 : index
    %c0_57 = arith.constant 0 : index
    %96 = vector.load %arg8[%c0_56, %c0_57] : memref<128x32xbf16, #tpu.memory_space<vmem>>, vector<128x32xbf16>
    %cst_58 = arith.constant dense<0.000000e+00> : vector<1x32xf32>
    %97 = tpu.matmul %95, %96, %cst_58 {dimension_numbers = #tpu.dot_dimension_numbers<[1], [0], [0], [1], [0, 0, 1, 1], [], []>} : vector<1x128xbf16>, vector<128x32xbf16>, vector<1x32xf32> -> vector<1x32xf32>
    %cst_59 = arith.constant 1.250000e-01 : f32
    %98 = vector.broadcast %cst_59 : f32 to vector<1x32xf32>
    %99 = arith.mulf %97, %98 : vector<1x32xf32>
    %100 = arith.truncf %94 : vector<1x128xf32> to vector<1x128xbf16>
    %c0_60 = arith.constant 0 : index
    %c0_61 = arith.constant 0 : index
    %101 = vector.load %arg8[%c0_60, %c0_61] : memref<128x32xbf16, #tpu.memory_space<vmem>>, vector<128x32xbf16>
    %cst_62 = arith.constant dense<0.000000e+00> : vector<1x32xf32>
    %102 = tpu.matmul %100, %101, %cst_62 {dimension_numbers = #tpu.dot_dimension_numbers<[1], [0], [0], [1], [0, 0, 1, 1], [], []>} : vector<1x128xbf16>, vector<128x32xbf16>, vector<1x32xf32> -> vector<1x32xf32>
    %cst_63 = arith.constant 1.250000e-01 : f32
    %103 = vector.broadcast %cst_63 : f32 to vector<1x32xf32>
    %104 = arith.mulf %102, %103 : vector<1x32xf32>
    %105 = arith.mulf %99, %99 : vector<1x32xf32>
    %106 = arith.subf %104, %105 : vector<1x32xf32>
    %cst_64 = arith.constant 0.000000e+00 : f32
    %107 = vector.broadcast %cst_64 : f32 to vector<1x32xf32>
    %108 = arith.maximumf %106, %107 : vector<1x32xf32>
    %cst_65 = arith.constant 9.99999974E-6 : f32
    %109 = vector.broadcast %cst_65 : f32 to vector<1x32xf32>
    %110 = arith.addf %108, %109 : vector<1x32xf32>
    %111 = math.rsqrt %110 : vector<1x32xf32>
    %112 = arith.mulf %85, %111 : vector<1x32xf32>
    %113 = arith.mulf %99, %112 : vector<1x32xf32>
    %114 = arith.subf %86, %113 : vector<1x32xf32>
    %115 = arith.truncf %112 : vector<1x32xf32> to vector<1x32xbf16>
    %c0_66 = arith.constant 0 : index
    %c0_67 = arith.constant 0 : index
    %116 = vector.load %arg9[%c0_66, %c0_67] : memref<32x128xbf16, #tpu.memory_space<vmem>>, vector<32x128xbf16>
    %cst_68 = arith.constant dense<0.000000e+00> : vector<1x128xf32>
    %117 = tpu.matmul %115, %116, %cst_68 {dimension_numbers = #tpu.dot_dimension_numbers<[1], [0], [0], [1], [0, 0, 1, 1], [], []>} : vector<1x32xbf16>, vector<32x128xbf16>, vector<1x128xf32> -> vector<1x128xf32>
    %118 = arith.truncf %114 : vector<1x32xf32> to vector<1x32xbf16>
    %c0_69 = arith.constant 0 : index
    %c0_70 = arith.constant 0 : index
    %119 = vector.load %arg9[%c0_69, %c0_70] : memref<32x128xbf16, #tpu.memory_space<vmem>>, vector<32x128xbf16>
    %cst_71 = arith.constant dense<0.000000e+00> : vector<1x128xf32>
    %120 = tpu.matmul %118, %119, %cst_71 {dimension_numbers = #tpu.dot_dimension_numbers<[1], [0], [0], [1], [0, 0, 1, 1], [], []>} : vector<1x32xbf16>, vector<32x128xbf16>, vector<1x128xf32> -> vector<1x128xf32>
    %121 = vector.broadcast %117 : vector<1x128xf32> to vector<2x128xf32>
    %122 = arith.mulf %89, %121 : vector<2x128xf32>
    %123 = vector.broadcast %120 : vector<1x128xf32> to vector<2x128xf32>
    %124 = arith.addf %122, %123 : vector<2x128xf32>
    %cst_72 = arith.constant 0.000000e+00 : f32
    %125 = vector.broadcast %cst_72 : f32 to vector<2x128xf32>
    %126 = arith.maximumf %124, %125 : vector<2x128xf32>
    %127 = arith.truncf %126 : vector<2x128xf32> to vector<2x128xbf16>
    %c0_73 = arith.constant 0 : index
    %c0_74 = arith.constant 0 : index
    %128 = vector.load %arg10[%c0_73, %c0_74] : memref<128x32xbf16, #tpu.memory_space<vmem>>, vector<128x32xbf16>
    %cst_75 = arith.constant dense<0.000000e+00> : vector<2x32xf32>
    %129 = tpu.matmul %127, %128, %cst_75 {dimension_numbers = #tpu.dot_dimension_numbers<[1], [0], [0], [1], [0, 0, 1, 1], [], []>} : vector<2x128xbf16>, vector<128x32xbf16>, vector<2x32xf32> -> vector<2x32xf32>
    %cst_76 = arith.constant dense<0.000000e+00> : vector<32xf32>
    %130 = vector.multi_reduction <add>, %129, %cst_76 [0] : vector<2x32xf32> to vector<32xf32>
    %131 = vector.shape_cast %130 : vector<32xf32> to vector<1x32xf32>
    %cst_77 = arith.constant 2.000000e+00 : f32
    %132 = vector.broadcast %cst_77 : f32 to vector<1x32xf32>
    %133 = arith.divf %131, %132 : vector<1x32xf32>
    %134 = vector.broadcast %133 : vector<1x32xf32> to vector<2x32xf32>
    %135 = arith.subf %129, %134 : vector<2x32xf32>
    %136 = arith.mulf %135, %135 : vector<2x32xf32>
    %cst_78 = arith.constant dense<0.000000e+00> : vector<32xf32>
    %137 = vector.multi_reduction <add>, %136, %cst_78 [0] : vector<2x32xf32> to vector<32xf32>
    %138 = vector.shape_cast %137 : vector<32xf32> to vector<1x32xf32>
    %cst_79 = arith.constant 2.000000e+00 : f32
    %139 = vector.broadcast %cst_79 : f32 to vector<1x32xf32>
    %140 = arith.divf %138, %139 : vector<1x32xf32>
    %c6 = arith.constant 6 : index
    %c0_80 = arith.constant 0 : index
    %141 = vector.load %arg12[%c6, %c0_80] : memref<9x128xf32, #tpu.memory_space<vmem>>, vector<1x32xf32>
    %c7 = arith.constant 7 : index
    %c0_81 = arith.constant 0 : index
    %142 = vector.load %arg12[%c7, %c0_81] : memref<9x128xf32, #tpu.memory_space<vmem>>, vector<1x32xf32>
    %cst_82 = arith.constant 9.99999974E-6 : f32
    %143 = vector.broadcast %cst_82 : f32 to vector<1x32xf32>
    %144 = arith.addf %140, %143 : vector<1x32xf32>
    %145 = math.rsqrt %144 : vector<1x32xf32>
    %146 = arith.mulf %141, %145 : vector<1x32xf32>
    %147 = vector.broadcast %146 : vector<1x32xf32> to vector<2x32xf32>
    %148 = arith.mulf %135, %147 : vector<2x32xf32>
    %149 = vector.broadcast %142 : vector<1x32xf32> to vector<2x32xf32>
    %150 = arith.addf %148, %149 : vector<2x32xf32>
    %cst_83 = arith.constant 0.000000e+00 : f32
    %151 = vector.broadcast %cst_83 : f32 to vector<2x32xf32>
    %152 = arith.maximumf %150, %151 : vector<2x32xf32>
    %153 = arith.truncf %152 : vector<2x32xf32> to vector<2x32xbf16>
    %c0_84 = arith.constant 0 : index
    %c0_85 = arith.constant 0 : index
    %154 = vector.load %arg11[%c0_84, %c0_85] : memref<32x128xbf16, #tpu.memory_space<vmem>>, vector<32x128xbf16>
    %cst_86 = arith.constant dense<0.000000e+00> : vector<2x128xf32>
    %155 = tpu.matmul %153, %154, %cst_86 {dimension_numbers = #tpu.dot_dimension_numbers<[1], [0], [0], [1], [0, 0, 1, 1], [], []>} : vector<2x32xbf16>, vector<32x128xbf16>, vector<2x128xf32> -> vector<2x128xf32>
    %c8 = arith.constant 8 : index
    %c0_87 = arith.constant 0 : index
    %156 = vector.load %arg12[%c8, %c0_87] : memref<9x128xf32, #tpu.memory_space<vmem>>, vector<1x128xf32>
    %157 = vector.broadcast %156 : vector<1x128xf32> to vector<2x128xf32>
    %158 = arith.addf %155, %157 : vector<2x128xf32>
    %c0_88 = arith.constant 0 : index
    %c0_89 = arith.constant 0 : index
    %159 = vector.load %arg13[%c0_88, %c0_89] : memref<2x128xf32, #tpu.memory_space<vmem>>, vector<2x128xf32>
    tpu.vector_store %arg13[%c0_88, %c0_89], %158 {strides = array<i32>} : memref<2x128xf32, #tpu.memory_space<vmem>>, vector<2x128xf32>,
    return
  }
}

</mosaic_0001>

<llo_original>
// kernel: encoder_forward.1
$region0: #{encoder_forward.1}
  #allocation0 [shape = 'u32[]', space=smem, size = 0x4, offset = 0x4, fixed_abs, tag = 'smem constant byte address 0x4 - core index']
  #allocation1 [shape = 'u32[144,128]{1,0:T(1,128)}', space=vmem, size = 0x12000, scoped, tag = 'internal scratch']
  %s0 = inlined_call_operand.vmem [shape: f32[2,768], index: 0, kind: input, shape index: {}]
  %s1 = inlined_call_operand.hbm [shape: bf16[768,512], index: 1, kind: input, shape index: {}]
  %s2 = inlined_call_operand.vmem [shape: bf16[512,8], index: 2, kind: input, shape index: {}]
  %s3 = inlined_call_operand.vmem [shape: bf16[8,512], index: 3, kind: input, shape index: {}]
  %s4 = inlined_call_operand.vmem [shape: bf16[512,256], index: 4, kind: input, shape index: {}]
  %s5 = inlined_call_operand.vmem [shape: bf16[256,16], index: 5, kind: input, shape index: {}]
  %s6 = inlined_call_operand.vmem [shape: bf16[16,256], index: 6, kind: input, shape index: {}]
  %s7 = inlined_call_operand.vmem [shape: bf16[256,128], index: 7, kind: input, shape index: {}]
  %s8 = inlined_call_operand.vmem [shape: bf16[128,32], index: 8, kind: input, shape index: {}]
  %s9 = inlined_call_operand.vmem [shape: bf16[32,128], index: 9, kind: input, shape index: {}]
  %s10 = inlined_call_operand.vmem [shape: bf16[128,32], index: 10, kind: input, shape index: {}]
  %s11 = inlined_call_operand.hbm [shape: bf16[32,128], index: 11, kind: input, shape index: {}]
  %s12 = inlined_call_operand.hbm [shape: f32[9,128], index: 12, kind: input, shape index: {}]
  %s13 = inlined_call_operand.vmem [shape: f32[2,128], index: 13, kind: output, shape index: {}]
  %s14 = sld [smem:[#allocation0]]
  $region74: #{encoder_forward.1} parent=0
    _
  %s16 = ssub.s32 1, %s14
  %s17 = scalar_select 0, %s16, %s14
  $region1: #{encoder_forward.1} parent=0
    #allocation2 [shape = 'u8[786432]{0}', space=vmem, size = 0xc0000, scoped, tag = 'input window, operand 1, single buffered']
    #allocation3 [shape = 's32[1]{0}', space=sflag, size = 0x4, scoped, tag = 'scoped memory for encoder_forward.1']
    #allocation4 [shape = 'u8[8192]{0}', space=vmem, size = 0x2000, scoped, tag = 'input window, operand 11, single buffered']
    #allocation5 [shape = 's32[1]{0}', space=sflag, size = 0x4, scoped, tag = 'scoped memory for encoder_forward.1']
    #allocation6 [shape = 'u8[8192]{0}', space=vmem, size = 0x2000, scoped, tag = 'input window, operand 12, single buffered']
    %18 = vsyncpa [#allocation3], 0
    %19 = vsyncpa [#allocation5], 0
    // Predicated region
    $region2: #{encoder_forward.1} parent=1 // pred_check
      _
    $region3: #{encoder_forward.1} parent=1 // pred_check_branch
      %21 = sbr.rel (0) target = $region5
    $region4: #{encoder_forward.1} parent=1 // pred_region
      _
    $region5: #{encoder_forward.1} parent=1 // pred_fallthru
      _
    // Predicated region
    $region6: #{encoder_forward.1} parent=1 // pred_check
      _
    $region7: #{encoder_forward.1} parent=1 // pred_check_branch
      %23 = sbr.rel (0) target = $region9
    $region8: #{encoder_forward.1} parent=1 // pred_region
      %s25 = ssub.s32 24576, 24576
      %26 = vsyncadd [#allocation3], %s25
      %s27 = sshll.u32 [#allocation2], 4
      %s28 = int_to_ptr.vmem [resolvable:$true] %s27
      %33 = dma.hbm_to_vmem [thread:$0]  %s1, 24576, %s28, [#allocation3], 256, 256, 16
    $region9: #{encoder_forward.1} parent=1 // pred_fallthru
      _
    // Predicated region
    $region10: #{encoder_forward.1} parent=1 // pred_check
      _
    $region11: #{encoder_forward.1} parent=1 // pred_check_branch
      %35 = sbr.rel (0) target = $region13
    $region12: #{encoder_forward.1} parent=1 // pred_region
      _
    $region13: #{encoder_forward.1} parent=1 // pred_fallthru
      _
    // Predicated region
    $region14: #{encoder_forward.1} parent=1 // pred_check
      _
    $region15: #{encoder_forward.1} parent=1 // pred_check_branch
      %37 = sbr.rel (0) target = $region17
    $region16: #{encoder_forward.1} parent=1 // pred_region
      _
    $region17: #{encoder_forward.1} parent=1 // pred_fallthru
      _
    // Predicated region
    $region18: #{encoder_forward.1} parent=1 // pred_check
      _
    $region19: #{encoder_forward.1} parent=1 // pred_check_branch
      %39 = sbr.rel (0) target = $region21
    $region20: #{encoder_forward.1} parent=1 // pred_region
      _
    $region21: #{encoder_forward.1} parent=1 // pred_fallthru
      _
    // Predicated region
    $region22: #{encoder_forward.1} parent=1 // pred_check
      _
    $region23: #{encoder_forward.1} parent=1 // pred_check_branch
      %41 = sbr.rel (0) target = $region25
    $region24: #{encoder_forward.1} parent=1 // pred_region
      _
    $region25: #{encoder_forward.1} parent=1 // pred_fallthru
      _
    // Predicated region
    $region26: #{encoder_forward.1} parent=1 // pred_check
      _
    $region27: #{encoder_forward.1} parent=1 // pred_check_branch
      %43 = sbr.rel (0) target = $region29
    $region28: #{encoder_forward.1} parent=1 // pred_region
      _
    $region29: #{encoder_forward.1} parent=1 // pred_fallthru
      _
    // Predicated region
    $region30: #{encoder_forward.1} parent=1 // pred_check
      _
    $region31: #{encoder_forward.1} parent=1 // pred_check_branch
      %45 = sbr.rel (0) target = $region33
    $region32: #{encoder_forward.1} parent=1 // pred_region
      _
    $region33: #{encoder_forward.1} parent=1 // pred_fallthru
      _
    // Predicated region
    $region34: #{encoder_forward.1} parent=1 // pred_check
      _
    $region35: #{encoder_forward.1} parent=1 // pred_check_branch
      %47 = sbr.rel (0) target = $region37
    $region36: #{encoder_forward.1} parent=1 // pred_region
      _
    $region37: #{encoder_forward.1} parent=1 // pred_fallthru
      _
    // Predicated region
    $region38: #{encoder_forward.1} parent=1 // pred_check
      _
    $region39: #{encoder_forward.1} parent=1 // pred_check_branch
      %49 = sbr.rel (0) target = $region41
    $region40: #{encoder_forward.1} parent=1 // pred_region
      _
    $region41: #{encoder_forward.1} parent=1 // pred_fallthru
      _
    // Predicated region
    $region42: #{encoder_forward.1} parent=1 // pred_check
      _
    $region43: #{encoder_forward.1} parent=1 // pred_check_branch
      %51 = sbr.rel (0) target = $region45
    $region44: #{encoder_forward.1} parent=1 // pred_region
      _
    $region45: #{encoder_forward.1} parent=1 // pred_fallthru
      _
    // Predicated region
    $region46: #{encoder_forward.1} parent=1 // pred_check
      _
    $region47: #{encoder_forward.1} parent=1 // pred_check_branch
      %53 = sbr.rel (0) target = $region49
    $region48: #{encoder_forward.1} parent=1 // pred_region
      %s55 = ssub.s32 256, 256
      %56 = vsyncadd [#allocation5], %s55
      %s57 = sshll.u32 [#allocation4], 4
      %s58 = int_to_ptr.vmem [resolvable:$true] %s57
      %63 = dma.hbm_to_vmem [thread:$0]  %s11, 256, %s58, [#allocation5], 64, 64, 4
    $region49: #{encoder_forward.1} parent=1 // pred_fallthru
      _
    // Predicated region
    $region50: #{encoder_forward.1} parent=1 // pred_check
      _
    $region51: #{encoder_forward.1} parent=1 // pred_check_branch
      %65 = sbr.rel (0) target = $region53
    $region52: #{encoder_forward.1} parent=1 // pred_region
      %s67 = ssub.s32 256, 256
      %68 = vsyncadd [#allocation5], %s67
      %s69 = sshll.u32 [#allocation6], 4
      %s70 = int_to_ptr.vmem [resolvable:$true] %s69
      %75 = dma.hbm_to_vmem [thread:$0]  %s12, 256, %s70, [#allocation5], 128, 128, 8
    $region53: #{encoder_forward.1} parent=1 // pred_fallthru
      _
    // Predicated region
    $region54: #{encoder_forward.1} parent=1 // pred_check
      _
    $region55: #{encoder_forward.1} parent=1 // pred_check_branch
      %77 = sbr.rel (0) target = $region57
    $region56: #{encoder_forward.1} parent=1 // pred_region
      %78 = dma.done [#allocation3], 24576
    $region57: #{encoder_forward.1} parent=1 // pred_fallthru
      _
    // Predicated region
    $region58: #{encoder_forward.1} parent=1 // pred_check
      _
    $region59: #{encoder_forward.1} parent=1 // pred_check_branch
      %80 = sbr.rel (0) target = $region61
    $region60: #{encoder_forward.1} parent=1 // pred_region
      %81 = dma.done [#allocation5], 256
    $region61: #{encoder_forward.1} parent=1 // pred_fallthru
      _
    // Predicated region
    $region62: #{encoder_forward.1} parent=1 // pred_check
      _
    $region63: #{encoder_forward.1} parent=1 // pred_check_branch
      %83 = sbr.rel (0) target = $region65
    $region64: #{encoder_forward.1} parent=1 // pred_region
      %84 = dma.done [#allocation5], 256
    $region65: #{encoder_forward.1} parent=1 // pred_fallthru
      _
    %v86 = vld [vmem:[%s0] sm:$0xff]
    %v87 = vld [vmem:[%s0 + $0x8] sm:$0xf]
    %v88 = vld [vmem:[#allocation6] sm:$0x1]
    %v89 = vld [vmem:[#allocation6 + $0x1] sm:$0x1]
    %v92 = vcombine.high %v86, %v86
    %v94 = vunpack.c.l.s4 1983009808
    %v95 = vunpack.c.0.s8 %v94
    %v96 = vlaneseq
    %v97 = vshrl.u32 %v96, 7
    %v98 = vsub.s32 %v95, %v97
    %v99 = vrot.slane %v86, %v98
    %v101 = vunpack.c.l.s4 1983009808
    %v102 = vunpack.c.0.s8 %v101
    %v103 = vlaneseq
    %v104 = vshrl.u32 %v103, 7
    %v105 = vsub.s32 %v102, %v104
    %v106 = vrot.slane %v92, %v105
    %v107 = vcombine.high %v99, %v99
    %v108 = vcombine.high %v106, %v106
    %v110 = vunpack.c.l.s4 1983009808
    %v111 = vunpack.c.0.s8 %v110
    %v112 = vlaneseq
    %v113 = vshrl.u32 %v112, 7
    %v114 = vsub.s32 %v111, %v113
    %v115 = vrot.slane %v87, %v114
    %v116 = vcombine.high %v115, %v115
    %v123 = vpack.c.bf16 %v99, %v99
    %v124 = vpack.c.bf16 %v107, %v107
    %v125 = vpack.c.bf16 %v106, %v106
    %v126 = vpack.c.bf16 %v108, %v108
    %v127 = vpack.c.bf16 %v115, %v115
    %v128 = vpack.c.bf16 %v116, %v116
    %v129 = vld [vmem:[#allocation2] sm:$0xff]
    %v130 = vld [vmem:[#allocation2 + $0x8] sm:$0xff]
    %v131 = vld [vmem:[#allocation2 + $0x10] sm:$0xff]
    %v132 = vld [vmem:[#allocation2 + $0x18] sm:$0xff]
    %v133 = vld [vmem:[#allocation2 + $0x20] sm:$0xff]
    %v134 = vld [vmem:[#allocation2 + $0x28] sm:$0xff]
    %v135 = vld [vmem:[#allocation2 + $0x30] sm:$0xff]
    %v136 = vld [vmem:[#allocation2 + $0x38] sm:$0xff]
    %v137 = vld [vmem:[#allocation2 + $0x40] sm:$0xff]
    %v138 = vld [vmem:[#allocation2 + $0x48] sm:$0xff]
    %v139 = vld [vmem:[#allocation2 + $0x50] sm:$0xff]
    %v140 = vld [vmem:[#allocation2 + $0x58] sm:$0xff]
    %v141 = vld [vmem:[#allocation2 + $0x60] sm:$0xff]
    %v142 = vld [vmem:[#allocation2 + $0x68] sm:$0xff]
    %v143 = vld [vmem:[#allocation2 + $0x70] sm:$0xff]
    %v144 = vld [vmem:[#allocation2 + $0x78] sm:$0xff]
    %v145 = vld [vmem:[#allocation2 + $0x80] sm:$0xff]
    %v146 = vld [vmem:[#allocation2 + $0x88] sm:$0xff]
    %v147 = vld [vmem:[#allocation2 + $0x90] sm:$0xff]
    %v148 = vld [vmem:[#allocation2 + $0x98] sm:$0xff]
    %v149 = vld [vmem:[#allocation2 + $0xa0] sm:$0xff]
    %v150 = vld [vmem:[#allocation2 + $0xa8] sm:$0xff]
    %v151 = vld [vmem:[#allocation2 + $0xb0] sm:$0xff]
    %v152 = vld [vmem:[#allocation2 + $0xb8] sm:$0xff]
    %v153 = vld [vmem:[#allocation2 + $0xc0] sm:$0xff]
    %v154 = vld [vmem:[#allocation2 + $0xc8] sm:$0xff]
    %v155 = vld [vmem:[#allocation2 + $0xd0] sm:$0xff]
    %v156 = vld [vmem:[#allocation2 + $0xd8] sm:$0xff]
    %v157 = vld [vmem:[#allocation2 + $0xe0] sm:$0xff]
    %v158 = vld [vmem:[#allocation2 + $0xe8] sm:$0xff]
    %v159 = vld [vmem:[#allocation2 + $0xf0] sm:$0xff]
    %v160 = vld [vmem:[#allocation2 + $0xf8] sm:$0xff]
    %v161 = vld [vmem:[#allocation2 + $0x100] sm:$0xff]
    %v162 = vld [vmem:[#allocation2 + $0x108] sm:$0xff]
    %v163 = vld [vmem:[#allocation2 + $0x110] sm:$0xff]
    %v164 = vld [vmem:[#allocation2 + $0x118] sm:$0xff]
    %v165 = vld [vmem:[#allocation2 + $0x120] sm:$0xff]
    %v166 = vld [vmem:[#allocation2 + $0x128] sm:$0xff]
    %v167 = vld [vmem:[#allocation2 + $0x130] sm:$0xff]
    %v168 = vld [vmem:[#allocation2 + $0x138] sm:$0xff]
    %v169 = vld [vmem:[#allocation2 + $0x140] sm:$0xff]
    %v170 = vld [vmem:[#allocation2 + $0x148] sm:$0xff]
    %v171 = vld [vmem:[#allocation2 + $0x150] sm:$0xff]
    %v172 = vld [vmem:[#allocation2 + $0x158] sm:$0xff]
    %v173 = vld [vmem:[#allocation2 + $0x160] sm:$0xff]
    %v174 = vld [vmem:[#allocation2 + $0x168] sm:$0xff]
    %v175 = vld [vmem:[#allocation2 + $0x170] sm:$0xff]
    %v176 = vld [vmem:[#allocation2 + $0x178] sm:$0xff]
    %v177 = vld [vmem:[#allocation2 + $0x180] sm:$0xff]
    %v178 = vld [vmem:[#allocation2 + $0x188] sm:$0xff]
    %v179 = vld [vmem:[#allocation2 + $0x190] sm:$0xff]
    %v180 = vld [vmem:[#allocation2 + $0x198] sm:$0xff]
    %v181 = vld [vmem:[#allocation2 + $0x1a0] sm:$0xff]
    %v182 = vld [vmem:[#allocation2 + $0x1a8] sm:$0xff]
    %v183 = vld [vmem:[#allocation2 + $0x1b0] sm:$0xff]
    %v184 = vld [vmem:[#allocation2 + $0x1b8] sm:$0xff]
    %v185 = vld [vmem:[#allocation2 + $0x1c0] sm:$0xff]
    %v186 = vld [vmem:[#allocation2 + $0x1c8] sm:$0xff]
    %v187 = vld [vmem:[#allocation2 + $0x1d0] sm:$0xff]
    %v188 = vld [vmem:[#allocation2 + $0x1d8] sm:$0xff]
    %v189 = vld [vmem:[#allocation2 + $0x1e0] sm:$0xff]
    %v190 = vld [vmem:[#allocation2 + $0x1e8] sm:$0xff]
    %v191 = vld [vmem:[#allocation2 + $0x1f0] sm:$0xff]
    %v192 = vld [vmem:[#allocation2 + $0x1f8] sm:$0xff]
    %v193 = vld [vmem:[#allocation2 + $0x200] sm:$0xff]
    %v194 = vld [vmem:[#allocation2 + $0x208] sm:$0xff]
    %v195 = vld [vmem:[#allocation2 + $0x210] sm:$0xff]
    %v196 = vld [vmem:[#allocation2 + $0x218] sm:$0xff]
    %v197 = vld [vmem:[#allocation2 + $0x220] sm:$0xff]
    %v198 = vld [vmem:[#allocation2 + $0x228] sm:$0xff]
    %v199 = vld [vmem:[#allocation2 + $0x230] sm:$0xff]
    %v200 = vld [vmem:[#allocation2 + $0x238] sm:$0xff]
    %v201 = vld [vmem:[#allocation2 + $0x240] sm:$0xff]
    %v202 = vld [vmem:[#allocation2 + $0x248] sm:$0xff]
    %v203 = vld [vmem:[#allocation2 + $0x250] sm:$0xff]
    %v204 = vld [vmem:[#allocation2 + $0x258] sm:$0xff]
    %v205 = vld [vmem:[#allocation2 + $0x260] sm:$0xff]
    %v206 = vld [vmem:[#allocation2 + $0x268] sm:$0xff]
    %v207 = vld [vmem:[#allocation2 + $0x270] sm:$0xff]
    %v208 = vld [vmem:[#allocation2 + $0x278] sm:$0xff]
    %v209 = vld [vmem:[#allocation2 + $0x280] sm:$0xff]
    %v210 = vld [vmem:[#allocation2 + $0x288] sm:$0xff]
    %v211 = vld [vmem:[#allocation2 + $0x290] sm:$0xff]
    %v212 = vld [vmem:[#allocation2 + $0x298] sm:$0xff]
    %v213 = vld [vmem:[#allocation2 + $0x2a0] sm:$0xff]
    %v214 = vld [vmem:[#allocation2 + $0x2a8] sm:$0xff]
    %v215 = vld [vmem:[#allocation2 + $0x2b0] sm:$0xff]
    %v216 = vld [vmem:[#allocation2 + $0x2b8] sm:$0xff]
    %v217 = vld [vmem:[#allocation2 + $0x2c0] sm:$0xff]
    %v218 = vld [vmem:[#allocation2 + $0x2c8] sm:$0xff]
    %v219 = vld [vmem:[#allocation2 + $0x2d0] sm:$0xff]
    %v220 = vld [vmem:[#allocation2 + $0x2d8] sm:$0xff]
    %v221 = vld [vmem:[#allocation2 + $0x2e0] sm:$0xff]
    %v222 = vld [vmem:[#allocation2 + $0x2e8] sm:$0xff]
    %v223 = vld [vmem:[#allocation2 + $0x2f0] sm:$0xff]
    %v224 = vld [vmem:[#allocation2 + $0x2f8] sm:$0xff]
    %v225 = vld [vmem:[#allocation2 + $0x300] sm:$0xff]
    %v226 = vld [vmem:[#allocation2 + $0x308] sm:$0xff]
    %v227 = vld [vmem:[#allocation2 + $0x310] sm:$0xff]
    %v228 = vld [vmem:[#allocation2 + $0x318] sm:$0xff]
    %v229 = vld [vmem:[#allocation2 + $0x320] sm:$0xff]
    %v230 = vld [vmem:[#allocation2 + $0x328] sm:$0xff]
    %v231 = vld [vmem:[#allocation2 + $0x330] sm:$0xff]
    %v232 = vld [vmem:[#allocation2 + $0x338] sm:$0xff]
    %v233 = vld [vmem:[#allocation2 + $0x340] sm:$0xff]
    %v234 = vld [vmem:[#allocation2 + $0x348] sm:$0xff]
    %v235 = vld [vmem:[#allocation2 + $0x350] sm:$0xff]
    %v236 = vld [vmem:[#allocation2 + $0x358] sm:$0xff]
    %v237 = vld [vmem:[#allocation2 + $0x360] sm:$0xff]
    %v238 = vld [vmem:[#allocation2 + $0x368] sm:$0xff]
    %v239 = vld [vmem:[#allocation2 + $0x370] sm:$0xff]
    %v240 = vld [vmem:[#allocation2 + $0x378] sm:$0xff]
    %v241 = vld [vmem:[#allocation2 + $0x380] sm:$0xff]
    %v242 = vld [vmem:[#allocation2 + $0x388] sm:$0xff]
    %v243 = vld [vmem:[#allocation2 + $0x390] sm:$0xff]
    %v244 = vld [vmem:[#allocation2 + $0x398] sm:$0xff]
    %v245 = vld [vmem:[#allocation2 + $0x3a0] sm:$0xff]
    %v246 = vld [vmem:[#allocation2 + $0x3a8] sm:$0xff]
    %v247 = vld [vmem:[#allocation2 + $0x3b0] sm:$0xff]
    %v248 = vld [vmem:[#allocation2 + $0x3b8] sm:$0xff]
    %v249 = vld [vmem:[#allocation2 + $0x3c0] sm:$0xff]
    %v250 = vld [vmem:[#allocation2 + $0x3c8] sm:$0xff]
    %v251 = vld [vmem:[#allocation2 + $0x3d0] sm:$0xff]
    %v252 = vld [vmem:[#allocation2 + $0x3d8] sm:$0xff]
    %v253 = vld [vmem:[#allocation2 + $0x3e0] sm:$0xff]
    %v254 = vld [vmem:[#allocation2 + $0x3e8] sm:$0xff]
    %v255 = vld [vmem:[#allocation2 + $0x3f0] sm:$0xff]
    %v256 = vld [vmem:[#allocation2 + $0x3f8] sm:$0xff]
    %v257 = vld [vmem:[#allocation2 + $0x400] sm:$0xff]
    %v258 = vld [vmem:[#allocation2 + $0x408] sm:$0xff]
    %v259 = vld [vmem:[#allocation2 + $0x410] sm:$0xff]
    %v260 = vld [vmem:[#allocation2 + $0x418] sm:$0xff]
    %v261 = vld [vmem:[#allocation2 + $0x420] sm:$0xff]
    %v262 = vld [vmem:[#allocation2 + $0x428] sm:$0xff]
    %v263 = vld [vmem:[#allocation2 + $0x430] sm:$0xff]
    %v264 = vld [vmem:[#allocation2 + $0x438] sm:$0xff]
    %v265 = vld [vmem:[#allocation2 + $0x440] sm:$0xff]
    %v266 = vld [vmem:[#allocation2 + $0x448] sm:$0xff]
    %v267 = vld [vmem:[#allocation2 + $0x450] sm:$0xff]
    %v268 = vld [vmem:[#allocation2 + $0x458] sm:$0xff]
    %v269 = vld [vmem:[#allocation2 + $0x460] sm:$0xff]
    %v270 = vld [vmem:[#allocation2 + $0x468] sm:$0xff]
    %v271 = vld [vmem:[#allocation2 + $0x470] sm:$0xff]
    %v272 = vld [vmem:[#allocation2 + $0x478] sm:$0xff]
    %v273 = vld [vmem:[#allocation2 + $0x480] sm:$0xff]
    %v274 = vld [vmem:[#allocation2 + $0x488] sm:$0xff]
    %v275 = vld [vmem:[#allocation2 + $0x490] sm:$0xff]
    %v276 = vld [vmem:[#allocation2 + $0x498] sm:$0xff]
    %v277 = vld [vmem:[#allocation2 + $0x4a0] sm:$0xff]
    %v278 = vld [vmem:[#allocation2 + $0x4a8] sm:$0xff]
    %v279 = vld [vmem:[#allocation2 + $0x4b0] sm:$0xff]
    %v280 = vld [vmem:[#allocation2 + $0x4b8] sm:$0xff]
    %v281 = vld [vmem:[#allocation2 + $0x4c0] sm:$0xff]
    %v282 = vld [vmem:[#allocation2 + $0x4c8] sm:$0xff]
    %v283 = vld [vmem:[#allocation2 + $0x4d0] sm:$0xff]
    %v284 = vld [vmem:[#allocation2 + $0x4d8] sm:$0xff]
    %v285 = vld [vmem:[#allocation2 + $0x4e0] sm:$0xff]
    %v286 = vld [vmem:[#allocation2 + $0x4e8] sm:$0xff]
    %v287 = vld [vmem:[#allocation2 + $0x4f0] sm:$0xff]
    %v288 = vld [vmem:[#allocation2 + $0x4f8] sm:$0xff]
    %v289 = vld [vmem:[#allocation2 + $0x500] sm:$0xff]
    %v290 = vld [vmem:[#allocation2 + $0x508] sm:$0xff]
    %v291 = vld [vmem:[#allocation2 + $0x510] sm:$0xff]
    %v292 = vld [vmem:[#allocation2 + $0x518] sm:$0xff]
    %v293 = vld [vmem:[#allocation2 + $0x520] sm:$0xff]
    %v294 = vld [vmem:[#allocation2 + $0x528] sm:$0xff]
    %v295 = vld [vmem:[#allocation2 + $0x530] sm:$0xff]
    %v296 = vld [vmem:[#allocation2 + $0x538] sm:$0xff]
    %v297 = vld [vmem:[#allocation2 + $0x540] sm:$0xff]
    %v298 = vld [vmem:[#allocation2 + $0x548] sm:$0xff]
    %v299 = vld [vmem:[#allocation2 + $0x550] sm:$0xff]
    %v300 = vld [vmem:[#allocation2 + $0x558] sm:$0xff]
    %v301 = vld [vmem:[#allocation2 + $0x560] sm:$0xff]
    %v302 = vld [vmem:[#allocation2 + $0x568] sm:$0xff]
    %v303 = vld [vmem:[#allocation2 + $0x570] sm:$0xff]
    %v304 = vld [vmem:[#allocation2 + $0x578] sm:$0xff]
    %v305 = vld [vmem:[#allocation2 + $0x580] sm:$0xff]
    %v306 = vld [vmem:[#allocation2 + $0x588] sm:$0xff]
    %v307 = vld [vmem:[#allocation2 + $0x590] sm:$0xff]
    %v308 = vld [vmem:[#allocation2 + $0x598] sm:$0xff]
    %v309 = vld [vmem:[#allocation2 + $0x5a0] sm:$0xff]
    %v310 = vld [vmem:[#allocation2 + $0x5a8] sm:$0xff]
    %v311 = vld [vmem:[#allocation2 + $0x5b0] sm:$0xff]
    %v312 = vld [vmem:[#allocation2 + $0x5b8] sm:$0xff]
    %v313 = vld [vmem:[#allocation2 + $0x5c0] sm:$0xff]
    %v314 = vld [vmem:[#allocation2 + $0x5c8] sm:$0xff]
    %v315 = vld [vmem:[#allocation2 + $0x5d0] sm:$0xff]
    %v316 = vld [vmem:[#allocation2 + $0x5d8] sm:$0xff]
    %v317 = vld [vmem:[#allocation2 + $0x5e0] sm:$0xff]
    %v318 = vld [vmem:[#allocation2 + $0x5e8] sm:$0xff]
    %v319 = vld [vmem:[#allocation2 + $0x5f0] sm:$0xff]
    %v320 = vld [vmem:[#allocation2 + $0x5f8] sm:$0xff]
    %v513 = vunpack.c.l.b16 %v129
    %v514 = vunpack.c.h.b16 %v129
    %v515 = vunpack.c.l.b16 %v130
    %v516 = vunpack.c.h.b16 %v130
    %v517 = vunpack.c.l.b16 %v131
    %v518 = vunpack.c.h.b16 %v131
    %v519 = vunpack.c.l.b16 %v132
    %v520 = vunpack.c.h.b16 %v132
    %v521 = vunpack.c.l.b16 %v133
    %v522 = vunpack.c.h.b16 %v133
    %v523 = vunpack.c.l.b16 %v134
    %v524 = vunpack.c.h.b16 %v134
    %v525 = vunpack.c.l.b16 %v135
    %v526 = vunpack.c.h.b16 %v135
    %v527 = vunpack.c.l.b16 %v136
    %v528 = vunpack.c.h.b16 %v136
    %v529 = vunpack.c.l.b16 %v137
    %v530 = vunpack.c.h.b16 %v137
    %v531 = vunpack.c.l.b16 %v138
    %v532 = vunpack.c.h.b16 %v138
    %v533 = vunpack.c.l.b16 %v139
    %v534 = vunpack.c.h.b16 %v139
    %v535 = vunpack.c.l.b16 %v140
    %v536 = vunpack.c.h.b16 %v140
    %v537 = vunpack.c.l.b16 %v141
    %v538 = vunpack.c.h.b16 %v141
    %v539 = vunpack.c.l.b16 %v142
    %v540 = vunpack.c.h.b16 %v142
    %v541 = vunpack.c.l.b16 %v143
    %v542 = vunpack.c.h.b16 %v143
    %v543 = vunpack.c.l.b16 %v144
    %v544 = vunpack.c.h.b16 %v144
    %v545 = vunpack.c.l.b16 %v145
    %v546 = vunpack.c.h.b16 %v145
    %v547 = vunpack.c.l.b16 %v146
    %v548 = vunpack.c.h.b16 %v146
    %v549 = vunpack.c.l.b16 %v147
    %v550 = vunpack.c.h.b16 %v147
    %v551 = vunpack.c.l.b16 %v148
    %v552 = vunpack.c.h.b16 %v148
    %v553 = vunpack.c.l.b16 %v149
    %v554 = vunpack.c.h.b16 %v149
    %v555 = vunpack.c.l.b16 %v150
    %v556 = vunpack.c.h.b16 %v150
    %v557 = vunpack.c.l.b16 %v151
    %v558 = vunpack.c.h.b16 %v151
    %v559 = vunpack.c.l.b16 %v152
    %v560 = vunpack.c.h.b16 %v152
    %v561 = vunpack.c.l.b16 %v153
    %v562 = vunpack.c.h.b16 %v153
    %v563 = vunpack.c.l.b16 %v154
    %v564 = vunpack.c.h.b16 %v154
    %v565 = vunpack.c.l.b16 %v155
    %v566 = vunpack.c.h.b16 %v155
    %v567 = vunpack.c.l.b16 %v156
    %v568 = vunpack.c.h.b16 %v156
    %v569 = vunpack.c.l.b16 %v157
    %v570 = vunpack.c.h.b16 %v157
    %v571 = vunpack.c.l.b16 %v158
    %v572 = vunpack.c.h.b16 %v158
    %v573 = vunpack.c.l.b16 %v159
    %v574 = vunpack.c.h.b16 %v159
    %v575 = vunpack.c.l.b16 %v160
    %v576 = vunpack.c.h.b16 %v160
    %v577 = vunpack.c.l.b16 %v161
    %v578 = vunpack.c.h.b16 %v161
    %v579 = vunpack.c.l.b16 %v162
    %v580 = vunpack.c.h.b16 %v162
    %v581 = vunpack.c.l.b16 %v163
    %v582 = vunpack.c.h.b16 %v163
    %v583 = vunpack.c.l.b16 %v164
    %v584 = vunpack.c.h.b16 %v164
    %v585 = vunpack.c.l.b16 %v165
    %v586 = vunpack.c.h.b16 %v165
    %v587 = vunpack.c.l.b16 %v166
    %v588 = vunpack.c.h.b16 %v166
    %v589 = vunpack.c.l.b16 %v167
    %v590 = vunpack.c.h.b16 %v167
    %v591 = vunpack.c.l.b16 %v168
    %v592 = vunpack.c.h.b16 %v168
    %v593 = vunpack.c.l.b16 %v169
    %v594 = vunpack.c.h.b16 %v169
    %v595 = vunpack.c.l.b16 %v170
    %v596 = vunpack.c.h.b16 %v170
    %v597 = vunpack.c.l.b16 %v171
    %v598 = vunpack.c.h.b16 %v171
    %v599 = vunpack.c.l.b16 %v172
    %v600 = vunpack.c.h.b16 %v172
    %v601 = vunpack.c.l.b16 %v173
    %v602 = vunpack.c.h.b16 %v173
    %v603 = vunpack.c.l.b16 %v174
    %v604 = vunpack.c.h.b16 %v174
    %v605 = vunpack.c.l.b16 %v175
    %v606 = vunpack.c.h.b16 %v175
    %v607 = vunpack.c.l.b16 %v176
    %v608 = vunpack.c.h.b16 %v176
    %v609 = vunpack.c.l.b16 %v177
    %v610 = vunpack.c.h.b16 %v177
    %v611 = vunpack.c.l.b16 %v178
    %v612 = vunpack.c.h.b16 %v178
    %v613 = vunpack.c.l.b16 %v179
    %v614 = vunpack.c.h.b16 %v179
    %v615 = vunpack.c.l.b16 %v180
    %v616 = vunpack.c.h.b16 %v180
    %v617 = vunpack.c.l.b16 %v181
    %v618 = vunpack.c.h.b16 %v181
    %v619 = vunpack.c.l.b16 %v182
    %v620 = vunpack.c.h.b16 %v182
    %v621 = vunpack.c.l.b16 %v183
    %v622 = vunpack.c.h.b16 %v183
    %v623 = vunpack.c.l.b16 %v184
    %v624 = vunpack.c.h.b16 %v184
    %v625 = vunpack.c.l.b16 %v185
    %v626 = vunpack.c.h.b16 %v185
    %v627 = vunpack.c.l.b16 %v186
    %v628 = vunpack.c.h.b16 %v186
    %v629 = vunpack.c.l.b16 %v187
    %v630 = vunpack.c.h.b16 %v187
    %v631 = vunpack.c.l.b16 %v188
    %v632 = vunpack.c.h.b16 %v188
    %v633 = vunpack.c.l.b16 %v189
    %v634 = vunpack.c.h.b16 %v189
    %v635 = vunpack.c.l.b16 %v190
    %v636 = vunpack.c.h.b16 %v190
    %v637 = vunpack.c.l.b16 %v191
    %v638 = vunpack.c.h.b16 %v191
    %v639 = vunpack.c.l.b16 %v192
    %v640 = vunpack.c.h.b16 %v192
    %v641 = vunpack.c.l.b16 %v193
    %v642 = vunpack.c.h.b16 %v193
    %v643 = vunpack.c.l.b16 %v194
    %v644 = vunpack.c.h.b16 %v194
    %v645 = vunpack.c.l.b16 %v195
    %v646 = vunpack.c.h.b16 %v195
    %v647 = vunpack.c.l.b16 %v196
    %v648 = vunpack.c.h.b16 %v196
    %v649 = vunpack.c.l.b16 %v197
    %v650 = vunpack.c.h.b16 %v197
    %v651 = vunpack.c.l.b16 %v198
    %v652 = vunpack.c.h.b16 %v198
    %v653 = vunpack.c.l.b16 %v199
    %v654 = vunpack.c.h.b16 %v199
    %v655 = vunpack.c.l.b16 %v200
    %v656 = vunpack.c.h.b16 %v200
    %v657 = vunpack.c.l.b16 %v201
    %v658 = vunpack.c.h.b16 %v201
    %v659 = vunpack.c.l.b16 %v202
    %v660 = vunpack.c.h.b16 %v202
    %v661 = vunpack.c.l.b16 %v203
    %v662 = vunpack.c.h.b16 %v203
    %v663 = vunpack.c.l.b16 %v204
    %v664 = vunpack.c.h.b16 %v204
    %v665 = vunpack.c.l.b16 %v205
    %v666 = vunpack.c.h.b16 %v205
    %v667 = vunpack.c.l.b16 %v206
    %v668 = vunpack.c.h.b16 %v206
    %v669 = vunpack.c.l.b16 %v207
    %v670 = vunpack.c.h.b16 %v207
    %v671 = vunpack.c.l.b16 %v208
    %v672 = vunpack.c.h.b16 %v208
    %v673 = vunpack.c.l.b16 %v209
    %v674 = vunpack.c.h.b16 %v209
    %v675 = vunpack.c.l.b16 %v210
    %v676 = vunpack.c.h.b16 %v210
    %v677 = vunpack.c.l.b16 %v211
    %v678 = vunpack.c.h.b16 %v211
    %v679 = vunpack.c.l.b16 %v212
    %v680 = vunpack.c.h.b16 %v212
    %v681 = vunpack.c.l.b16 %v213
    %v682 = vunpack.c.h.b16 %v213
    %v683 = vunpack.c.l.b16 %v214
    %v684 = vunpack.c.h.b16 %v214
    %v685 = vunpack.c.l.b16 %v215
    %v686 = vunpack.c.h.b16 %v215
    %v687 = vunpack.c.l.b16 %v216
    %v688 = vunpack.c.h.b16 %v216
    %v689 = vunpack.c.l.b16 %v217
    %v690 = vunpack.c.h.b16 %v217
    %v691 = vunpack.c.l.b16 %v218
    %v692 = vunpack.c.h.b16 %v218
    %v693 = vunpack.c.l.b16 %v219
    %v694 = vunpack.c.h.b16 %v219
    %v695 = vunpack.c.l.b16 %v220
    %v696 = vunpack.c.h.b16 %v220
    %v697 = vunpack.c.l.b16 %v221
    %v698 = vunpack.c.h.b16 %v221
    %v699 = vunpack.c.l.b16 %v222
    %v700 = vunpack.c.h.b16 %v222
    %v701 = vunpack.c.l.b16 %v223
    %v702 = vunpack.c.h.b16 %v223
    %v703 = vunpack.c.l.b16 %v224
    %v704 = vunpack.c.h.b16 %v224
    %v705 = vunpack.c.l.b16 %v225
    %v706 = vunpack.c.h.b16 %v225
    %v707 = vunpack.c.l.b16 %v226
    %v708 = vunpack.c.h.b16 %v226
    %v709 = vunpack.c.l.b16 %v227
    %v710 = vunpack.c.h.b16 %v227
    %v711 = vunpack.c.l.b16 %v228
    %v712 = vunpack.c.h.b16 %v228
    %v713 = vunpack.c.l.b16 %v229
    %v714 = vunpack.c.h.b16 %v229
    %v715 = vunpack.c.l.b16 %v230
    %v716 = vunpack.c.h.b16 %v230
    %v717 = vunpack.c.l.b16 %v231
    %v718 = vunpack.c.h.b16 %v231
    %v719 = vunpack.c.l.b16 %v232
    %v720 = vunpack.c.h.b16 %v232
    %v721 = vunpack.c.l.b16 %v233
    %v722 = vunpack.c.h.b16 %v233
    %v723 = vunpack.c.l.b16 %v234
    %v724 = vunpack.c.h.b16 %v234
    %v725 = vunpack.c.l.b16 %v235
    %v726 = vunpack.c.h.b16 %v235
    %v727 = vunpack.c.l.b16 %v236
    %v728 = vunpack.c.h.b16 %v236
    %v729 = vunpack.c.l.b16 %v237
    %v730 = vunpack.c.h.b16 %v237
    %v731 = vunpack.c.l.b16 %v238
    %v732 = vunpack.c.h.b16 %v238
    %v733 = vunpack.c.l.b16 %v239
    %v734 = vunpack.c.h.b16 %v239
    %v735 = vunpack.c.l.b16 %v240
    %v736 = vunpack.c.h.b16 %v240
    %v737 = vunpack.c.l.b16 %v241
    %v738 = vunpack.c.h.b16 %v241
    %v739 = vunpack.c.l.b16 %v242
    %v740 = vunpack.c.h.b16 %v242
    %v741 = vunpack.c.l.b16 %v243
    %v742 = vunpack.c.h.b16 %v243
    %v743 = vunpack.c.l.b16 %v244
    %v744 = vunpack.c.h.b16 %v244
    %v745 = vunpack.c.l.b16 %v245
    %v746 = vunpack.c.h.b16 %v245
    %v747 = vunpack.c.l.b16 %v246
    %v748 = vunpack.c.h.b16 %v246
    %v749 = vunpack.c.l.b16 %v247
    %v750 = vunpack.c.h.b16 %v247
    %v751 = vunpack.c.l.b16 %v248
    %v752 = vunpack.c.h.b16 %v248
    %v753 = vunpack.c.l.b16 %v249
    %v754 = vunpack.c.h.b16 %v249
    %v755 = vunpack.c.l.b16 %v250
    %v756 = vunpack.c.h.b16 %v250
    %v757 = vunpack.c.l.b16 %v251
    %v758 = vunpack.c.h.b16 %v251
    %v759 = vunpack.c.l.b16 %v252
    %v760 = vunpack.c.h.b16 %v252
    %v761 = vunpack.c.l.b16 %v253
    %v762 = vunpack.c.h.b16 %v253
    %v763 = vunpack.c.l.b16 %v254
    %v764 = vunpack.c.h.b16 %v254
    %v765 = vunpack.c.l.b16 %v255
    %v766 = vunpack.c.h.b16 %v255
    %v767 = vunpack.c.l.b16 %v256
    %v768 = vunpack.c.h.b16 %v256
    %v769 = vunpack.c.l.b16 %v257
    %v770 = vunpack.c.h.b16 %v257
    %v771 = vunpack.c.l.b16 %v258
    %v772 = vunpack.c.h.b16 %v258
    %v773 = vunpack.c.l.b16 %v259
    %v774 = vunpack.c.h.b16 %v259
    %v775 = vunpack.c.l.b16 %v260
    %v776 = vunpack.c.h.b16 %v260
    %v777 = vunpack.c.l.b16 %v261
    %v778 = vunpack.c.h.b16 %v261
    %v779 = vunpack.c.l.b16 %v262
    %v780 = vunpack.c.h.b16 %v262
    %v781 = vunpack.c.l.b16 %v263
    %v782 = vunpack.c.h.b16 %v263
    %v783 = vunpack.c.l.b16 %v264
    %v784 = vunpack.c.h.b16 %v264
    %v785 = vunpack.c.l.b16 %v265
    %v786 = vunpack.c.h.b16 %v265
    %v787 = vunpack.c.l.b16 %v266
    %v788 = vunpack.c.h.b16 %v266
    %v789 = vunpack.c.l.b16 %v267
    %v790 = vunpack.c.h.b16 %v267
    %v791 = vunpack.c.l.b16 %v268
    %v792 = vunpack.c.h.b16 %v268
    %v793 = vunpack.c.l.b16 %v269
    %v794 = vunpack.c.h.b16 %v269
    %v795 = vunpack.c.l.b16 %v270
    %v796 = vunpack.c.h.b16 %v270
    %v797 = vunpack.c.l.b16 %v271
    %v798 = vunpack.c.h.b16 %v271
    %v799 = vunpack.c.l.b16 %v272
    %v800 = vunpack.c.h.b16 %v272
    %v801 = vunpack.c.l.b16 %v273
    %v802 = vunpack.c.h.b16 %v273
    %v803 = vunpack.c.l.b16 %v274
    %v804 = vunpack.c.h.b16 %v274
    %v805 = vunpack.c.l.b16 %v275
    %v806 = vunpack.c.h.b16 %v275
    %v807 = vunpack.c.l.b16 %v276
    %v808 = vunpack.c.h.b16 %v276
    %v809 = vunpack.c.l.b16 %v277
    %v810 = vunpack.c.h.b16 %v277
    %v811 = vunpack.c.l.b16 %v278
    %v812 = vunpack.c.h.b16 %v278
    %v813 = vunpack.c.l.b16 %v279
    %v814 = vunpack.c.h.b16 %v279
    %v815 = vunpack.c.l.b16 %v280
    %v816 = vunpack.c.h.b16 %v280
    %v817 = vunpack.c.l.b16 %v281
    %v818 = vunpack.c.h.b16 %v281
    %v819 = vunpack.c.l.b16 %v282
    %v820 = vunpack.c.h.b16 %v282
    %v821 = vunpack.c.l.b16 %v283
    %v822 = vunpack.c.h.b16 %v283
    %v823 = vunpack.c.l.b16 %v284
    %v824 = vunpack.c.h.b16 %v284
    %v825 = vunpack.c.l.b16 %v285
    %v826 = vunpack.c.h.b16 %v285
    %v827 = vunpack.c.l.b16 %v286
    %v828 = vunpack.c.h.b16 %v286
    %v829 = vunpack.c.l.b16 %v287
    %v830 = vunpack.c.h.b16 %v287
    %v831 = vunpack.c.l.b16 %v288
    %v832 = vunpack.c.h.b16 %v288
    %v833 = vunpack.c.l.b16 %v289
    %v834 = vunpack.c.h.b16 %v289
    %v835 = vunpack.c.l.b16 %v290
    %v836 = vunpack.c.h.b16 %v290
    %v837 = vunpack.c.l.b16 %v291
    %v838 = vunpack.c.h.b16 %v291
    %v839 = vunpack.c.l.b16 %v292
    %v840 = vunpack.c.h.b16 %v292
    %v841 = vunpack.c.l.b16 %v293
    %v842 = vunpack.c.h.b16 %v293
    %v843 = vunpack.c.l.b16 %v294
    %v844 = vunpack.c.h.b16 %v294
    %v845 = vunpack.c.l.b16 %v295
    %v846 = vunpack.c.h.b16 %v295
    %v847 = vunpack.c.l.b16 %v296
    %v848 = vunpack.c.h.b16 %v296
    %v849 = vunpack.c.l.b16 %v297
    %v850 = vunpack.c.h.b16 %v297
    %v851 = vunpack.c.l.b16 %v298
    %v852 = vunpack.c.h.b16 %v298
    %v853 = vunpack.c.l.b16 %v299
    %v854 = vunpack.c.h.b16 %v299
    %v855 = vunpack.c.l.b16 %v300
    %v856 = vunpack.c.h.b16 %v300
    %v857 = vunpack.c.l.b16 %v301
    %v858 = vunpack.c.h.b16 %v301
    %v859 = vunpack.c.l.b16 %v302
    %v860 = vunpack.c.h.b16 %v302
    %v861 = vunpack.c.l.b16 %v303
    %v862 = vunpack.c.h.b16 %v303
    %v863 = vunpack.c.l.b16 %v304
    %v864 = vunpack.c.h.b16 %v304
    %v865 = vunpack.c.l.b16 %v305
    %v866 = vunpack.c.h.b16 %v305
    %v867 = vunpack.c.l.b16 %v306
    %v868 = vunpack.c.h.b16 %v306
    %v869 = vunpack.c.l.b16 %v307
    %v870 = vunpack.c.h.b16 %v307
    %v871 = vunpack.c.l.b16 %v308
    %v872 = vunpack.c.h.b16 %v308
    %v873 = vunpack.c.l.b16 %v309
    %v874 = vunpack.c.h.b16 %v309
    %v875 = vunpack.c.l.b16 %v310
    %v876 = vunpack.c.h.b16 %v310
    %v877 = vunpack.c.l.b16 %v311
    %v878 = vunpack.c.h.b16 %v311
    %v879 = vunpack.c.l.b16 %v312
    %v880 = vunpack.c.h.b16 %v312
    %v881 = vunpack.c.l.b16 %v313
    %v882 = vunpack.c.h.b16 %v313
    %v883 = vunpack.c.l.b16 %v314
    %v884 = vunpack.c.h.b16 %v314
    %v885 = vunpack.c.l.b16 %v315
    %v886 = vunpack.c.h.b16 %v315
    %v887 = vunpack.c.l.b16 %v316
    %v888 = vunpack.c.h.b16 %v316
    %v889 = vunpack.c.l.b16 %v317
    %v890 = vunpack.c.h.b16 %v317
    %v891 = vunpack.c.l.b16 %v318
    %v892 = vunpack.c.h.b16 %v318
    %v893 = vunpack.c.l.b16 %v319
    %v894 = vunpack.c.h.b16 %v319
    %v895 = vunpack.c.l.b16 %v320
    %v896 = vunpack.c.h.b16 %v320
    %v897 = vpack.c.b16 %v517, %v513
    %v898 = vpack.c.b16 %v518, %v514
    %v899 = vpack.c.b16 %v519, %v515
    %v900 = vpack.c.b16 %v520, %v516
    %v901 = vpack.c.b16 %v525, %v521
    %v902 = vpack.c.b16 %v526, %v522
    %v903 = vpack.c.b16 %v527, %v523
    %v904 = vpack.c.b16 %v528, %v524
    %v905 = vpack.c.b16 %v533, %v529
    %v906 = vpack.c.b16 %v534, %v530
    %v907 = vpack.c.b16 %v535, %v531
    %v908 = vpack.c.b16 %v536, %v532
    %v909 = vpack.c.b16 %v541, %v537
    %v910 = vpack.c.b16 %v542, %v538
    %v911 = vpack.c.b16 %v543, %v539
    %v912 = vpack.c.b16 %v544, %v540
    %v913 = vpack.c.b16 %v549, %v545
    %v914 = vpack.c.b16 %v550, %v546
    %v915 = vpack.c.b16 %v551, %v547
    %v916 = vpack.c.b16 %v552, %v548
    %v917 = vpack.c.b16 %v557, %v553
    %v918 = vpack.c.b16 %v558, %v554
    %v919 = vpack.c.b16 %v559, %v555
    %v920 = vpack.c.b16 %v560, %v556
    %v921 = vpack.c.b16 %v565, %v561
    %v922 = vpack.c.b16 %v566, %v562
    %v923 = vpack.c.b16 %v567, %v563
    %v924 = vpack.c.b16 %v568, %v564
    %v925 = vpack.c.b16 %v573, %v569
    %v926 = vpack.c.b16 %v574, %v570
    %v927 = vpack.c.b16 %v575, %v571
    %v928 = vpack.c.b16 %v576, %v572
    %v929 = vpack.c.b16 %v581, %v577
    %v930 = vpack.c.b16 %v582, %v578
    %v931 = vpack.c.b16 %v583, %v579
    %v932 = vpack.c.b16 %v584, %v580
    %v933 = vpack.c.b16 %v589, %v585
    %v934 = vpack.c.b16 %v590, %v586
    %v935 = vpack.c.b16 %v591, %v587
    %v936 = vpack.c.b16 %v592, %v588
    %v937 = vpack.c.b16 %v597, %v593
    %v938 = vpack.c.b16 %v598, %v594
    %v939 = vpack.c.b16 %v599, %v595
    %v940 = vpack.c.b16 %v600, %v596
    %v941 = vpack.c.b16 %v605, %v601
    %v942 = vpack.c.b16 %v606, %v602
    %v943 = vpack.c.b16 %v607, %v603
    %v944 = vpack.c.b16 %v608, %v604
    %v945 = vpack.c.b16 %v613, %v609
    %v946 = vpack.c.b16 %v614, %v610
    %v947 = vpack.c.b16 %v615, %v611
    %v948 = vpack.c.b16 %v616, %v612
    %v949 = vpack.c.b16 %v621, %v617
    %v950 = vpack.c.b16 %v622, %v618
    %v951 = vpack.c.b16 %v623, %v619
    %v952 = vpack.c.b16 %v624, %v620
    %v953 = vpack.c.b16 %v629, %v625
    %v954 = vpack.c.b16 %v630, %v626
    %v955 = vpack.c.b16 %v631, %v627
    %v956 = vpack.c.b16 %v632, %v628
    %v957 = vpack.c.b16 %v637, %v633
    %v958 = vpack.c.b16 %v638, %v634
    %v959 = vpack.c.b16 %v639, %v635
    %v960 = vpack.c.b16 %v640, %v636
    %v961 = vpack.c.b16 %v645, %v641
    %v962 = vpack.c.b16 %v646, %v642
    %v963 = vpack.c.b16 %v647, %v643
    %v964 = vpack.c.b16 %v648, %v644
    %v965 = vpack.c.b16 %v653, %v649
    %v966 = vpack.c.b16 %v654, %v650
    %v967 = vpack.c.b16 %v655, %v651
    %v968 = vpack.c.b16 %v656, %v652
    %v969 = vpack.c.b16 %v661, %v657
    %v970 = vpack.c.b16 %v662, %v658
    %v971 = vpack.c.b16 %v663, %v659
    %v972 = vpack.c.b16 %v664, %v660
    %v973 = vpack.c.b16 %v669, %v665
    %v974 = vpack.c.b16 %v670, %v666
    %v975 = vpack.c.b16 %v671, %v667
    %v976 = vpack.c.b16 %v672, %v668
    %v977 = vpack.c.b16 %v677, %v673
    %v978 = vpack.c.b16 %v678, %v674
    %v979 = vpack.c.b16 %v679, %v675
    %v980 = vpack.c.b16 %v680, %v676
    %v981 = vpack.c.b16 %v685, %v681
    %v982 = vpack.c.b16 %v686, %v682
    %v983 = vpack.c.b16 %v687, %v683
    %v984 = vpack.c.b16 %v688, %v684
    %v985 = vpack.c.b16 %v693, %v689
    %v986 = vpack.c.b16 %v694, %v690
    %v987 = vpack.c.b16 %v695, %v691
    %v988 = vpack.c.b16 %v696, %v692
    %v989 = vpack.c.b16 %v701, %v697
    %v990 = vpack.c.b16 %v702, %v698
    %v991 = vpack.c.b16 %v703, %v699
    %v992 = vpack.c.b16 %v704, %v700
    %v993 = vpack.c.b16 %v709, %v705
    %v994 = vpack.c.b16 %v710, %v706
    %v995 = vpack.c.b16 %v711, %v707
    %v996 = vpack.c.b16 %v712, %v708
    %v997 = vpack.c.b16 %v717, %v713
    %v998 = vpack.c.b16 %v718, %v714
    %v999 = vpack.c.b16 %v719, %v715
    %v1000 = vpack.c.b16 %v720, %v716
    %v1001 = vpack.c.b16 %v725, %v721
    %v1002 = vpack.c.b16 %v726, %v722
    %v1003 = vpack.c.b16 %v727, %v723
    %v1004 = vpack.c.b16 %v728, %v724
    %v1005 = vpack.c.b16 %v733, %v729
    %v1006 = vpack.c.b16 %v734, %v730
    %v1007 = vpack.c.b16 %v735, %v731
    %v1008 = vpack.c.b16 %v736, %v732
    %v1009 = vpack.c.b16 %v741, %v737
    %v1010 = vpack.c.b16 %v742, %v738
    %v1011 = vpack.c.b16 %v743, %v739
    %v1012 = vpack.c.b16 %v744, %v740
    %v1013 = vpack.c.b16 %v749, %v745
    %v1014 = vpack.c.b16 %v750, %v746
    %v1015 = vpack.c.b16 %v751, %v747
    %v1016 = vpack.c.b16 %v752, %v748
    %v1017 = vpack.c.b16 %v757, %v753
    %v1018 = vpack.c.b16 %v758, %v754
    %v1019 = vpack.c.b16 %v759, %v755
    %v1020 = vpack.c.b16 %v760, %v756
    %v1021 = vpack.c.b16 %v765, %v761
    %v1022 = vpack.c.b16 %v766, %v762
    %v1023 = vpack.c.b16 %v767, %v763
    %v1024 = vpack.c.b16 %v768, %v764
    %v1025 = vpack.c.b16 %v773, %v769
    %v1026 = vpack.c.b16 %v774, %v770
    %v1027 = vpack.c.b16 %v775, %v771
    %v1028 = vpack.c.b16 %v776, %v772
    %v1029 = vpack.c.b16 %v781, %v777
    %v1030 = vpack.c.b16 %v782, %v778
    %v1031 = vpack.c.b16 %v783, %v779
    %v1032 = vpack.c.b16 %v784, %v780
    %v1033 = vpack.c.b16 %v789, %v785
    %v1034 = vpack.c.b16 %v790, %v786
    %v1035 = vpack.c.b16 %v791, %v787
    %v1036 = vpack.c.b16 %v792, %v788
    %v1037 = vpack.c.b16 %v797, %v793
    %v1038 = vpack.c.b16 %v798, %v794
    %v1039 = vpack.c.b16 %v799, %v795
    %v1040 = vpack.c.b16 %v800, %v796
    %v1041 = vpack.c.b16 %v805, %v801
    %v1042 = vpack.c.b16 %v806, %v802
    %v1043 = vpack.c.b16 %v807, %v803
    %v1044 = vpack.c.b16 %v808, %v804
    %v1045 = vpack.c.b16 %v813, %v809
    %v1046 = vpack.c.b16 %v814, %v810
    %v1047 = vpack.c.b16 %v815, %v811
    %v1048 = vpack.c.b16 %v816, %v812
    %v1049 = vpack.c.b16 %v821, %v817
    %v1050 = vpack.c.b16 %v822, %v818
    %v1051 = vpack.c.b16 %v823, %v819
    %v1052 = vpack.c.b16 %v824, %v820
    %v1053 = vpack.c.b16 %v829, %v825
    %v1054 = vpack.c.b16 %v830, %v826
    %v1055 = vpack.c.b16 %v831, %v827
    %v1056 = vpack.c.b16 %v832, %v828
    %v1057 = vpack.c.b16 %v837, %v833
    %v1058 = vpack.c.b16 %v838, %v834
    %v1059 = vpack.c.b16 %v839, %v835
    %v1060 = vpack.c.b16 %v840, %v836
    %v1061 = vpack.c.b16 %v845, %v841
    %v1062 = vpack.c.b16 %v846, %v842
    %v1063 = vpack.c.b16 %v847, %v843
    %v1064 = vpack.c.b16 %v848, %v844
    %v1065 = vpack.c.b16 %v853, %v849
    %v1066 = vpack.c.b16 %v854, %v850
    %v1067 = vpack.c.b16 %v855, %v851
    %v1068 = vpack.c.b16 %v856, %v852
    %v1069 = vpack.c.b16 %v861, %v857
    %v1070 = vpack.c.b16 %v862, %v858
    %v1071 = vpack.c.b16 %v863, %v859
    %v1072 = vpack.c.b16 %v864, %v860
    %v1073 = vpack.c.b16 %v869, %v865
    %v1074 = vpack.c.b16 %v870, %v866
    %v1075 = vpack.c.b16 %v871, %v867
    %v1076 = vpack.c.b16 %v872, %v868
    %v1077 = vpack.c.b16 %v877, %v873
    %v1078 = vpack.c.b16 %v878, %v874
    %v1079 = vpack.c.b16 %v879, %v875
    %v1080 = vpack.c.b16 %v880, %v876
    %v1081 = vpack.c.b16 %v885, %v881
    %v1082 = vpack.c.b16 %v886, %v882
    %v1083 = vpack.c.b16 %v887, %v883
    %v1084 = vpack.c.b16 %v888, %v884
    %v1085 = vpack.c.b16 %v893, %v889
    %v1086 = vpack.c.b16 %v894, %v890
    %v1087 = vpack.c.b16 %v895, %v891
    %v1088 = vpack.c.b16 %v896, %v892
    %1281 = vmatprep.subr.bf16.mxu0 %v926
    %1282 = vmatpush1.bf16.msra.mxu0 %v925
    %1283 = vmatprep.subr.bf16.mxu0 %v922
    %1284 = vmatpush1.bf16.msra.mxu0 %v921
    %1285 = vmatprep.subr.bf16.mxu0 %v918
    %1286 = vmatpush1.bf16.msra.mxu0 %v917
    %1287 = vmatprep.subr.bf16.mxu0 %v914
    %1288 = vmatpush1.bf16.msra.mxu0 %v913
    %1289 = vmatprep.subr.bf16.mxu0 %v910
    %1290 = vmatpush1.bf16.msra.mxu0 %v909
    %1291 = vmatprep.subr.bf16.mxu0 %v906
    %1292 = vmatpush1.bf16.msra.mxu0 %v905
    %1293 = vmatprep.subr.bf16.mxu0 %v902
    %1294 = vmatpush1.bf16.msra.mxu0 %v901
    %1295 = vmatprep.subr.bf16.mxu0 %v898
    %1296 = vmatpush1.bf16.msra.mxu0 %v897
    %1297 = vmatprep.subr.bf16.mxu0 %v958
    %1298 = vmatpush2.bf16.msra.mxu0 %v957
    %1299 = vmatprep.subr.bf16.mxu0 %v954
    %1300 = vmatpush2.bf16.msra.mxu0 %v953
    %1301 = vmatprep.subr.bf16.mxu0 %v950
    %1302 = vmatpush2.bf16.msra.mxu0 %v949
    %1303 = vmatprep.subr.bf16.mxu0 %v946
    %1304 = vmatpush2.bf16.msra.mxu0 %v945
    %1305 = vmatprep.subr.bf16.mxu0 %v942
    %1306 = vmatpush2.bf16.msra.mxu0 %v941
    %1307 = vmatprep.subr.bf16.mxu0 %v938
    %1308 = vmatpush2.bf16.msra.mxu0 %v937
    %1309 = vmatprep.subr.bf16.mxu0 %v934
    %1310 = vmatpush2.bf16.msra.mxu0 %v933
    %1311 = vmatprep.subr.bf16.mxu0 %v930
    %1312 = vmatpush2.bf16.msra.mxu0 %v929
    %1313 = vmatprep.mubr.bf16.mxu0 %v124
    %1314 = vmatmul.mubr.bf16.gmra.mxu0 %v123
    %v1315 = vpop.f32.mrf.mxu0
    %v1316 = vadd.f32 0.0, %v1315
    %v1317 = vpop.f32.mrf.mxu0
    %v1318 = vadd.f32 0.0, %v1317
    %v1319 = vpop.f32.mrf.mxu0
    %v1320 = vpop.f32.mrf.mxu0
    %1321 = vdwg.mxu0
    %1322 = vmatprep.subr.bf16.mxu0 %v990
    %1323 = vmatpush1.bf16.msra.mxu0 %v989
    %1324 = vmatprep.subr.bf16.mxu0 %v986
    %1325 = vmatpush1.bf16.msra.mxu0 %v985
    %1326 = vmatprep.subr.bf16.mxu0 %v982
    %1327 = vmatpush1.bf16.msra.mxu0 %v981
    %1328 = vmatprep.subr.bf16.mxu0 %v978
    %1329 = vmatpush1.bf16.msra.mxu0 %v977
    %1330 = vmatprep.subr.bf16.mxu0 %v974
    %1331 = vmatpush1.bf16.msra.mxu0 %v973
    %1332 = vmatprep.subr.bf16.mxu0 %v970
    %1333 = vmatpush1.bf16.msra.mxu0 %v969
    %1334 = vmatprep.subr.bf16.mxu0 %v966
    %1335 = vmatpush1.bf16.msra.mxu0 %v965
    %1336 = vmatprep.subr.bf16.mxu0 %v962
    %1337 = vmatpush1.bf16.msra.mxu0 %v961
    %1338 = vmatprep.subr.bf16.mxu0 %v1022
    %1339 = vmatpush2.bf16.msra.mxu0 %v1021
    %1340 = vmatprep.subr.bf16.mxu0 %v1018
    %1341 = vmatpush2.bf16.msra.mxu0 %v1017
    %1342 = vmatprep.subr.bf16.mxu0 %v1014
    %1343 = vmatpush2.bf16.msra.mxu0 %v1013
    %1344 = vmatprep.subr.bf16.mxu0 %v1010
    %1345 = vmatpush2.bf16.msra.mxu0 %v1009
    %1346 = vmatprep.subr.bf16.mxu0 %v1006
    %1347 = vmatpush2.bf16.msra.mxu0 %v1005
    %1348 = vmatprep.subr.bf16.mxu0 %v1002
    %1349 = vmatpush2.bf16.msra.mxu0 %v1001
    %1350 = vmatprep.subr.bf16.mxu0 %v998
    %1351 = vmatpush2.bf16.msra.mxu0 %v997
    %1352 = vmatprep.subr.bf16.mxu0 %v994
    %1353 = vmatpush2.bf16.msra.mxu0 %v993
    %1354 = vmatprep.mubr.bf16.mxu0 %v126
    %1355 = vmatmul.mubr.bf16.gmra.mxu0 %v125
    %v1356 = vpop.f32.mrf.mxu0
    %v1357 = vadd.f32 %v1316, %v1356
    %v1358 = vpop.f32.mrf.mxu0
    %v1359 = vadd.f32 %v1318, %v1358
    %v1360 = vpop.f32.mrf.mxu0
    %v1361 = vpop.f32.mrf.mxu0
    %1362 = vdwg.mxu0
    %1363 = vmatprep.subr.bf16.mxu0 %v1054
    %1364 = vmatpush1.bf16.msra.mxu0 %v1053
    %1365 = vmatprep.subr.bf16.mxu0 %v1050
    %1366 = vmatpush1.bf16.msra.mxu0 %v1049
    %1367 = vmatprep.subr.bf16.mxu0 %v1046
    %1368 = vmatpush1.bf16.msra.mxu0 %v1045
    %1369 = vmatprep.subr.bf16.mxu0 %v1042
    %1370 = vmatpush1.bf16.msra.mxu0 %v1041
    %1371 = vmatprep.subr.bf16.mxu0 %v1038
    %1372 = vmatpush1.bf16.msra.mxu0 %v1037
    %1373 = vmatprep.subr.bf16.mxu0 %v1034
    %1374 = vmatpush1.bf16.msra.mxu0 %v1033
    %1375 = vmatprep.subr.bf16.mxu0 %v1030
    %1376 = vmatpush1.bf16.msra.mxu0 %v1029
    %1377 = vmatprep.subr.bf16.mxu0 %v1026
    %1378 = vmatpush1.bf16.msra.mxu0 %v1025
    %1379 = vmatprep.subr.bf16.mxu0 %v1086
    %1380 = vmatpush2.bf16.msra.mxu0 %v1085
    %1381 = vmatprep.subr.bf16.mxu0 %v1082
    %1382 = vmatpush2.bf16.msra.mxu0 %v1081
    %1383 = vmatprep.subr.bf16.mxu0 %v1078
    %1384 = vmatpush2.bf16.msra.mxu0 %v1077
    %1385 = vmatprep.subr.bf16.mxu0 %v1074
    %1386 = vmatpush2.bf16.msra.mxu0 %v1073
    %1387 = vmatprep.subr.bf16.mxu0 %v1070
    %1388 = vmatpush2.bf16.msra.mxu0 %v1069
    %1389 = vmatprep.subr.bf16.mxu0 %v1066
    %1390 = vmatpush2.bf16.msra.mxu0 %v1065
    %1391 = vmatprep.subr.bf16.mxu0 %v1062
    %1392 = vmatpush2.bf16.msra.mxu0 %v1061
    %1393 = vmatprep.subr.bf16.mxu0 %v1058
    %1394 = vmatpush2.bf16.msra.mxu0 %v1057
    %1395 = vmatprep.mubr.bf16.mxu0 %v128
    %1396 = vmatmul.mubr.bf16.gmra.mxu0 %v127
    %v1397 = vpop.f32.mrf.mxu0
    %v1398 = vadd.f32 %v1357, %v1397
    %v1399 = vpop.f32.mrf.mxu0
    %v1400 = vadd.f32 %v1359, %v1399
    %v1401 = vpop.f32.mrf.mxu0
    %v1402 = vpop.f32.mrf.mxu0
    %1403 = vdwg.mxu0
    %1404 = vmatprep.subr.bf16.mxu0 %v928
    %1405 = vmatpush1.bf16.msra.mxu0 %v927
    %1406 = vmatprep.subr.bf16.mxu0 %v924
    %1407 = vmatpush1.bf16.msra.mxu0 %v923
    %1408 = vmatprep.subr.bf16.mxu0 %v920
    %1409 = vmatpush1.bf16.msra.mxu0 %v919
    %1410 = vmatprep.subr.bf16.mxu0 %v916
    %1411 = vmatpush1.bf16.msra.mxu0 %v915
    %1412 = vmatprep.subr.bf16.mxu0 %v912
    %1413 = vmatpush1.bf16.msra.mxu0 %v911
    %1414 = vmatprep.subr.bf16.mxu0 %v908
    %1415 = vmatpush1.bf16.msra.mxu0 %v907
    %1416 = vmatprep.subr.bf16.mxu0 %v904
    %1417 = vmatpush1.bf16.msra.mxu0 %v903
    %1418 = vmatprep.subr.bf16.mxu0 %v900
    %1419 = vmatpush1.bf16.msra.mxu0 %v899
    %1420 = vmatprep.subr.bf16.mxu0 %v960
    %1421 = vmatpush2.bf16.msra.mxu0 %v959
    %1422 = vmatprep.subr.bf16.mxu0 %v956
    %1423 = vmatpush2.bf16.msra.mxu0 %v955
    %1424 = vmatprep.subr.bf16.mxu0 %v952
    %1425 = vmatpush2.bf16.msra.mxu0 %v951
    %1426 = vmatprep.subr.bf16.mxu0 %v948
    %1427 = vmatpush2.bf16.msra.mxu0 %v947
    %1428 = vmatprep.subr.bf16.mxu0 %v944
    %1429 = vmatpush2.bf16.msra.mxu0 %v943
    %1430 = vmatprep.subr.bf16.mxu0 %v940
    %1431 = vmatpush2.bf16.msra.mxu0 %v939
    %1432 = vmatprep.subr.bf16.mxu0 %v936
    %1433 = vmatpush2.bf16.msra.mxu0 %v935
    %1434 = vmatprep.subr.bf16.mxu0 %v932
    %1435 = vmatpush2.bf16.msra.mxu0 %v931
    %1436 = vmatprep.mubr.bf16.mxu0 %v124
    %1437 = vmatmul.mubr.bf16.gmra.mxu0 %v123
    %v1438 = vpop.f32.mrf.mxu0
    %v1439 = vadd.f32 0.0, %v1438
    %v1440 = vpop.f32.mrf.mxu0
    %v1441 = vadd.f32 0.0, %v1440
    %v1442 = vpop.f32.mrf.mxu0
    %v1443 = vpop.f32.mrf.mxu0
    %1444 = vdwg.mxu0
    %1445 = vmatprep.subr.bf16.mxu0 %v992
    %1446 = vmatpush1.bf16.msra.mxu0 %v991
    %1447 = vmatprep.subr.bf16.mxu0 %v988
    %1448 = vmatpush1.bf16.msra.mxu0 %v987
    %1449 = vmatprep.subr.bf16.mxu0 %v984
    %1450 = vmatpush1.bf16.msra.mxu0 %v983
    %1451 = vmatprep.subr.bf16.mxu0 %v980
    %1452 = vmatpush1.bf16.msra.mxu0 %v979
    %1453 = vmatprep.subr.bf16.mxu0 %v976
    %1454 = vmatpush1.bf16.msra.mxu0 %v975
    %1455 = vmatprep.subr.bf16.mxu0 %v972
    %1456 = vmatpush1.bf16.msra.mxu0 %v971
    %1457 = vmatprep.subr.bf16.mxu0 %v968
    %1458 = vmatpush1.bf16.msra.mxu0 %v967
    %1459 = vmatprep.subr.bf16.mxu0 %v964
    %1460 = vmatpush1.bf16.msra.mxu0 %v963
    %1461 = vmatprep.subr.bf16.mxu0 %v1024
    %1462 = vmatpush2.bf16.msra.mxu0 %v1023
    %1463 = vmatprep.subr.bf16.mxu0 %v1020
    %1464 = vmatpush2.bf16.msra.mxu0 %v1019
    %1465 = vmatprep.subr.bf16.mxu0 %v1016
    %1466 = vmatpush2.bf16.msra.mxu0 %v1015
    %1467 = vmatprep.subr.bf16.mxu0 %v1012
    %1468 = vmatpush2.bf16.msra.mxu0 %v1011
    %1469 = vmatprep.subr.bf16.mxu0 %v1008
    %1470 = vmatpush2.bf16.msra.mxu0 %v1007
    %1471 = vmatprep.subr.bf16.mxu0 %v1004
    %1472 = vmatpush2.bf16.msra.mxu0 %v1003
    %1473 = vmatprep.subr.bf16.mxu0 %v1000
    %1474 = vmatpush2.bf16.msra.mxu0 %v999
    %1475 = vmatprep.subr.bf16.mxu0 %v996
    %1476 = vmatpush2.bf16.msra.mxu0 %v995
    %1477 = vmatprep.mubr.bf16.mxu0 %v126
    %1478 = vmatmul.mubr.bf16.gmra.mxu0 %v125
    %v1479 = vpop.f32.mrf.mxu0
    %v1480 = vadd.f32 %v1439, %v1479
    %v1481 = vpop.f32.mrf.mxu0
    %v1482 = vadd.f32 %v1441, %v1481
    %v1483 = vpop.f32.mrf.mxu0
    %v1484 = vpop.f32.mrf.mxu0
    %1485 = vdwg.mxu0
    %1486 = vmatprep.subr.bf16.mxu0 %v1056
    %1487 = vmatpush1.bf16.msra.mxu0 %v1055
    %1488 = vmatprep.subr.bf16.mxu0 %v1052
    %1489 = vmatpush1.bf16.msra.mxu0 %v1051
    %1490 = vmatprep.subr.bf16.mxu0 %v1048
    %1491 = vmatpush1.bf16.msra.mxu0 %v1047
    %1492 = vmatprep.subr.bf16.mxu0 %v1044
    %1493 = vmatpush1.bf16.msra.mxu0 %v1043
    %1494 = vmatprep.subr.bf16.mxu0 %v1040
    %1495 = vmatpush1.bf16.msra.mxu0 %v1039
    %1496 = vmatprep.subr.bf16.mxu0 %v1036
    %1497 = vmatpush1.bf16.msra.mxu0 %v1035
    %1498 = vmatprep.subr.bf16.mxu0 %v1032
    %1499 = vmatpush1.bf16.msra.mxu0 %v1031
    %1500 = vmatprep.subr.bf16.mxu0 %v1028
    %1501 = vmatpush1.bf16.msra.mxu0 %v1027
    %1502 = vmatprep.subr.bf16.mxu0 %v1088
    %1503 = vmatpush2.bf16.msra.mxu0 %v1087
    %1504 = vmatprep.subr.bf16.mxu0 %v1084
    %1505 = vmatpush2.bf16.msra.mxu0 %v1083
    %1506 = vmatprep.subr.bf16.mxu0 %v1080
    %1507 = vmatpush2.bf16.msra.mxu0 %v1079
    %1508 = vmatprep.subr.bf16.mxu0 %v1076
    %1509 = vmatpush2.bf16.msra.mxu0 %v1075
    %1510 = vmatprep.subr.bf16.mxu0 %v1072
    %1511 = vmatpush2.bf16.msra.mxu0 %v1071
    %1512 = vmatprep.subr.bf16.mxu0 %v1068
    %1513 = vmatpush2.bf16.msra.mxu0 %v1067
    %1514 = vmatprep.subr.bf16.mxu0 %v1064
    %1515 = vmatpush2.bf16.msra.mxu0 %v1063
    %1516 = vmatprep.subr.bf16.mxu0 %v1060
    %1517 = vmatpush2.bf16.msra.mxu0 %v1059
    %1518 = vmatprep.mubr.bf16.mxu0 %v128
    %1519 = vmatmul.mubr.bf16.gmra.mxu0 %v127
    %v1520 = vpop.f32.mrf.mxu0
    %v1521 = vadd.f32 %v1480, %v1520
    %v1522 = vpop.f32.mrf.mxu0
    %v1523 = vadd.f32 %v1482, %v1522
    %v1524 = vpop.f32.mrf.mxu0
    %v1525 = vpop.f32.mrf.mxu0
    %1526 = vdwg.mxu0
    %vm1527 = vcmask 1041408
    %v1528 = vsel %vm1527, %v1398, 0.0
    %v1529 = vrot.slane %v1528, 4
    %v1530 = vadd.f32 %v1528, %v1529
    %v1531 = vrot.slane %v1530, 2
    %v1532 = vadd.f32 %v1530, %v1531
    %v1533 = vrot.slane %v1532, 1
    %v1534 = vadd.f32 %v1532, %v1533
    %v1535 = vsel %vm1527, %v1400, 0.0
    %v1536 = vrot.slane %v1535, 4
    %v1537 = vadd.f32 %v1535, %v1536
    %v1538 = vrot.slane %v1537, 2
    %v1539 = vadd.f32 %v1537, %v1538
    %v1540 = vrot.slane %v1539, 1
    %v1541 = vadd.f32 %v1539, %v1540
    %v1542 = vsel %vm1527, %v1521, 0.0
    %v1543 = vrot.slane %v1542, 4
    %v1544 = vadd.f32 %v1542, %v1543
    %v1545 = vrot.slane %v1544, 2
    %v1546 = vadd.f32 %v1544, %v1545
    %v1547 = vrot.slane %v1546, 1
    %v1548 = vadd.f32 %v1546, %v1547
    %v1549 = vsel %vm1527, %v1523, 0.0
    %v1550 = vrot.slane %v1549, 4
    %v1551 = vadd.f32 %v1549, %v1550
    %v1552 = vrot.slane %v1551, 2
    %v1553 = vadd.f32 %v1551, %v1552
    %v1554 = vrot.slane %v1553, 1
    %v1555 = vadd.f32 %v1553, %v1554
    %v1556 = vmul.f32 %v1398, %v1398
    %v1557 = vmul.f32 %v1400, %v1400
    %v1558 = vmul.f32 %v1521, %v1521
    %v1559 = vmul.f32 %v1523, %v1523
    %v1560 = vsel %vm1527, %v1556, 0.0
    %v1561 = vrot.slane %v1560, 4
    %v1562 = vadd.f32 %v1560, %v1561
    %v1563 = vrot.slane %v1562, 2
    %v1564 = vadd.f32 %v1562, %v1563
    %v1565 = vrot.slane %v1564, 1
    %v1566 = vadd.f32 %v1564, %v1565
    %v1567 = vsel %vm1527, %v1557, 0.0
    %v1568 = vrot.slane %v1567, 4
    %v1569 = vadd.f32 %v1567, %v1568
    %v1570 = vrot.slane %v1569, 2
    %v1571 = vadd.f32 %v1569, %v1570
    %v1572 = vrot.slane %v1571, 1
    %v1573 = vadd.f32 %v1571, %v1572
    %v1574 = vsel %vm1527, %v1558, 0.0
    %v1575 = vrot.slane %v1574, 4
    %v1576 = vadd.f32 %v1574, %v1575
    %v1577 = vrot.slane %v1576, 2
    %v1578 = vadd.f32 %v1576, %v1577
    %v1579 = vrot.slane %v1578, 1
    %v1580 = vadd.f32 %v1578, %v1579
    %v1581 = vsel %vm1527, %v1559, 0.0
    %v1582 = vrot.slane %v1581, 4
    %v1583 = vadd.f32 %v1581, %v1582
    %v1584 = vrot.slane %v1583, 2
    %v1585 = vadd.f32 %v1583, %v1584
    %v1586 = vrot.slane %v1585, 1
    %v1587 = vadd.f32 %v1585, %v1586
    %v1588 = vpack.c.bf16 %v1534, %v1534
    %v1589 = vpack.c.bf16 %v1541, %v1541
    %v1590 = vpack.c.bf16 %v1548, %v1548
    %v1591 = vpack.c.bf16 %v1555, %v1555
    %v1592 = vld [vmem:[%s2] sm:$0xf]
    %v1593 = vld [vmem:[%s2 + $0x4] sm:$0xf]
    %v1594 = vld [vmem:[%s2 + $0x8] sm:$0xf]
    %v1595 = vld [vmem:[%s2 + $0xc] sm:$0xf]
    %v1596 = vld [vmem:[%s2 + $0x10] sm:$0xf]
    %v1597 = vld [vmem:[%s2 + $0x14] sm:$0xf]
    %v1598 = vld [vmem:[%s2 + $0x18] sm:$0xf]
    %v1599 = vld [vmem:[%s2 + $0x1c] sm:$0xf]
    %v1600 = vld [vmem:[%s2 + $0x20] sm:$0xf]
    %v1601 = vld [vmem:[%s2 + $0x24] sm:$0xf]
    %v1602 = vld [vmem:[%s2 + $0x28] sm:$0xf]
    %v1603 = vld [vmem:[%s2 + $0x2c] sm:$0xf]
    %v1604 = vld [vmem:[%s2 + $0x30] sm:$0xf]
    %v1605 = vld [vmem:[%s2 + $0x34] sm:$0xf]
    %v1606 = vld [vmem:[%s2 + $0x38] sm:$0xf]
    %v1607 = vld [vmem:[%s2 + $0x3c] sm:$0xf]
    %v1608 = vld [vmem:[%s2 + $0x40] sm:$0xf]
    %v1609 = vld [vmem:[%s2 + $0x44] sm:$0xf]
    %v1610 = vld [vmem:[%s2 + $0x48] sm:$0xf]
    %v1611 = vld [vmem:[%s2 + $0x4c] sm:$0xf]
    %v1612 = vld [vmem:[%s2 + $0x50] sm:$0xf]
    %v1613 = vld [vmem:[%s2 + $0x54] sm:$0xf]
    %v1614 = vld [vmem:[%s2 + $0x58] sm:$0xf]
    %v1615 = vld [vmem:[%s2 + $0x5c] sm:$0xf]
    %v1616 = vld [vmem:[%s2 + $0x60] sm:$0xf]
    %v1617 = vld [vmem:[%s2 + $0x64] sm:$0xf]
    %v1618 = vld [vmem:[%s2 + $0x68] sm:$0xf]
    %v1619 = vld [vmem:[%s2 + $0x6c] sm:$0xf]
    %v1620 = vld [vmem:[%s2 + $0x70] sm:$0xf]
    %v1621 = vld [vmem:[%s2 + $0x74] sm:$0xf]
    %v1622 = vld [vmem:[%s2 + $0x78] sm:$0xf]
    %v1623 = vld [vmem:[%s2 + $0x7c] sm:$0xf]
    %v1624 = vld [vmem:[%s2 + $0x80] sm:$0xf]
    %v1625 = vld [vmem:[%s2 + $0x84] sm:$0xf]
    %v1626 = vld [vmem:[%s2 + $0x88] sm:$0xf]
    %v1627 = vld [vmem:[%s2 + $0x8c] sm:$0xf]
    %v1628 = vld [vmem:[%s2 + $0x90] sm:$0xf]
    %v1629 = vld [vmem:[%s2 + $0x94] sm:$0xf]
    %v1630 = vld [vmem:[%s2 + $0x98] sm:$0xf]
    %v1631 = vld [vmem:[%s2 + $0x9c] sm:$0xf]
    %v1632 = vld [vmem:[%s2 + $0xa0] sm:$0xf]
    %v1633 = vld [vmem:[%s2 + $0xa4] sm:$0xf]
    %v1634 = vld [vmem:[%s2 + $0xa8] sm:$0xf]
    %v1635 = vld [vmem:[%s2 + $0xac] sm:$0xf]
    %v1636 = vld [vmem:[%s2 + $0xb0] sm:$0xf]
    %v1637 = vld [vmem:[%s2 + $0xb4] sm:$0xf]
    %v1638 = vld [vmem:[%s2 + $0xb8] sm:$0xf]
    %v1639 = vld [vmem:[%s2 + $0xbc] sm:$0xf]
    %v1640 = vld [vmem:[%s2 + $0xc0] sm:$0xf]
    %v1641 = vld [vmem:[%s2 + $0xc4] sm:$0xf]
    %v1642 = vld [vmem:[%s2 + $0xc8] sm:$0xf]
    %v1643 = vld [vmem:[%s2 + $0xcc] sm:$0xf]
    %v1644 = vld [vmem:[%s2 + $0xd0] sm:$0xf]
    %v1645 = vld [vmem:[%s2 + $0xd4] sm:$0xf]
    %v1646 = vld [vmem:[%s2 + $0xd8] sm:$0xf]
    %v1647 = vld [vmem:[%s2 + $0xdc] sm:$0xf]
    %v1648 = vld [vmem:[%s2 + $0xe0] sm:$0xf]
    %v1649 = vld [vmem:[%s2 + $0xe4] sm:$0xf]
    %v1650 = vld [vmem:[%s2 + $0xe8] sm:$0xf]
    %v1651 = vld [vmem:[%s2 + $0xec] sm:$0xf]
    %v1652 = vld [vmem:[%s2 + $0xf0] sm:$0xf]
    %v1653 = vld [vmem:[%s2 + $0xf4] sm:$0xf]
    %v1654 = vld [vmem:[%s2 + $0xf8] sm:$0xf]
    %v1655 = vld [vmem:[%s2 + $0xfc] sm:$0xf]
    %v1720 = vunpack.c.l.b16 %v1592
    %v1721 = vunpack.c.l.b16 %v1593
    %v1722 = vunpack.c.l.b16 %v1594
    %v1723 = vunpack.c.l.b16 %v1595
    %v1724 = vunpack.c.l.b16 %v1596
    %v1725 = vunpack.c.l.b16 %v1597
    %v1726 = vunpack.c.l.b16 %v1598
    %v1727 = vunpack.c.l.b16 %v1599
    %v1728 = vunpack.c.l.b16 %v1600
    %v1729 = vunpack.c.l.b16 %v1601
    %v1730 = vunpack.c.l.b16 %v1602
    %v1731 = vunpack.c.l.b16 %v1603
    %v1732 = vunpack.c.l.b16 %v1604
    %v1733 = vunpack.c.l.b16 %v1605
    %v1734 = vunpack.c.l.b16 %v1606
    %v1735 = vunpack.c.l.b16 %v1607
    %v1736 = vunpack.c.l.b16 %v1608
    %v1737 = vunpack.c.l.b16 %v1609
    %v1738 = vunpack.c.l.b16 %v1610
    %v1739 = vunpack.c.l.b16 %v1611
    %v1740 = vunpack.c.l.b16 %v1612
    %v1741 = vunpack.c.l.b16 %v1613
    %v1742 = vunpack.c.l.b16 %v1614
    %v1743 = vunpack.c.l.b16 %v1615
    %v1744 = vunpack.c.l.b16 %v1616
    %v1745 = vunpack.c.l.b16 %v1617
    %v1746 = vunpack.c.l.b16 %v1618
    %v1747 = vunpack.c.l.b16 %v1619
    %v1748 = vunpack.c.l.b16 %v1620
    %v1749 = vunpack.c.l.b16 %v1621
    %v1750 = vunpack.c.l.b16 %v1622
    %v1751 = vunpack.c.l.b16 %v1623
    %v1752 = vunpack.c.l.b16 %v1624
    %v1753 = vunpack.c.l.b16 %v1625
    %v1754 = vunpack.c.l.b16 %v1626
    %v1755 = vunpack.c.l.b16 %v1627
    %v1756 = vunpack.c.l.b16 %v1628
    %v1757 = vunpack.c.l.b16 %v1629
    %v1758 = vunpack.c.l.b16 %v1630
    %v1759 = vunpack.c.l.b16 %v1631
    %v1760 = vunpack.c.l.b16 %v1632
    %v1761 = vunpack.c.l.b16 %v1633
    %v1762 = vunpack.c.l.b16 %v1634
    %v1763 = vunpack.c.l.b16 %v1635
    %v1764 = vunpack.c.l.b16 %v1636
    %v1765 = vunpack.c.l.b16 %v1637
    %v1766 = vunpack.c.l.b16 %v1638
    %v1767 = vunpack.c.l.b16 %v1639
    %v1768 = vunpack.c.l.b16 %v1640
    %v1769 = vunpack.c.l.b16 %v1641
    %v1770 = vunpack.c.l.b16 %v1642
    %v1771 = vunpack.c.l.b16 %v1643
    %v1772 = vunpack.c.l.b16 %v1644
    %v1773 = vunpack.c.l.b16 %v1645
    %v1774 = vunpack.c.l.b16 %v1646
    %v1775 = vunpack.c.l.b16 %v1647
    %v1776 = vunpack.c.l.b16 %v1648
    %v1777 = vunpack.c.l.b16 %v1649
    %v1778 = vunpack.c.l.b16 %v1650
    %v1779 = vunpack.c.l.b16 %v1651
    %v1780 = vunpack.c.l.b16 %v1652
    %v1781 = vunpack.c.l.b16 %v1653
    %v1782 = vunpack.c.l.b16 %v1654
    %v1783 = vunpack.c.l.b16 %v1655
    %v1784 = vpack.c.b16 %v1721, %v1720
    %v1785 = vpack.c.b16 %v1723, %v1722
    %v1786 = vpack.c.b16 %v1725, %v1724
    %v1787 = vpack.c.b16 %v1727, %v1726
    %v1788 = vpack.c.b16 %v1729, %v1728
    %v1789 = vpack.c.b16 %v1731, %v1730
    %v1790 = vpack.c.b16 %v1733, %v1732
    %v1791 = vpack.c.b16 %v1735, %v1734
    %v1792 = vpack.c.b16 %v1737, %v1736
    %v1793 = vpack.c.b16 %v1739, %v1738
    %v1794 = vpack.c.b16 %v1741, %v1740
    %v1795 = vpack.c.b16 %v1743, %v1742
    %v1796 = vpack.c.b16 %v1745, %v1744
    %v1797 = vpack.c.b16 %v1747, %v1746
    %v1798 = vpack.c.b16 %v1749, %v1748
    %v1799 = vpack.c.b16 %v1751, %v1750
    %v1800 = vpack.c.b16 %v1753, %v1752
    %v1801 = vpack.c.b16 %v1755, %v1754
    %v1802 = vpack.c.b16 %v1757, %v1756
    %v1803 = vpack.c.b16 %v1759, %v1758
    %v1804 = vpack.c.b16 %v1761, %v1760
    %v1805 = vpack.c.b16 %v1763, %v1762
    %v1806 = vpack.c.b16 %v1765, %v1764
    %v1807 = vpack.c.b16 %v1767, %v1766
    %v1808 = vpack.c.b16 %v1769, %v1768
    %v1809 = vpack.c.b16 %v1771, %v1770
    %v1810 = vpack.c.b16 %v1773, %v1772
    %v1811 = vpack.c.b16 %v1775, %v1774
    %v1812 = vpack.c.b16 %v1777, %v1776
    %v1813 = vpack.c.b16 %v1779, %v1778
    %v1814 = vpack.c.b16 %v1781, %v1780
    %v1815 = vpack.c.b16 %v1783, %v1782
    %1848 = vmatprep.subr.bf16.mxu0 0
    %1849 = vmatpush1.bf16.msra.mxu0 %v1791
    %1850 = vmatprep.subr.bf16.mxu0 0
    %1851 = vmatpush1.bf16.msra.mxu0 %v1790
    %1852 = vmatprep.subr.bf16.mxu0 0
    %1853 = vmatpush1.bf16.msra.mxu0 %v1789
    %1854 = vmatprep.subr.bf16.mxu0 0
    %1855 = vmatpush1.bf16.msra.mxu0 %v1788
    %1856 = vmatprep.subr.bf16.mxu0 0
    %1857 = vmatpush1.bf16.msra.mxu0 %v1787
    %1858 = vmatprep.subr.bf16.mxu0 0
    %1859 = vmatpush1.bf16.msra.mxu0 %v1786
    %1860 = vmatprep.subr.bf16.mxu0 0
    %1861 = vmatpush1.bf16.msra.mxu0 %v1785
    %1862 = vmatprep.subr.bf16.mxu0 0
    %1863 = vmatpush1.bf16.msra.mxu0 %v1784
    %1864 = vmatprep.subr.bf16.mxu0 0
    %1865 = vmatpush2.bf16.msra.mxu0 %v1799
    %1866 = vmatprep.subr.bf16.mxu0 0
    %1867 = vmatpush2.bf16.msra.mxu0 %v1798
    %1868 = vmatprep.subr.bf16.mxu0 0
    %1869 = vmatpush2.bf16.msra.mxu0 %v1797
    %1870 = vmatprep.subr.bf16.mxu0 0
    %1871 = vmatpush2.bf16.msra.mxu0 %v1796
    %1872 = vmatprep.subr.bf16.mxu0 0
    %1873 = vmatpush2.bf16.msra.mxu0 %v1795
    %1874 = vmatprep.subr.bf16.mxu0 0
    %1875 = vmatpush2.bf16.msra.mxu0 %v1794
    %1876 = vmatprep.subr.bf16.mxu0 0
    %1877 = vmatpush2.bf16.msra.mxu0 %v1793
    %1878 = vmatprep.subr.bf16.mxu0 0
    %1879 = vmatpush2.bf16.msra.mxu0 %v1792
    %1880 = vmatprep.mubr.bf16.mxu0 %v1589
    %1881 = vmatmul.mubr.bf16.gmra.mxu0 %v1588
    %v1882 = vpop.f32.mrf.mxu0
    %v1883 = vadd.f32 0.0, %v1882
    %v1884 = vpop.f32.mrf.mxu0
    %v1885 = vpop.f32.mrf.mxu0
    %v1886 = vpop.f32.mrf.mxu0
    %1887 = vdwg.mxu0
    %1888 = vmatprep.subr.bf16.mxu0 0
    %1889 = vmatpush1.bf16.msra.mxu0 %v1807
    %1890 = vmatprep.subr.bf16.mxu0 0
    %1891 = vmatpush1.bf16.msra.mxu0 %v1806
    %1892 = vmatprep.subr.bf16.mxu0 0
    %1893 = vmatpush1.bf16.msra.mxu0 %v1805
    %1894 = vmatprep.subr.bf16.mxu0 0
    %1895 = vmatpush1.bf16.msra.mxu0 %v1804
    %1896 = vmatprep.subr.bf16.mxu0 0
    %1897 = vmatpush1.bf16.msra.mxu0 %v1803
    %1898 = vmatprep.subr.bf16.mxu0 0
    %1899 = vmatpush1.bf16.msra.mxu0 %v1802
    %1900 = vmatprep.subr.bf16.mxu0 0
    %1901 = vmatpush1.bf16.msra.mxu0 %v1801
    %1902 = vmatprep.subr.bf16.mxu0 0
    %1903 = vmatpush1.bf16.msra.mxu0 %v1800
    %1904 = vmatprep.subr.bf16.mxu0 0
    %1905 = vmatpush2.bf16.msra.mxu0 %v1815
    %1906 = vmatprep.subr.bf16.mxu0 0
    %1907 = vmatpush2.bf16.msra.mxu0 %v1814
    %1908 = vmatprep.subr.bf16.mxu0 0
    %1909 = vmatpush2.bf16.msra.mxu0 %v1813
    %1910 = vmatprep.subr.bf16.mxu0 0
    %1911 = vmatpush2.bf16.msra.mxu0 %v1812
    %1912 = vmatprep.subr.bf16.mxu0 0
    %1913 = vmatpush2.bf16.msra.mxu0 %v1811
    %1914 = vmatprep.subr.bf16.mxu0 0
    %1915 = vmatpush2.bf16.msra.mxu0 %v1810
    %1916 = vmatprep.subr.bf16.mxu0 0
    %1917 = vmatpush2.bf16.msra.mxu0 %v1809
    %1918 = vmatprep.subr.bf16.mxu0 0
    %1919 = vmatpush2.bf16.msra.mxu0 %v1808
    %1920 = vmatprep.mubr.bf16.mxu0 %v1591
    %1921 = vmatmul.mubr.bf16.gmra.mxu0 %v1590
    %v1922 = vpop.f32.mrf.mxu0
    %v1923 = vadd.f32 %v1883, %v1922
    %v1924 = vpop.f32.mrf.mxu0
    %v1925 = vpop.f32.mrf.mxu0
    %v1926 = vpop.f32.mrf.mxu0
    %1927 = vdwg.mxu0
    %v1928 = vmul.f32 %v1923, 0.0078125
    %v1929 = vpack.c.bf16 %v1566, %v1566
    %v1930 = vpack.c.bf16 %v1573, %v1573
    %v1931 = vpack.c.bf16 %v1580, %v1580
    %v1932 = vpack.c.bf16 %v1587, %v1587
    %1933 = vmatprep.subr.bf16.mxu0 0
    %1934 = vmatpush1.bf16.msra.mxu0 %v1791
    %1935 = vmatprep.subr.bf16.mxu0 0
    %1936 = vmatpush1.bf16.msra.mxu0 %v1790
    %1937 = vmatprep.subr.bf16.mxu0 0
    %1938 = vmatpush1.bf16.msra.mxu0 %v1789
    %1939 = vmatprep.subr.bf16.mxu0 0
    %1940 = vmatpush1.bf16.msra.mxu0 %v1788
    %1941 = vmatprep.subr.bf16.mxu0 0
    %1942 = vmatpush1.bf16.msra.mxu0 %v1787
    %1943 = vmatprep.subr.bf16.mxu0 0
    %1944 = vmatpush1.bf16.msra.mxu0 %v1786
    %1945 = vmatprep.subr.bf16.mxu0 0
    %1946 = vmatpush1.bf16.msra.mxu0 %v1785
    %1947 = vmatprep.subr.bf16.mxu0 0
    %1948 = vmatpush1.bf16.msra.mxu0 %v1784
    %1949 = vmatprep.subr.bf16.mxu0 0
    %1950 = vmatpush2.bf16.msra.mxu0 %v1799
    %1951 = vmatprep.subr.bf16.mxu0 0
    %1952 = vmatpush2.bf16.msra.mxu0 %v1798
    %1953 = vmatprep.subr.bf16.mxu0 0
    %1954 = vmatpush2.bf16.msra.mxu0 %v1797
    %1955 = vmatprep.subr.bf16.mxu0 0
    %1956 = vmatpush2.bf16.msra.mxu0 %v1796
    %1957 = vmatprep.subr.bf16.mxu0 0
    %1958 = vmatpush2.bf16.msra.mxu0 %v1795
    %1959 = vmatprep.subr.bf16.mxu0 0
    %1960 = vmatpush2.bf16.msra.mxu0 %v1794
    %1961 = vmatprep.subr.bf16.mxu0 0
    %1962 = vmatpush2.bf16.msra.mxu0 %v1793
    %1963 = vmatprep.subr.bf16.mxu0 0
    %1964 = vmatpush2.bf16.msra.mxu0 %v1792
    %1965 = vmatprep.mubr.bf16.mxu0 %v1930
    %1966 = vmatmul.mubr.bf16.gmra.mxu0 %v1929
    %v1967 = vpop.f32.mrf.mxu0
    %v1968 = vadd.f32 0.0, %v1967
    %v1969 = vpop.f32.mrf.mxu0
    %v1970 = vpop.f32.mrf.mxu0
    %v1971 = vpop.f32.mrf.mxu0
    %1972 = vdwg.mxu0
    %1973 = vmatprep.subr.bf16.mxu0 0
    %1974 = vmatpush1.bf16.msra.mxu0 %v1807
    %1975 = vmatprep.subr.bf16.mxu0 0
    %1976 = vmatpush1.bf16.msra.mxu0 %v1806
    %1977 = vmatprep.subr.bf16.mxu0 0
    %1978 = vmatpush1.bf16.msra.mxu0 %v1805
    %1979 = vmatprep.subr.bf16.mxu0 0
    %1980 = vmatpush1.bf16.msra.mxu0 %v1804
    %1981 = vmatprep.subr.bf16.mxu0 0
    %1982 = vmatpush1.bf16.msra.mxu0 %v1803
    %1983 = vmatprep.subr.bf16.mxu0 0
    %1984 = vmatpush1.bf16.msra.mxu0 %v1802
    %1985 = vmatprep.subr.bf16.mxu0 0
    %1986 = vmatpush1.bf16.msra.mxu0 %v1801
    %1987 = vmatprep.subr.bf16.mxu0 0
    %1988 = vmatpush1.bf16.msra.mxu0 %v1800
    %1989 = vmatprep.subr.bf16.mxu0 0
    %1990 = vmatpush2.bf16.msra.mxu0 %v1815
    %1991 = vmatprep.subr.bf16.mxu0 0
    %1992 = vmatpush2.bf16.msra.mxu0 %v1814
    %1993 = vmatprep.subr.bf16.mxu0 0
    %1994 = vmatpush2.bf16.msra.mxu0 %v1813
    %1995 = vmatprep.subr.bf16.mxu0 0
    %1996 = vmatpush2.bf16.msra.mxu0 %v1812
    %1997 = vmatprep.subr.bf16.mxu0 0
    %1998 = vmatpush2.bf16.msra.mxu0 %v1811
    %1999 = vmatprep.subr.bf16.mxu0 0
    %2000 = vmatpush2.bf16.msra.mxu0 %v1810
    %2001 = vmatprep.subr.bf16.mxu0 0
    %2002 = vmatpush2.bf16.msra.mxu0 %v1809
    %2003 = vmatprep.subr.bf16.mxu0 0
    %2004 = vmatpush2.bf16.msra.mxu0 %v1808
    %2005 = vmatprep.mubr.bf16.mxu0 %v1932
    %2006 = vmatmul.mubr.bf16.gmra.mxu0 %v1931
    %v2007 = vpop.f32.mrf.mxu0
    %v2008 = vadd.f32 %v1968, %v2007
    %v2009 = vpop.f32.mrf.mxu0
    %v2010 = vpop.f32.mrf.mxu0
    %v2011 = vpop.f32.mrf.mxu0
    %2012 = vdwg.mxu0
    %v2013 = vmul.f32 %v2008, 0.0078125
    %v2014 = vmul.f32 %v1928, %v1928
    %v2015 = vsub.f32 %v2013, %v2014
    %v2016 = vmax.f32 %v2015, 0.0
    %v2017 = vadd.f32 %v2016, 1e-05
    %v2018 = vrsqrt.pop %v2017
    %v2019 = vmul.f32 %v88, %v2018
    %v2020 = vmul.f32 %v1928, %v2019
    %v2021 = vsub.f32 %v89, %v2020
    %v2022 = vpack.c.bf16 %v2019, %v2019
    %v2023 = vld [vmem:[%s3] sm:$0xff]
    %v2024 = vld [vmem:[%s3 + $0x8] sm:$0xff]
    %v2027 = vunpack.c.l.b16 %v2023
    %v2028 = vunpack.c.h.b16 %v2023
    %v2029 = vunpack.c.l.b16 %v2024
    %v2030 = vunpack.c.h.b16 %v2024
    %v2031 = vpack.c.b16 %v2027, %v2027
    %v2032 = vpack.c.b16 %v2028, %v2028
    %v2033 = vpack.c.b16 %v2029, %v2029
    %v2034 = vpack.c.b16 %v2030, %v2030
    %vm2035 = vcmask 64512
    %v2037 = vsel %vm2035, %v2022, 0
    %vm2039 = vcmask 1043456
    %v2041 = vsel %vm2039, %v2031, 0
    %v2044 = vsel %vm2039, %v2032, 0
    %v2047 = vsel %vm2039, %v2033, 0
    %v2050 = vsel %vm2039, %v2034, 0
    %2052 = vmatprep.subr.bf16.mxu0 0
    %2053 = vmatpush1.bf16.msra.mxu0 0
    %2054 = vmatprep.subr.bf16.mxu0 0
    %2055 = vmatpush1.bf16.msra.mxu0 0
    %2056 = vmatprep.subr.bf16.mxu0 0
    %2057 = vmatpush1.bf16.msra.mxu0 0
    %2058 = vmatprep.subr.bf16.mxu0 0
    %2059 = vmatpush1.bf16.msra.mxu0 0
    %2060 = vmatprep.subr.bf16.mxu0 0
    %2061 = vmatpush1.bf16.msra.mxu0 0
    %2062 = vmatprep.subr.bf16.mxu0 0
    %2063 = vmatpush1.bf16.msra.mxu0 0
    %2064 = vmatprep.subr.bf16.mxu0 0
    %2065 = vmatpush1.bf16.msra.mxu0 0
    %2066 = vmatprep.subr.bf16.mxu0 %v2044
    %2067 = vmatpush1.bf16.msra.mxu0 %v2041
    %2068 = vmatprep.subr.bf16.mxu0 0
    %2069 = vmatpush2.bf16.msra.mxu0 0
    %2070 = vmatprep.subr.bf16.mxu0 0
    %2071 = vmatpush2.bf16.msra.mxu0 0
    %2072 = vmatprep.subr.bf16.mxu0 0
    %2073 = vmatpush2.bf16.msra.mxu0 0
    %2074 = vmatprep.subr.bf16.mxu0 0
    %2075 = vmatpush2.bf16.msra.mxu0 0
    %2076 = vmatprep.subr.bf16.mxu0 0
    %2077 = vmatpush2.bf16.msra.mxu0 0
    %2078 = vmatprep.subr.bf16.mxu0 0
    %2079 = vmatpush2.bf16.msra.mxu0 0
    %2080 = vmatprep.subr.bf16.mxu0 0
    %2081 = vmatpush2.bf16.msra.mxu0 0
    %2082 = vmatprep.subr.bf16.mxu0 0
    %2083 = vmatpush2.bf16.msra.mxu0 0
    %2084 = vmatprep.mubr.bf16.mxu0 0
    %2085 = vmatmul.mubr.bf16.gmra.mxu0 %v2037
    %v2086 = vpop.f32.mrf.mxu0
    %v2087 = vadd.f32 0.0, %v2086
    %v2088 = vpop.f32.mrf.mxu0
    %v2089 = vadd.f32 0.0, %v2088
    %v2090 = vpop.f32.mrf.mxu0
    %v2091 = vpop.f32.mrf.mxu0
    %2092 = vdwg.mxu0
    %2093 = vmatprep.subr.bf16.mxu0 0
    %2094 = vmatpush1.bf16.msra.mxu0 0
    %2095 = vmatprep.subr.bf16.mxu0 0
    %2096 = vmatpush1.bf16.msra.mxu0 0
    %2097 = vmatprep.subr.bf16.mxu0 0
    %2098 = vmatpush1.bf16.msra.mxu0 0
    %2099 = vmatprep.subr.bf16.mxu0 0
    %2100 = vmatpush1.bf16.msra.mxu0 0
    %2101 = vmatprep.subr.bf16.mxu0 0
    %2102 = vmatpush1.bf16.msra.mxu0 0
    %2103 = vmatprep.subr.bf16.mxu0 0
    %2104 = vmatpush1.bf16.msra.mxu0 0
    %2105 = vmatprep.subr.bf16.mxu0 0
    %2106 = vmatpush1.bf16.msra.mxu0 0
    %2107 = vmatprep.subr.bf16.mxu0 %v2050
    %2108 = vmatpush1.bf16.msra.mxu0 %v2047
    %2109 = vmatprep.subr.bf16.mxu0 0
    %2110 = vmatpush2.bf16.msra.mxu0 0
    %2111 = vmatprep.subr.bf16.mxu0 0
    %2112 = vmatpush2.bf16.msra.mxu0 0
    %2113 = vmatprep.subr.bf16.mxu0 0
    %2114 = vmatpush2.bf16.msra.mxu0 0
    %2115 = vmatprep.subr.bf16.mxu0 0
    %2116 = vmatpush2.bf16.msra.mxu0 0
    %2117 = vmatprep.subr.bf16.mxu0 0
    %2118 = vmatpush2.bf16.msra.mxu0 0
    %2119 = vmatprep.subr.bf16.mxu0 0
    %2120 = vmatpush2.bf16.msra.mxu0 0
    %2121 = vmatprep.subr.bf16.mxu0 0
    %2122 = vmatpush2.bf16.msra.mxu0 0
    %2123 = vmatprep.subr.bf16.mxu0 0
    %2124 = vmatpush2.bf16.msra.mxu0 0
    %2125 = vmatprep.mubr.bf16.mxu0 0
    %2126 = vmatmul.mubr.bf16.gmra.mxu0 %v2037
    %v2127 = vpop.f32.mrf.mxu0
    %v2128 = vadd.f32 0.0, %v2127
    %v2129 = vpop.f32.mrf.mxu0
    %v2130 = vadd.f32 0.0, %v2129
    %v2131 = vpop.f32.mrf.mxu0
    %v2132 = vpop.f32.mrf.mxu0
    %2133 = vdwg.mxu0
    %v2134 = vpack.c.bf16 %v2021, %v2021
    %v2136 = vsel %vm2035, %v2134, 0
    %2138 = vmatprep.subr.bf16.mxu0 0
    %2139 = vmatpush1.bf16.msra.mxu0 0
    %2140 = vmatprep.subr.bf16.mxu0 0
    %2141 = vmatpush1.bf16.msra.mxu0 0
    %2142 = vmatprep.subr.bf16.mxu0 0
    %2143 = vmatpush1.bf16.msra.mxu0 0
    %2144 = vmatprep.subr.bf16.mxu0 0
    %2145 = vmatpush1.bf16.msra.mxu0 0
    %2146 = vmatprep.subr.bf16.mxu0 0
    %2147 = vmatpush1.bf16.msra.mxu0 0
    %2148 = vmatprep.subr.bf16.mxu0 0
    %2149 = vmatpush1.bf16.msra.mxu0 0
    %2150 = vmatprep.subr.bf16.mxu0 0
    %2151 = vmatpush1.bf16.msra.mxu0 0
    %2152 = vmatprep.subr.bf16.mxu0 %v2044
    %2153 = vmatpush1.bf16.msra.mxu0 %v2041
    %2154 = vmatprep.subr.bf16.mxu0 0
    %2155 = vmatpush2.bf16.msra.mxu0 0
    %2156 = vmatprep.subr.bf16.mxu0 0
    %2157 = vmatpush2.bf16.msra.mxu0 0
    %2158 = vmatprep.subr.bf16.mxu0 0
    %2159 = vmatpush2.bf16.msra.mxu0 0
    %2160 = vmatprep.subr.bf16.mxu0 0
    %2161 = vmatpush2.bf16.msra.mxu0 0
    %2162 = vmatprep.subr.bf16.mxu0 0
    %2163 = vmatpush2.bf16.msra.mxu0 0
    %2164 = vmatprep.subr.bf16.mxu0 0
    %2165 = vmatpush2.bf16.msra.mxu0 0
    %2166 = vmatprep.subr.bf16.mxu0 0
    %2167 = vmatpush2.bf16.msra.mxu0 0
    %2168 = vmatprep.subr.bf16.mxu0 0
    %2169 = vmatpush2.bf16.msra.mxu0 0
    %2170 = vmatprep.mubr.bf16.mxu0 0
    %2171 = vmatmul.mubr.bf16.gmra.mxu0 %v2136
    %v2172 = vpop.f32.mrf.mxu0
    %v2173 = vadd.f32 0.0, %v2172
    %v2174 = vpop.f32.mrf.mxu0
    %v2175 = vadd.f32 0.0, %v2174
    %v2176 = vpop.f32.mrf.mxu0
    %v2177 = vpop.f32.mrf.mxu0
    %2178 = vdwg.mxu0
    %2179 = vmatprep.subr.bf16.mxu0 0
    %2180 = vmatpush1.bf16.msra.mxu0 0
    %2181 = vmatprep.subr.bf16.mxu0 0
    %2182 = vmatpush1.bf16.msra.mxu0 0
    %2183 = vmatprep.subr.bf16.mxu0 0
    %2184 = vmatpush1.bf16.msra.mxu0 0
    %2185 = vmatprep.subr.bf16.mxu0 0
    %2186 = vmatpush1.bf16.msra.mxu0 0
    %2187 = vmatprep.subr.bf16.mxu0 0
    %2188 = vmatpush1.bf16.msra.mxu0 0
    %2189 = vmatprep.subr.bf16.mxu0 0
    %2190 = vmatpush1.bf16.msra.mxu0 0
    %2191 = vmatprep.subr.bf16.mxu0 0
    %2192 = vmatpush1.bf16.msra.mxu0 0
    %2193 = vmatprep.subr.bf16.mxu0 %v2050
    %2194 = vmatpush1.bf16.msra.mxu0 %v2047
    %2195 = vmatprep.subr.bf16.mxu0 0
    %2196 = vmatpush2.bf16.msra.mxu0 0
    %2197 = vmatprep.subr.bf16.mxu0 0
    %2198 = vmatpush2.bf16.msra.mxu0 0
    %2199 = vmatprep.subr.bf16.mxu0 0
    %2200 = vmatpush2.bf16.msra.mxu0 0
    %2201 = vmatprep.subr.bf16.mxu0 0
    %2202 = vmatpush2.bf16.msra.mxu0 0
    %2203 = vmatprep.subr.bf16.mxu0 0
    %2204 = vmatpush2.bf16.msra.mxu0 0
    %2205 = vmatprep.subr.bf16.mxu0 0
    %2206 = vmatpush2.bf16.msra.mxu0 0
    %2207 = vmatprep.subr.bf16.mxu0 0
    %2208 = vmatpush2.bf16.msra.mxu0 0
    %2209 = vmatprep.subr.bf16.mxu0 0
    %2210 = vmatpush2.bf16.msra.mxu0 0
    %2211 = vmatprep.mubr.bf16.mxu0 0
    %2212 = vmatmul.mubr.bf16.gmra.mxu0 %v2136
    %v2213 = vpop.f32.mrf.mxu0
    %v2214 = vadd.f32 0.0, %v2213
    %v2215 = vpop.f32.mrf.mxu0
    %v2216 = vadd.f32 0.0, %v2215
    %v2217 = vpop.f32.mrf.mxu0
    %v2218 = vpop.f32.mrf.mxu0
    %2219 = vdwg.mxu0
    %v2220 = vlaneseq
    %v2221 = vshrl.u32 %v2220, 7
    %v2222 = vsub.s32 0, %v2221
    %v2223 = vrot.slane %v2087, %v2222
    %v2224 = vlaneseq
    %v2225 = vshrl.u32 %v2224, 7
    %v2226 = vsub.s32 0, %v2225
    %v2227 = vrot.slane %v2089, %v2226
    %v2228 = vlaneseq
    %v2229 = vshrl.u32 %v2228, 7
    %v2230 = vsub.s32 0, %v2229
    %v2231 = vrot.slane %v2128, %v2230
    %v2232 = vlaneseq
    %v2233 = vshrl.u32 %v2232, 7
    %v2234 = vsub.s32 0, %v2233
    %v2235 = vrot.slane %v2130, %v2234
    %v2236 = vmul.f32 %v1398, %v2223
    %v2237 = vmul.f32 %v1400, %v2227
    %v2238 = vmul.f32 %v1521, %v2231
    %v2239 = vmul.f32 %v1523, %v2235
    %v2240 = vlaneseq
    %v2241 = vshrl.u32 %v2240, 7
    %v2242 = vsub.s32 0, %v2241
    %v2243 = vrot.slane %v2173, %v2242
    %v2244 = vlaneseq
    %v2245 = vshrl.u32 %v2244, 7
    %v2246 = vsub.s32 0, %v2245
    %v2247 = vrot.slane %v2175, %v2246
    %v2248 = vlaneseq
    %v2249 = vshrl.u32 %v2248, 7
    %v2250 = vsub.s32 0, %v2249
    %v2251 = vrot.slane %v2214, %v2250
    %v2252 = vlaneseq
    %v2253 = vshrl.u32 %v2252, 7
    %v2254 = vsub.s32 0, %v2253
    %v2255 = vrot.slane %v2216, %v2254
    %v2256 = vadd.f32 %v2236, %v2243
    %v2257 = vadd.f32 %v2237, %v2247
    %v2258 = vadd.f32 %v2238, %v2251
    %v2259 = vadd.f32 %v2239, %v2255
    %v2260 = vmax.f32 %v2256, 0.0
    %v2261 = vmax.f32 %v2257, 0.0
    %v2262 = vmax.f32 %v2258, 0.0
    %v2263 = vmax.f32 %v2259, 0.0
    %v2264 = vld [vmem:[#allocation6 + $0x2] sm:$0x1]
    %v2265 = vld [vmem:[#allocation6 + $0x3] sm:$0x1]
    %v2266 = vpack.c.bf16 %v2260, %v2260
    %v2267 = vpack.c.bf16 %v2261, %v2261
    %v2268 = vpack.c.bf16 %v2262, %v2262
    %v2269 = vpack.c.bf16 %v2263, %v2263
    %v2270 = vld [vmem:[%s4] sm:$0xff]
    %v2271 = vld [vmem:[%s4 + $0x8] sm:$0xff]
    %v2272 = vld [vmem:[%s4 + $0x10] sm:$0xff]
    %v2273 = vld [vmem:[%s4 + $0x18] sm:$0xff]
    %v2274 = vld [vmem:[%s4 + $0x20] sm:$0xff]
    %v2275 = vld [vmem:[%s4 + $0x28] sm:$0xff]
    %v2276 = vld [vmem:[%s4 + $0x30] sm:$0xff]
    %v2277 = vld [vmem:[%s4 + $0x38] sm:$0xff]
    %v2278 = vld [vmem:[%s4 + $0x40] sm:$0xff]
    %v2279 = vld [vmem:[%s4 + $0x48] sm:$0xff]
    %v2280 = vld [vmem:[%s4 + $0x50] sm:$0xff]
    %v2281 = vld [vmem:[%s4 + $0x58] sm:$0xff]
    %v2282 = vld [vmem:[%s4 + $0x60] sm:$0xff]
    %v2283 = vld [vmem:[%s4 + $0x68] sm:$0xff]
    %v2284 = vld [vmem:[%s4 + $0x70] sm:$0xff]
    %v2285 = vld [vmem:[%s4 + $0x78] sm:$0xff]
    %v2286 = vld [vmem:[%s4 + $0x80] sm:$0xff]
    %v2287 = vld [vmem:[%s4 + $0x88] sm:$0xff]
    %v2288 = vld [vmem:[%s4 + $0x90] sm:$0xff]
    %v2289 = vld [vmem:[%s4 + $0x98] sm:$0xff]
    %v2290 = vld [vmem:[%s4 + $0xa0] sm:$0xff]
    %v2291 = vld [vmem:[%s4 + $0xa8] sm:$0xff]
    %v2292 = vld [vmem:[%s4 + $0xb0] sm:$0xff]
    %v2293 = vld [vmem:[%s4 + $0xb8] sm:$0xff]
    %v2294 = vld [vmem:[%s4 + $0xc0] sm:$0xff]
    %v2295 = vld [vmem:[%s4 + $0xc8] sm:$0xff]
    %v2296 = vld [vmem:[%s4 + $0xd0] sm:$0xff]
    %v2297 = vld [vmem:[%s4 + $0xd8] sm:$0xff]
    %v2298 = vld [vmem:[%s4 + $0xe0] sm:$0xff]
    %v2299 = vld [vmem:[%s4 + $0xe8] sm:$0xff]
    %v2300 = vld [vmem:[%s4 + $0xf0] sm:$0xff]
    %v2301 = vld [vmem:[%s4 + $0xf8] sm:$0xff]
    %v2302 = vld [vmem:[%s4 + $0x100] sm:$0xff]
    %v2303 = vld [vmem:[%s4 + $0x108] sm:$0xff]
    %v2304 = vld [vmem:[%s4 + $0x110] sm:$0xff]
    %v2305 = vld [vmem:[%s4 + $0x118] sm:$0xff]
    %v2306 = vld [vmem:[%s4 + $0x120] sm:$0xff]
    %v2307 = vld [vmem:[%s4 + $0x128] sm:$0xff]
    %v2308 = vld [vmem:[%s4 + $0x130] sm:$0xff]
    %v2309 = vld [vmem:[%s4 + $0x138] sm:$0xff]
    %v2310 = vld [vmem:[%s4 + $0x140] sm:$0xff]
    %v2311 = vld [vmem:[%s4 + $0x148] sm:$0xff]
    %v2312 = vld [vmem:[%s4 + $0x150] sm:$0xff]
    %v2313 = vld [vmem:[%s4 + $0x158] sm:$0xff]
    %v2314 = vld [vmem:[%s4 + $0x160] sm:$0xff]
    %v2315 = vld [vmem:[%s4 + $0x168] sm:$0xff]
    %v2316 = vld [vmem:[%s4 + $0x170] sm:$0xff]
    %v2317 = vld [vmem:[%s4 + $0x178] sm:$0xff]
    %v2318 = vld [vmem:[%s4 + $0x180] sm:$0xff]
    %v2319 = vld [vmem:[%s4 + $0x188] sm:$0xff]
    %v2320 = vld [vmem:[%s4 + $0x190] sm:$0xff]
    %v2321 = vld [vmem:[%s4 + $0x198] sm:$0xff]
    %v2322 = vld [vmem:[%s4 + $0x1a0] sm:$0xff]
    %v2323 = vld [vmem:[%s4 + $0x1a8] sm:$0xff]
    %v2324 = vld [vmem:[%s4 + $0x1b0] sm:$0xff]
    %v2325 = vld [vmem:[%s4 + $0x1b8] sm:$0xff]
    %v2326 = vld [vmem:[%s4 + $0x1c0] sm:$0xff]
    %v2327 = vld [vmem:[%s4 + $0x1c8] sm:$0xff]
    %v2328 = vld [vmem:[%s4 + $0x1d0] sm:$0xff]
    %v2329 = vld [vmem:[%s4 + $0x1d8] sm:$0xff]
    %v2330 = vld [vmem:[%s4 + $0x1e0] sm:$0xff]
    %v2331 = vld [vmem:[%s4 + $0x1e8] sm:$0xff]
    %v2332 = vld [vmem:[%s4 + $0x1f0] sm:$0xff]
    %v2333 = vld [vmem:[%s4 + $0x1f8] sm:$0xff]
    %v2398 = vunpack.c.l.b16 %v2270
    %v2399 = vunpack.c.h.b16 %v2270
    %v2400 = vunpack.c.l.b16 %v2271
    %v2401 = vunpack.c.h.b16 %v2271
    %v2402 = vunpack.c.l.b16 %v2272
    %v2403 = vunpack.c.h.b16 %v2272
    %v2404 = vunpack.c.l.b16 %v2273
    %v2405 = vunpack.c.h.b16 %v2273
    %v2406 = vunpack.c.l.b16 %v2274
    %v2407 = vunpack.c.h.b16 %v2274
    %v2408 = vunpack.c.l.b16 %v2275
    %v2409 = vunpack.c.h.b16 %v2275
    %v2410 = vunpack.c.l.b16 %v2276
    %v2411 = vunpack.c.h.b16 %v2276
    %v2412 = vunpack.c.l.b16 %v2277
    %v2413 = vunpack.c.h.b16 %v2277
    %v2414 = vunpack.c.l.b16 %v2278
    %v2415 = vunpack.c.h.b16 %v2278
    %v2416 = vunpack.c.l.b16 %v2279
    %v2417 = vunpack.c.h.b16 %v2279
    %v2418 = vunpack.c.l.b16 %v2280
    %v2419 = vunpack.c.h.b16 %v2280
    %v2420 = vunpack.c.l.b16 %v2281
    %v2421 = vunpack.c.h.b16 %v2281
    %v2422 = vunpack.c.l.b16 %v2282
    %v2423 = vunpack.c.h.b16 %v2282
    %v2424 = vunpack.c.l.b16 %v2283
    %v2425 = vunpack.c.h.b16 %v2283
    %v2426 = vunpack.c.l.b16 %v2284
    %v2427 = vunpack.c.h.b16 %v2284
    %v2428 = vunpack.c.l.b16 %v2285
    %v2429 = vunpack.c.h.b16 %v2285
    %v2430 = vunpack.c.l.b16 %v2286
    %v2431 = vunpack.c.h.b16 %v2286
    %v2432 = vunpack.c.l.b16 %v2287
    %v2433 = vunpack.c.h.b16 %v2287
    %v2434 = vunpack.c.l.b16 %v2288
    %v2435 = vunpack.c.h.b16 %v2288
    %v2436 = vunpack.c.l.b16 %v2289
    %v2437 = vunpack.c.h.b16 %v2289
    %v2438 = vunpack.c.l.b16 %v2290
    %v2439 = vunpack.c.h.b16 %v2290
    %v2440 = vunpack.c.l.b16 %v2291
    %v2441 = vunpack.c.h.b16 %v2291
    %v2442 = vunpack.c.l.b16 %v2292
    %v2443 = vunpack.c.h.b16 %v2292
    %v2444 = vunpack.c.l.b16 %v2293
    %v2445 = vunpack.c.h.b16 %v2293
    %v2446 = vunpack.c.l.b16 %v2294
    %v2447 = vunpack.c.h.b16 %v2294
    %v2448 = vunpack.c.l.b16 %v2295
    %v2449 = vunpack.c.h.b16 %v2295
    %v2450 = vunpack.c.l.b16 %v2296
    %v2451 = vunpack.c.h.b16 %v2296
    %v2452 = vunpack.c.l.b16 %v2297
    %v2453 = vunpack.c.h.b16 %v2297
    %v2454 = vunpack.c.l.b16 %v2298
    %v2455 = vunpack.c.h.b16 %v2298
    %v2456 = vunpack.c.l.b16 %v2299
    %v2457 = vunpack.c.h.b16 %v2299
    %v2458 = vunpack.c.l.b16 %v2300
    %v2459 = vunpack.c.h.b16 %v2300
    %v2460 = vunpack.c.l.b16 %v2301
    %v2461 = vunpack.c.h.b16 %v2301
    %v2462 = vunpack.c.l.b16 %v2302
    %v2463 = vunpack.c.h.b16 %v2302
    %v2464 = vunpack.c.l.b16 %v2303
    %v2465 = vunpack.c.h.b16 %v2303
    %v2466 = vunpack.c.l.b16 %v2304
    %v2467 = vunpack.c.h.b16 %v2304
    %v2468 = vunpack.c.l.b16 %v2305
    %v2469 = vunpack.c.h.b16 %v2305
    %v2470 = vunpack.c.l.b16 %v2306
    %v2471 = vunpack.c.h.b16 %v2306
    %v2472 = vunpack.c.l.b16 %v2307
    %v2473 = vunpack.c.h.b16 %v2307
    %v2474 = vunpack.c.l.b16 %v2308
    %v2475 = vunpack.c.h.b16 %v2308
    %v2476 = vunpack.c.l.b16 %v2309
    %v2477 = vunpack.c.h.b16 %v2309
    %v2478 = vunpack.c.l.b16 %v2310
    %v2479 = vunpack.c.h.b16 %v2310
    %v2480 = vunpack.c.l.b16 %v2311
    %v2481 = vunpack.c.h.b16 %v2311
    %v2482 = vunpack.c.l.b16 %v2312
    %v2483 = vunpack.c.h.b16 %v2312
    %v2484 = vunpack.c.l.b16 %v2313
    %v2485 = vunpack.c.h.b16 %v2313
    %v2486 = vunpack.c.l.b16 %v2314
    %v2487 = vunpack.c.h.b16 %v2314
    %v2488 = vunpack.c.l.b16 %v2315
    %v2489 = vunpack.c.h.b16 %v2315
    %v2490 = vunpack.c.l.b16 %v2316
    %v2491 = vunpack.c.h.b16 %v2316
    %v2492 = vunpack.c.l.b16 %v2317
    %v2493 = vunpack.c.h.b16 %v2317
    %v2494 = vunpack.c.l.b16 %v2318
    %v2495 = vunpack.c.h.b16 %v2318
    %v2496 = vunpack.c.l.b16 %v2319
    %v2497 = vunpack.c.h.b16 %v2319
    %v2498 = vunpack.c.l.b16 %v2320
    %v2499 = vunpack.c.h.b16 %v2320
    %v2500 = vunpack.c.l.b16 %v2321
    %v2501 = vunpack.c.h.b16 %v2321
    %v2502 = vunpack.c.l.b16 %v2322
    %v2503 = vunpack.c.h.b16 %v2322
    %v2504 = vunpack.c.l.b16 %v2323
    %v2505 = vunpack.c.h.b16 %v2323
    %v2506 = vunpack.c.l.b16 %v2324
    %v2507 = vunpack.c.h.b16 %v2324
    %v2508 = vunpack.c.l.b16 %v2325
    %v2509 = vunpack.c.h.b16 %v2325
    %v2510 = vunpack.c.l.b16 %v2326
    %v2511 = vunpack.c.h.b16 %v2326
    %v2512 = vunpack.c.l.b16 %v2327
    %v2513 = vunpack.c.h.b16 %v2327
    %v2514 = vunpack.c.l.b16 %v2328
    %v2515 = vunpack.c.h.b16 %v2328
    %v2516 = vunpack.c.l.b16 %v2329
    %v2517 = vunpack.c.h.b16 %v2329
    %v2518 = vunpack.c.l.b16 %v2330
    %v2519 = vunpack.c.h.b16 %v2330
    %v2520 = vunpack.c.l.b16 %v2331
    %v2521 = vunpack.c.h.b16 %v2331
    %v2522 = vunpack.c.l.b16 %v2332
    %v2523 = vunpack.c.h.b16 %v2332
    %v2524 = vunpack.c.l.b16 %v2333
    %v2525 = vunpack.c.h.b16 %v2333
    %v2526 = vpack.c.b16 %v2400, %v2398
    %v2527 = vpack.c.b16 %v2401, %v2399
    %v2528 = vpack.c.b16 %v2404, %v2402
    %v2529 = vpack.c.b16 %v2405, %v2403
    %v2530 = vpack.c.b16 %v2408, %v2406
    %v2531 = vpack.c.b16 %v2409, %v2407
    %v2532 = vpack.c.b16 %v2412, %v2410
    %v2533 = vpack.c.b16 %v2413, %v2411
    %v2534 = vpack.c.b16 %v2416, %v2414
    %v2535 = vpack.c.b16 %v2417, %v2415
    %v2536 = vpack.c.b16 %v2420, %v2418
    %v2537 = vpack.c.b16 %v2421, %v2419
    %v2538 = vpack.c.b16 %v2424, %v2422
    %v2539 = vpack.c.b16 %v2425, %v2423
    %v2540 = vpack.c.b16 %v2428, %v2426
    %v2541 = vpack.c.b16 %v2429, %v2427
    %v2542 = vpack.c.b16 %v2432, %v2430
    %v2543 = vpack.c.b16 %v2433, %v2431
    %v2544 = vpack.c.b16 %v2436, %v2434
    %v2545 = vpack.c.b16 %v2437, %v2435
    %v2546 = vpack.c.b16 %v2440, %v2438
    %v2547 = vpack.c.b16 %v2441, %v2439
    %v2548 = vpack.c.b16 %v2444, %v2442
    %v2549 = vpack.c.b16 %v2445, %v2443
    %v2550 = vpack.c.b16 %v2448, %v2446
    %v2551 = vpack.c.b16 %v2449, %v2447
    %v2552 = vpack.c.b16 %v2452, %v2450
    %v2553 = vpack.c.b16 %v2453, %v2451
    %v2554 = vpack.c.b16 %v2456, %v2454
    %v2555 = vpack.c.b16 %v2457, %v2455
    %v2556 = vpack.c.b16 %v2460, %v2458
    %v2557 = vpack.c.b16 %v2461, %v2459
    %v2558 = vpack.c.b16 %v2464, %v2462
    %v2559 = vpack.c.b16 %v2465, %v2463
    %v2560 = vpack.c.b16 %v2468, %v2466
    %v2561 = vpack.c.b16 %v2469, %v2467
    %v2562 = vpack.c.b16 %v2472, %v2470
    %v2563 = vpack.c.b16 %v2473, %v2471
    %v2564 = vpack.c.b16 %v2476, %v2474
    %v2565 = vpack.c.b16 %v2477, %v2475
    %v2566 = vpack.c.b16 %v2480, %v2478
    %v2567 = vpack.c.b16 %v2481, %v2479
    %v2568 = vpack.c.b16 %v2484, %v2482
    %v2569 = vpack.c.b16 %v2485, %v2483
    %v2570 = vpack.c.b16 %v2488, %v2486
    %v2571 = vpack.c.b16 %v2489, %v2487
    %v2572 = vpack.c.b16 %v2492, %v2490
    %v2573 = vpack.c.b16 %v2493, %v2491
    %v2574 = vpack.c.b16 %v2496, %v2494
    %v2575 = vpack.c.b16 %v2497, %v2495
    %v2576 = vpack.c.b16 %v2500, %v2498
    %v2577 = vpack.c.b16 %v2501, %v2499
    %v2578 = vpack.c.b16 %v2504, %v2502
    %v2579 = vpack.c.b16 %v2505, %v2503
    %v2580 = vpack.c.b16 %v2508, %v2506
    %v2581 = vpack.c.b16 %v2509, %v2507
    %v2582 = vpack.c.b16 %v2512, %v2510
    %v2583 = vpack.c.b16 %v2513, %v2511
    %v2584 = vpack.c.b16 %v2516, %v2514
    %v2585 = vpack.c.b16 %v2517, %v2515
    %v2586 = vpack.c.b16 %v2520, %v2518
    %v2587 = vpack.c.b16 %v2521, %v2519
    %v2588 = vpack.c.b16 %v2524, %v2522
    %v2589 = vpack.c.b16 %v2525, %v2523
    %2654 = vmatprep.subr.bf16.mxu0 %v2541
    %2655 = vmatpush1.bf16.msra.mxu0 %v2540
    %2656 = vmatprep.subr.bf16.mxu0 %v2539
    %2657 = vmatpush1.bf16.msra.mxu0 %v2538
    %2658 = vmatprep.subr.bf16.mxu0 %v2537
    %2659 = vmatpush1.bf16.msra.mxu0 %v2536
    %2660 = vmatprep.subr.bf16.mxu0 %v2535
    %2661 = vmatpush1.bf16.msra.mxu0 %v2534
    %2662 = vmatprep.subr.bf16.mxu0 %v2533
    %2663 = vmatpush1.bf16.msra.mxu0 %v2532
    %2664 = vmatprep.subr.bf16.mxu0 %v2531
    %2665 = vmatpush1.bf16.msra.mxu0 %v2530
    %2666 = vmatprep.subr.bf16.mxu0 %v2529
    %2667 = vmatpush1.bf16.msra.mxu0 %v2528
    %2668 = vmatprep.subr.bf16.mxu0 %v2527
    %2669 = vmatpush1.bf16.msra.mxu0 %v2526
    %2670 = vmatprep.subr.bf16.mxu0 %v2557
    %2671 = vmatpush2.bf16.msra.mxu0 %v2556
    %2672 = vmatprep.subr.bf16.mxu0 %v2555
    %2673 = vmatpush2.bf16.msra.mxu0 %v2554
    %2674 = vmatprep.subr.bf16.mxu0 %v2553
    %2675 = vmatpush2.bf16.msra.mxu0 %v2552
    %2676 = vmatprep.subr.bf16.mxu0 %v2551
    %2677 = vmatpush2.bf16.msra.mxu0 %v2550
    %2678 = vmatprep.subr.bf16.mxu0 %v2549
    %2679 = vmatpush2.bf16.msra.mxu0 %v2548
    %2680 = vmatprep.subr.bf16.mxu0 %v2547
    %2681 = vmatpush2.bf16.msra.mxu0 %v2546
    %2682 = vmatprep.subr.bf16.mxu0 %v2545
    %2683 = vmatpush2.bf16.msra.mxu0 %v2544
    %2684 = vmatprep.subr.bf16.mxu0 %v2543
    %2685 = vmatpush2.bf16.msra.mxu0 %v2542
    %2686 = vmatprep.mubr.bf16.mxu0 %v2267
    %2687 = vmatmul.mubr.bf16.gmra.mxu0 %v2266
    %v2688 = vpop.f32.mrf.mxu0
    %v2689 = vadd.f32 0.0, %v2688
    %v2690 = vpop.f32.mrf.mxu0
    %v2691 = vadd.f32 0.0, %v2690
    %v2692 = vpop.f32.mrf.mxu0
    %v2693 = vpop.f32.mrf.mxu0
    %2694 = vdwg.mxu0
    %2695 = vmatprep.subr.bf16.mxu0 %v2573
    %2696 = vmatpush1.bf16.msra.mxu0 %v2572
    %2697 = vmatprep.subr.bf16.mxu0 %v2571
    %2698 = vmatpush1.bf16.msra.mxu0 %v2570
    %2699 = vmatprep.subr.bf16.mxu0 %v2569
    %2700 = vmatpush1.bf16.msra.mxu0 %v2568
    %2701 = vmatprep.subr.bf16.mxu0 %v2567
    %2702 = vmatpush1.bf16.msra.mxu0 %v2566
    %2703 = vmatprep.subr.bf16.mxu0 %v2565
    %2704 = vmatpush1.bf16.msra.mxu0 %v2564
    %2705 = vmatprep.subr.bf16.mxu0 %v2563
    %2706 = vmatpush1.bf16.msra.mxu0 %v2562
    %2707 = vmatprep.subr.bf16.mxu0 %v2561
    %2708 = vmatpush1.bf16.msra.mxu0 %v2560
    %2709 = vmatprep.subr.bf16.mxu0 %v2559
    %2710 = vmatpush1.bf16.msra.mxu0 %v2558
    %2711 = vmatprep.subr.bf16.mxu0 %v2589
    %2712 = vmatpush2.bf16.msra.mxu0 %v2588
    %2713 = vmatprep.subr.bf16.mxu0 %v2587
    %2714 = vmatpush2.bf16.msra.mxu0 %v2586
    %2715 = vmatprep.subr.bf16.mxu0 %v2585
    %2716 = vmatpush2.bf16.msra.mxu0 %v2584
    %2717 = vmatprep.subr.bf16.mxu0 %v2583
    %2718 = vmatpush2.bf16.msra.mxu0 %v2582
    %2719 = vmatprep.subr.bf16.mxu0 %v2581
    %2720 = vmatpush2.bf16.msra.mxu0 %v2580
    %2721 = vmatprep.subr.bf16.mxu0 %v2579
    %2722 = vmatpush2.bf16.msra.mxu0 %v2578
    %2723 = vmatprep.subr.bf16.mxu0 %v2577
    %2724 = vmatpush2.bf16.msra.mxu0 %v2576
    %2725 = vmatprep.subr.bf16.mxu0 %v2575
    %2726 = vmatpush2.bf16.msra.mxu0 %v2574
    %2727 = vmatprep.mubr.bf16.mxu0 %v2269
    %2728 = vmatmul.mubr.bf16.gmra.mxu0 %v2268
    %v2729 = vpop.f32.mrf.mxu0
    %v2730 = vadd.f32 %v2689, %v2729
    %v2731 = vpop.f32.mrf.mxu0
    %v2732 = vadd.f32 %v2691, %v2731
    %v2733 = vpop.f32.mrf.mxu0
    %v2734 = vpop.f32.mrf.mxu0
    %2735 = vdwg.mxu0
    %v2736 = vsel %vm1527, %v2730, 0.0
    %v2737 = vrot.slane %v2736, 4
    %v2738 = vadd.f32 %v2736, %v2737
    %v2739 = vrot.slane %v2738, 2
    %v2740 = vadd.f32 %v2738, %v2739
    %v2741 = vrot.slane %v2740, 1
    %v2742 = vadd.f32 %v2740, %v2741
    %v2743 = vsel %vm1527, %v2732, 0.0
    %v2744 = vrot.slane %v2743, 4
    %v2745 = vadd.f32 %v2743, %v2744
    %v2746 = vrot.slane %v2745, 2
    %v2747 = vadd.f32 %v2745, %v2746
    %v2748 = vrot.slane %v2747, 1
    %v2749 = vadd.f32 %v2747, %v2748
    %v2750 = vmul.f32 %v2730, %v2730
    %v2751 = vmul.f32 %v2732, %v2732
    %v2752 = vsel %vm1527, %v2750, 0.0
    %v2753 = vrot.slane %v2752, 4
    %v2754 = vadd.f32 %v2752, %v2753
    %v2755 = vrot.slane %v2754, 2
    %v2756 = vadd.f32 %v2754, %v2755
    %v2757 = vrot.slane %v2756, 1
    %v2758 = vadd.f32 %v2756, %v2757
    %v2759 = vsel %vm1527, %v2751, 0.0
    %v2760 = vrot.slane %v2759, 4
    %v2761 = vadd.f32 %v2759, %v2760
    %v2762 = vrot.slane %v2761, 2
    %v2763 = vadd.f32 %v2761, %v2762
    %v2764 = vrot.slane %v2763, 1
    %v2765 = vadd.f32 %v2763, %v2764
    %v2766 = vpack.c.bf16 %v2742, %v2742
    %v2767 = vpack.c.bf16 %v2749, %v2749
    %v2768 = vld [vmem:[%s5] sm:$0xf]
    %v2769 = vld [vmem:[%s5 + $0x4] sm:$0xf]
    %v2770 = vld [vmem:[%s5 + $0x8] sm:$0xf]
    %v2771 = vld [vmem:[%s5 + $0xc] sm:$0xf]
    %v2772 = vld [vmem:[%s5 + $0x10] sm:$0xf]
    %v2773 = vld [vmem:[%s5 + $0x14] sm:$0xf]
    %v2774 = vld [vmem:[%s5 + $0x18] sm:$0xf]
    %v2775 = vld [vmem:[%s5 + $0x1c] sm:$0xf]
    %v2776 = vld [vmem:[%s5 + $0x20] sm:$0xf]
    %v2777 = vld [vmem:[%s5 + $0x24] sm:$0xf]
    %v2778 = vld [vmem:[%s5 + $0x28] sm:$0xf]
    %v2779 = vld [vmem:[%s5 + $0x2c] sm:$0xf]
    %v2780 = vld [vmem:[%s5 + $0x30] sm:$0xf]
    %v2781 = vld [vmem:[%s5 + $0x34] sm:$0xf]
    %v2782 = vld [vmem:[%s5 + $0x38] sm:$0xf]
    %v2783 = vld [vmem:[%s5 + $0x3c] sm:$0xf]
    %v2784 = vld [vmem:[%s5 + $0x40] sm:$0xf]
    %v2785 = vld [vmem:[%s5 + $0x44] sm:$0xf]
    %v2786 = vld [vmem:[%s5 + $0x48] sm:$0xf]
    %v2787 = vld [vmem:[%s5 + $0x4c] sm:$0xf]
    %v2788 = vld [vmem:[%s5 + $0x50] sm:$0xf]
    %v2789 = vld [vmem:[%s5 + $0x54] sm:$0xf]
    %v2790 = vld [vmem:[%s5 + $0x58] sm:$0xf]
    %v2791 = vld [vmem:[%s5 + $0x5c] sm:$0xf]
    %v2792 = vld [vmem:[%s5 + $0x60] sm:$0xf]
    %v2793 = vld [vmem:[%s5 + $0x64] sm:$0xf]
    %v2794 = vld [vmem:[%s5 + $0x68] sm:$0xf]
    %v2795 = vld [vmem:[%s5 + $0x6c] sm:$0xf]
    %v2796 = vld [vmem:[%s5 + $0x70] sm:$0xf]
    %v2797 = vld [vmem:[%s5 + $0x74] sm:$0xf]
    %v2798 = vld [vmem:[%s5 + $0x78] sm:$0xf]
    %v2799 = vld [vmem:[%s5 + $0x7c] sm:$0xf]
    %v2832 = vunpack.c.l.b16 %v2768
    %v2833 = vunpack.c.l.b16 %v2769
    %v2834 = vunpack.c.l.b16 %v2770
    %v2835 = vunpack.c.l.b16 %v2771
    %v2836 = vunpack.c.l.b16 %v2772
    %v2837 = vunpack.c.l.b16 %v2773
    %v2838 = vunpack.c.l.b16 %v2774
    %v2839 = vunpack.c.l.b16 %v2775
    %v2840 = vunpack.c.l.b16 %v2776
    %v2841 = vunpack.c.l.b16 %v2777
    %v2842 = vunpack.c.l.b16 %v2778
    %v2843 = vunpack.c.l.b16 %v2779
    %v2844 = vunpack.c.l.b16 %v2780
    %v2845 = vunpack.c.l.b16 %v2781
    %v2846 = vunpack.c.l.b16 %v2782
    %v2847 = vunpack.c.l.b16 %v2783
    %v2848 = vunpack.c.l.b16 %v2784
    %v2849 = vunpack.c.l.b16 %v2785
    %v2850 = vunpack.c.l.b16 %v2786
    %v2851 = vunpack.c.l.b16 %v2787
    %v2852 = vunpack.c.l.b16 %v2788
    %v2853 = vunpack.c.l.b16 %v2789
    %v2854 = vunpack.c.l.b16 %v2790
    %v2855 = vunpack.c.l.b16 %v2791
    %v2856 = vunpack.c.l.b16 %v2792
    %v2857 = vunpack.c.l.b16 %v2793
    %v2858 = vunpack.c.l.b16 %v2794
    %v2859 = vunpack.c.l.b16 %v2795
    %v2860 = vunpack.c.l.b16 %v2796
    %v2861 = vunpack.c.l.b16 %v2797
    %v2862 = vunpack.c.l.b16 %v2798
    %v2863 = vunpack.c.l.b16 %v2799
    %v2864 = vpack.c.b16 %v2833, %v2832
    %v2865 = vpack.c.b16 %v2835, %v2834
    %v2866 = vpack.c.b16 %v2837, %v2836
    %v2867 = vpack.c.b16 %v2839, %v2838
    %v2868 = vpack.c.b16 %v2841, %v2840
    %v2869 = vpack.c.b16 %v2843, %v2842
    %v2870 = vpack.c.b16 %v2845, %v2844
    %v2871 = vpack.c.b16 %v2847, %v2846
    %v2872 = vpack.c.b16 %v2849, %v2848
    %v2873 = vpack.c.b16 %v2851, %v2850
    %v2874 = vpack.c.b16 %v2853, %v2852
    %v2875 = vpack.c.b16 %v2855, %v2854
    %v2876 = vpack.c.b16 %v2857, %v2856
    %v2877 = vpack.c.b16 %v2859, %v2858
    %v2878 = vpack.c.b16 %v2861, %v2860
    %v2879 = vpack.c.b16 %v2863, %v2862
    %2896 = vmatprep.subr.bf16.mxu0 0
    %2897 = vmatpush1.bf16.msra.mxu0 %v2871
    %2898 = vmatprep.subr.bf16.mxu0 0
    %2899 = vmatpush1.bf16.msra.mxu0 %v2870
    %2900 = vmatprep.subr.bf16.mxu0 0
    %2901 = vmatpush1.bf16.msra.mxu0 %v2869
    %2902 = vmatprep.subr.bf16.mxu0 0
    %2903 = vmatpush1.bf16.msra.mxu0 %v2868
    %2904 = vmatprep.subr.bf16.mxu0 0
    %2905 = vmatpush1.bf16.msra.mxu0 %v2867
    %2906 = vmatprep.subr.bf16.mxu0 0
    %2907 = vmatpush1.bf16.msra.mxu0 %v2866
    %2908 = vmatprep.subr.bf16.mxu0 0
    %2909 = vmatpush1.bf16.msra.mxu0 %v2865
    %2910 = vmatprep.subr.bf16.mxu0 0
    %2911 = vmatpush1.bf16.msra.mxu0 %v2864
    %2912 = vmatprep.subr.bf16.mxu0 0
    %2913 = vmatpush2.bf16.msra.mxu0 %v2879
    %2914 = vmatprep.subr.bf16.mxu0 0
    %2915 = vmatpush2.bf16.msra.mxu0 %v2878
    %2916 = vmatprep.subr.bf16.mxu0 0
    %2917 = vmatpush2.bf16.msra.mxu0 %v2877
    %2918 = vmatprep.subr.bf16.mxu0 0
    %2919 = vmatpush2.bf16.msra.mxu0 %v2876
    %2920 = vmatprep.subr.bf16.mxu0 0
    %2921 = vmatpush2.bf16.msra.mxu0 %v2875
    %2922 = vmatprep.subr.bf16.mxu0 0
    %2923 = vmatpush2.bf16.msra.mxu0 %v2874
    %2924 = vmatprep.subr.bf16.mxu0 0
    %2925 = vmatpush2.bf16.msra.mxu0 %v2873
    %2926 = vmatprep.subr.bf16.mxu0 0
    %2927 = vmatpush2.bf16.msra.mxu0 %v2872
    %2928 = vmatprep.mubr.bf16.mxu0 %v2767
    %2929 = vmatmul.mubr.bf16.gmra.mxu0 %v2766
    %v2930 = vpop.f32.mrf.mxu0
    %v2931 = vadd.f32 0.0, %v2930
    %v2932 = vpop.f32.mrf.mxu0
    %v2933 = vpop.f32.mrf.mxu0
    %v2934 = vpop.f32.mrf.mxu0
    %2935 = vdwg.mxu0
    %v2936 = vmul.f32 %v2931, 0.03125
    %v2937 = vpack.c.bf16 %v2758, %v2758
    %v2938 = vpack.c.bf16 %v2765, %v2765
    %2939 = vmatprep.subr.bf16.mxu0 0
    %2940 = vmatpush1.bf16.msra.mxu0 %v2871
    %2941 = vmatprep.subr.bf16.mxu0 0
    %2942 = vmatpush1.bf16.msra.mxu0 %v2870
    %2943 = vmatprep.subr.bf16.mxu0 0
    %2944 = vmatpush1.bf16.msra.mxu0 %v2869
    %2945 = vmatprep.subr.bf16.mxu0 0
    %2946 = vmatpush1.bf16.msra.mxu0 %v2868
    %2947 = vmatprep.subr.bf16.mxu0 0
    %2948 = vmatpush1.bf16.msra.mxu0 %v2867
    %2949 = vmatprep.subr.bf16.mxu0 0
    %2950 = vmatpush1.bf16.msra.mxu0 %v2866
    %2951 = vmatprep.subr.bf16.mxu0 0
    %2952 = vmatpush1.bf16.msra.mxu0 %v2865
    %2953 = vmatprep.subr.bf16.mxu0 0
    %2954 = vmatpush1.bf16.msra.mxu0 %v2864
    %2955 = vmatprep.subr.bf16.mxu0 0
    %2956 = vmatpush2.bf16.msra.mxu0 %v2879
    %2957 = vmatprep.subr.bf16.mxu0 0
    %2958 = vmatpush2.bf16.msra.mxu0 %v2878
    %2959 = vmatprep.subr.bf16.mxu0 0
    %2960 = vmatpush2.bf16.msra.mxu0 %v2877
    %2961 = vmatprep.subr.bf16.mxu0 0
    %2962 = vmatpush2.bf16.msra.mxu0 %v2876
    %2963 = vmatprep.subr.bf16.mxu0 0
    %2964 = vmatpush2.bf16.msra.mxu0 %v2875
    %2965 = vmatprep.subr.bf16.mxu0 0
    %2966 = vmatpush2.bf16.msra.mxu0 %v2874
    %2967 = vmatprep.subr.bf16.mxu0 0
    %2968 = vmatpush2.bf16.msra.mxu0 %v2873
    %2969 = vmatprep.subr.bf16.mxu0 0
    %2970 = vmatpush2.bf16.msra.mxu0 %v2872
    %2971 = vmatprep.mubr.bf16.mxu0 %v2938
    %2972 = vmatmul.mubr.bf16.gmra.mxu0 %v2937
    %v2973 = vpop.f32.mrf.mxu0
    %v2974 = vadd.f32 0.0, %v2973
    %v2975 = vpop.f32.mrf.mxu0
    %v2976 = vpop.f32.mrf.mxu0
    %v2977 = vpop.f32.mrf.mxu0
    %2978 = vdwg.mxu0
    %v2979 = vmul.f32 %v2974, 0.03125
    %v2980 = vmul.f32 %v2936, %v2936
    %v2981 = vsub.f32 %v2979, %v2980
    %v2982 = vmax.f32 %v2981, 0.0
    %v2983 = vadd.f32 %v2982, 1e-05
    %v2984 = vrsqrt.pop %v2983
    %v2985 = vmul.f32 %v2264, %v2984
    %v2986 = vmul.f32 %v2936, %v2985
    %v2987 = vsub.f32 %v2265, %v2986
    %v2988 = vpack.c.bf16 %v2985, %v2985
    %v2989 = vld [vmem:[%s6] sm:$0xff]
    %v2990 = vld [vmem:[%s6 + $0x8] sm:$0xff]
    %v2993 = vunpack.c.l.b16 %v2989
    %v2994 = vunpack.c.h.b16 %v2989
    %v2995 = vunpack.c.l.b16 %v2990
    %v2996 = vunpack.c.h.b16 %v2990
    %v2997 = vpack.c.b16 %v2995, %v2993
    %v2998 = vpack.c.b16 %v2996, %v2994
    %vm3001 = vcmask 130048
    %v3003 = vsel %vm3001, %v2988, 0
    %3005 = vmatprep.subr.bf16.mxu0 0
    %3006 = vmatpush1.bf16.msra.mxu0 0
    %3007 = vmatprep.subr.bf16.mxu0 0
    %3008 = vmatpush1.bf16.msra.mxu0 0
    %3009 = vmatprep.subr.bf16.mxu0 0
    %3010 = vmatpush1.bf16.msra.mxu0 0
    %3011 = vmatprep.subr.bf16.mxu0 0
    %3012 = vmatpush1.bf16.msra.mxu0 0
    %3013 = vmatprep.subr.bf16.mxu0 0
    %3014 = vmatpush1.bf16.msra.mxu0 0
    %3015 = vmatprep.subr.bf16.mxu0 0
    %3016 = vmatpush1.bf16.msra.mxu0 0
    %3017 = vmatprep.subr.bf16.mxu0 0
    %3018 = vmatpush1.bf16.msra.mxu0 0
    %3019 = vmatprep.subr.bf16.mxu0 %v2998
    %3020 = vmatpush1.bf16.msra.mxu0 %v2997
    %3021 = vmatprep.subr.bf16.mxu0 0
    %3022 = vmatpush2.bf16.msra.mxu0 0
    %3023 = vmatprep.subr.bf16.mxu0 0
    %3024 = vmatpush2.bf16.msra.mxu0 0
    %3025 = vmatprep.subr.bf16.mxu0 0
    %3026 = vmatpush2.bf16.msra.mxu0 0
    %3027 = vmatprep.subr.bf16.mxu0 0
    %3028 = vmatpush2.bf16.msra.mxu0 0
    %3029 = vmatprep.subr.bf16.mxu0 0
    %3030 = vmatpush2.bf16.msra.mxu0 0
    %3031 = vmatprep.subr.bf16.mxu0 0
    %3032 = vmatpush2.bf16.msra.mxu0 0
    %3033 = vmatprep.subr.bf16.mxu0 0
    %3034 = vmatpush2.bf16.msra.mxu0 0
    %3035 = vmatprep.subr.bf16.mxu0 0
    %3036 = vmatpush2.bf16.msra.mxu0 0
    %3037 = vmatprep.mubr.bf16.mxu0 0
    %3038 = vmatmul.mubr.bf16.gmra.mxu0 %v3003
    %v3039 = vpop.f32.mrf.mxu0
    %v3040 = vadd.f32 0.0, %v3039
    %v3041 = vpop.f32.mrf.mxu0
    %v3042 = vadd.f32 0.0, %v3041
    %v3043 = vpop.f32.mrf.mxu0
    %v3044 = vpop.f32.mrf.mxu0
    %3045 = vdwg.mxu0
    %v3046 = vpack.c.bf16 %v2987, %v2987
    %v3048 = vsel %vm3001, %v3046, 0
    %3050 = vmatprep.subr.bf16.mxu0 0
    %3051 = vmatpush1.bf16.msra.mxu0 0
    %3052 = vmatprep.subr.bf16.mxu0 0
    %3053 = vmatpush1.bf16.msra.mxu0 0
    %3054 = vmatprep.subr.bf16.mxu0 0
    %3055 = vmatpush1.bf16.msra.mxu0 0
    %3056 = vmatprep.subr.bf16.mxu0 0
    %3057 = vmatpush1.bf16.msra.mxu0 0
    %3058 = vmatprep.subr.bf16.mxu0 0
    %3059 = vmatpush1.bf16.msra.mxu0 0
    %3060 = vmatprep.subr.bf16.mxu0 0
    %3061 = vmatpush1.bf16.msra.mxu0 0
    %3062 = vmatprep.subr.bf16.mxu0 0
    %3063 = vmatpush1.bf16.msra.mxu0 0
    %3064 = vmatprep.subr.bf16.mxu0 %v2998
    %3065 = vmatpush1.bf16.msra.mxu0 %v2997
    %3066 = vmatprep.subr.bf16.mxu0 0
    %3067 = vmatpush2.bf16.msra.mxu0 0
    %3068 = vmatprep.subr.bf16.mxu0 0
    %3069 = vmatpush2.bf16.msra.mxu0 0
    %3070 = vmatprep.subr.bf16.mxu0 0
    %3071 = vmatpush2.bf16.msra.mxu0 0
    %3072 = vmatprep.subr.bf16.mxu0 0
    %3073 = vmatpush2.bf16.msra.mxu0 0
    %3074 = vmatprep.subr.bf16.mxu0 0
    %3075 = vmatpush2.bf16.msra.mxu0 0
    %3076 = vmatprep.subr.bf16.mxu0 0
    %3077 = vmatpush2.bf16.msra.mxu0 0
    %3078 = vmatprep.subr.bf16.mxu0 0
    %3079 = vmatpush2.bf16.msra.mxu0 0
    %3080 = vmatprep.subr.bf16.mxu0 0
    %3081 = vmatpush2.bf16.msra.mxu0 0
    %3082 = vmatprep.mubr.bf16.mxu0 0
    %3083 = vmatmul.mubr.bf16.gmra.mxu0 %v3048
    %v3084 = vpop.f32.mrf.mxu0
    %v3085 = vadd.f32 0.0, %v3084
    %v3086 = vpop.f32.mrf.mxu0
    %v3087 = vadd.f32 0.0, %v3086
    %v3088 = vpop.f32.mrf.mxu0
    %v3089 = vpop.f32.mrf.mxu0
    %3090 = vdwg.mxu0
    %v3091 = vlaneseq
    %v3092 = vshrl.u32 %v3091, 7
    %v3093 = vsub.s32 0, %v3092
    %v3094 = vrot.slane %v3040, %v3093
    %v3095 = vlaneseq
    %v3096 = vshrl.u32 %v3095, 7
    %v3097 = vsub.s32 0, %v3096
    %v3098 = vrot.slane %v3042, %v3097
    %v3099 = vmul.f32 %v2730, %v3094
    %v3100 = vmul.f32 %v2732, %v3098
    %v3101 = vlaneseq
    %v3102 = vshrl.u32 %v3101, 7
    %v3103 = vsub.s32 0, %v3102
    %v3104 = vrot.slane %v3085, %v3103
    %v3105 = vlaneseq
    %v3106 = vshrl.u32 %v3105, 7
    %v3107 = vsub.s32 0, %v3106
    %v3108 = vrot.slane %v3087, %v3107
    %v3109 = vadd.f32 %v3099, %v3104
    %v3110 = vadd.f32 %v3100, %v3108
    %v3111 = vmax.f32 %v3109, 0.0
    %v3112 = vmax.f32 %v3110, 0.0
    %v3113 = vld [vmem:[#allocation6 + $0x4] sm:$0x1]
    %v3114 = vld [vmem:[#allocation6 + $0x5] sm:$0x1]
    %v3115 = vpack.c.bf16 %v3111, %v3111
    %v3116 = vpack.c.bf16 %v3112, %v3112
    %v3117 = vld [vmem:[%s7] sm:$0xf]
    %v3118 = vld [vmem:[%s7 + $0x4] sm:$0xf]
    %v3119 = vld [vmem:[%s7 + $0x8] sm:$0xf]
    %v3120 = vld [vmem:[%s7 + $0xc] sm:$0xf]
    %v3121 = vld [vmem:[%s7 + $0x10] sm:$0xf]
    %v3122 = vld [vmem:[%s7 + $0x14] sm:$0xf]
    %v3123 = vld [vmem:[%s7 + $0x18] sm:$0xf]
    %v3124 = vld [vmem:[%s7 + $0x1c] sm:$0xf]
    %v3125 = vld [vmem:[%s7 + $0x20] sm:$0xf]
    %v3126 = vld [vmem:[%s7 + $0x24] sm:$0xf]
    %v3127 = vld [vmem:[%s7 + $0x28] sm:$0xf]
    %v3128 = vld [vmem:[%s7 + $0x2c] sm:$0xf]
    %v3129 = vld [vmem:[%s7 + $0x30] sm:$0xf]
    %v3130 = vld [vmem:[%s7 + $0x34] sm:$0xf]
    %v3131 = vld [vmem:[%s7 + $0x38] sm:$0xf]
    %v3132 = vld [vmem:[%s7 + $0x3c] sm:$0xf]
    %v3133 = vld [vmem:[%s7 + $0x40] sm:$0xf]
    %v3134 = vld [vmem:[%s7 + $0x44] sm:$0xf]
    %v3135 = vld [vmem:[%s7 + $0x48] sm:$0xf]
    %v3136 = vld [vmem:[%s7 + $0x4c] sm:$0xf]
    %v3137 = vld [vmem:[%s7 + $0x50] sm:$0xf]
    %v3138 = vld [vmem:[%s7 + $0x54] sm:$0xf]
    %v3139 = vld [vmem:[%s7 + $0x58] sm:$0xf]
    %v3140 = vld [vmem:[%s7 + $0x5c] sm:$0xf]
    %v3141 = vld [vmem:[%s7 + $0x60] sm:$0xf]
    %v3142 = vld [vmem:[%s7 + $0x64] sm:$0xf]
    %v3143 = vld [vmem:[%s7 + $0x68] sm:$0xf]
    %v3144 = vld [vmem:[%s7 + $0x6c] sm:$0xf]
    %v3145 = vld [vmem:[%s7 + $0x70] sm:$0xf]
    %v3146 = vld [vmem:[%s7 + $0x74] sm:$0xf]
    %v3147 = vld [vmem:[%s7 + $0x78] sm:$0xf]
    %v3148 = vld [vmem:[%s7 + $0x7c] sm:$0xf]
    %v3181 = vunpack.c.l.b16 %v3117
    %v3182 = vunpack.c.l.b16 %v3118
    %v3183 = vunpack.c.l.b16 %v3119
    %v3184 = vunpack.c.l.b16 %v3120
    %v3185 = vunpack.c.l.b16 %v3121
    %v3186 = vunpack.c.l.b16 %v3122
    %v3187 = vunpack.c.l.b16 %v3123
    %v3188 = vunpack.c.l.b16 %v3124
    %v3189 = vunpack.c.l.b16 %v3125
    %v3190 = vunpack.c.l.b16 %v3126
    %v3191 = vunpack.c.l.b16 %v3127
    %v3192 = vunpack.c.l.b16 %v3128
    %v3193 = vunpack.c.l.b16 %v3129
    %v3194 = vunpack.c.l.b16 %v3130
    %v3195 = vunpack.c.l.b16 %v3131
    %v3196 = vunpack.c.l.b16 %v3132
    %v3197 = vunpack.c.l.b16 %v3133
    %v3198 = vunpack.c.l.b16 %v3134
    %v3199 = vunpack.c.l.b16 %v3135
    %v3200 = vunpack.c.l.b16 %v3136
    %v3201 = vunpack.c.l.b16 %v3137
    %v3202 = vunpack.c.l.b16 %v3138
    %v3203 = vunpack.c.l.b16 %v3139
    %v3204 = vunpack.c.l.b16 %v3140
    %v3205 = vunpack.c.l.b16 %v3141
    %v3206 = vunpack.c.l.b16 %v3142
    %v3207 = vunpack.c.l.b16 %v3143
    %v3208 = vunpack.c.l.b16 %v3144
    %v3209 = vunpack.c.l.b16 %v3145
    %v3210 = vunpack.c.l.b16 %v3146
    %v3211 = vunpack.c.l.b16 %v3147
    %v3212 = vunpack.c.l.b16 %v3148
    %v3213 = vpack.c.b16 %v3182, %v3181
    %v3214 = vpack.c.b16 %v3184, %v3183
    %v3215 = vpack.c.b16 %v3186, %v3185
    %v3216 = vpack.c.b16 %v3188, %v3187
    %v3217 = vpack.c.b16 %v3190, %v3189
    %v3218 = vpack.c.b16 %v3192, %v3191
    %v3219 = vpack.c.b16 %v3194, %v3193
    %v3220 = vpack.c.b16 %v3196, %v3195
    %v3221 = vpack.c.b16 %v3198, %v3197
    %v3222 = vpack.c.b16 %v3200, %v3199
    %v3223 = vpack.c.b16 %v3202, %v3201
    %v3224 = vpack.c.b16 %v3204, %v3203
    %v3225 = vpack.c.b16 %v3206, %v3205
    %v3226 = vpack.c.b16 %v3208, %v3207
    %v3227 = vpack.c.b16 %v3210, %v3209
    %v3228 = vpack.c.b16 %v3212, %v3211
    %3245 = vmatprep.subr.bf16.mxu0 0
    %3246 = vmatpush1.bf16.msra.mxu0 %v3220
    %3247 = vmatprep.subr.bf16.mxu0 0
    %3248 = vmatpush1.bf16.msra.mxu0 %v3219
    %3249 = vmatprep.subr.bf16.mxu0 0
    %3250 = vmatpush1.bf16.msra.mxu0 %v3218
    %3251 = vmatprep.subr.bf16.mxu0 0
    %3252 = vmatpush1.bf16.msra.mxu0 %v3217
    %3253 = vmatprep.subr.bf16.mxu0 0
    %3254 = vmatpush1.bf16.msra.mxu0 %v3216
    %3255 = vmatprep.subr.bf16.mxu0 0
    %3256 = vmatpush1.bf16.msra.mxu0 %v3215
    %3257 = vmatprep.subr.bf16.mxu0 0
    %3258 = vmatpush1.bf16.msra.mxu0 %v3214
    %3259 = vmatprep.subr.bf16.mxu0 0
    %3260 = vmatpush1.bf16.msra.mxu0 %v3213
    %3261 = vmatprep.subr.bf16.mxu0 0
    %3262 = vmatpush2.bf16.msra.mxu0 %v3228
    %3263 = vmatprep.subr.bf16.mxu0 0
    %3264 = vmatpush2.bf16.msra.mxu0 %v3227
    %3265 = vmatprep.subr.bf16.mxu0 0
    %3266 = vmatpush2.bf16.msra.mxu0 %v3226
    %3267 = vmatprep.subr.bf16.mxu0 0
    %3268 = vmatpush2.bf16.msra.mxu0 %v3225
    %3269 = vmatprep.subr.bf16.mxu0 0
    %3270 = vmatpush2.bf16.msra.mxu0 %v3224
    %3271 = vmatprep.subr.bf16.mxu0 0
    %3272 = vmatpush2.bf16.msra.mxu0 %v3223
    %3273 = vmatprep.subr.bf16.mxu0 0
    %3274 = vmatpush2.bf16.msra.mxu0 %v3222
    %3275 = vmatprep.subr.bf16.mxu0 0
    %3276 = vmatpush2.bf16.msra.mxu0 %v3221
    %3277 = vmatprep.mubr.bf16.mxu0 %v3116
    %3278 = vmatmul.mubr.bf16.gmra.mxu0 %v3115
    %v3279 = vpop.f32.mrf.mxu0
    %v3280 = vadd.f32 0.0, %v3279
    %v3281 = vpop.f32.mrf.mxu0
    %v3282 = vpop.f32.mrf.mxu0
    %v3283 = vpop.f32.mrf.mxu0
    %3284 = vdwg.mxu0
    %v3285 = vsel %vm1527, %v3280, 0.0
    %v3286 = vrot.slane %v3285, 4
    %v3287 = vadd.f32 %v3285, %v3286
    %v3288 = vrot.slane %v3287, 2
    %v3289 = vadd.f32 %v3287, %v3288
    %v3290 = vrot.slane %v3289, 1
    %v3291 = vadd.f32 %v3289, %v3290
    %v3292 = vmul.f32 %v3280, %v3280
    %v3293 = vsel %vm1527, %v3292, 0.0
    %v3294 = vrot.slane %v3293, 4
    %v3295 = vadd.f32 %v3293, %v3294
    %v3296 = vrot.slane %v3295, 2
    %v3297 = vadd.f32 %v3295, %v3296
    %v3298 = vrot.slane %v3297, 1
    %v3299 = vadd.f32 %v3297, %v3298
    %v3300 = vpack.c.bf16 %v3291, %v3291
    %v3301 = vld [vmem:[%s8] sm:$0xf]
    %v3302 = vld [vmem:[%s8 + $0x4] sm:$0xf]
    %v3303 = vld [vmem:[%s8 + $0x8] sm:$0xf]
    %v3304 = vld [vmem:[%s8 + $0xc] sm:$0xf]
    %v3305 = vld [vmem:[%s8 + $0x10] sm:$0xf]
    %v3306 = vld [vmem:[%s8 + $0x14] sm:$0xf]
    %v3307 = vld [vmem:[%s8 + $0x18] sm:$0xf]
    %v3308 = vld [vmem:[%s8 + $0x1c] sm:$0xf]
    %v3309 = vld [vmem:[%s8 + $0x20] sm:$0xf]
    %v3310 = vld [vmem:[%s8 + $0x24] sm:$0xf]
    %v3311 = vld [vmem:[%s8 + $0x28] sm:$0xf]
    %v3312 = vld [vmem:[%s8 + $0x2c] sm:$0xf]
    %v3313 = vld [vmem:[%s8 + $0x30] sm:$0xf]
    %v3314 = vld [vmem:[%s8 + $0x34] sm:$0xf]
    %v3315 = vld [vmem:[%s8 + $0x38] sm:$0xf]
    %v3316 = vld [vmem:[%s8 + $0x3c] sm:$0xf]
    %v3333 = vunpack.c.l.b16 %v3301
    %v3334 = vunpack.c.l.b16 %v3302
    %v3335 = vunpack.c.l.b16 %v3303
    %v3336 = vunpack.c.l.b16 %v3304
    %v3337 = vunpack.c.l.b16 %v3305
    %v3338 = vunpack.c.l.b16 %v3306
    %v3339 = vunpack.c.l.b16 %v3307
    %v3340 = vunpack.c.l.b16 %v3308
    %v3341 = vunpack.c.l.b16 %v3309
    %v3342 = vunpack.c.l.b16 %v3310
    %v3343 = vunpack.c.l.b16 %v3311
    %v3344 = vunpack.c.l.b16 %v3312
    %v3345 = vunpack.c.l.b16 %v3313
    %v3346 = vunpack.c.l.b16 %v3314
    %v3347 = vunpack.c.l.b16 %v3315
    %v3348 = vunpack.c.l.b16 %v3316
    %v3349 = vpack.c.b16 %v3334, %v3333
    %v3350 = vpack.c.b16 %v3336, %v3335
    %v3351 = vpack.c.b16 %v3338, %v3337
    %v3352 = vpack.c.b16 %v3340, %v3339
    %v3353 = vpack.c.b16 %v3342, %v3341
    %v3354 = vpack.c.b16 %v3344, %v3343
    %v3355 = vpack.c.b16 %v3346, %v3345
    %v3356 = vpack.c.b16 %v3348, %v3347
    %3365 = vmatprep.subr.bf16.mxu0 0
    %3366 = vmatpush1.bf16.msra.mxu0 %v3356
    %3367 = vmatprep.subr.bf16.mxu0 0
    %3368 = vmatpush1.bf16.msra.mxu0 %v3355
    %3369 = vmatprep.subr.bf16.mxu0 0
    %3370 = vmatpush1.bf16.msra.mxu0 %v3354
    %3371 = vmatprep.subr.bf16.mxu0 0
    %3372 = vmatpush1.bf16.msra.mxu0 %v3353
    %3373 = vmatprep.subr.bf16.mxu0 0
    %3374 = vmatpush1.bf16.msra.mxu0 %v3352
    %3375 = vmatprep.subr.bf16.mxu0 0
    %3376 = vmatpush1.bf16.msra.mxu0 %v3351
    %3377 = vmatprep.subr.bf16.mxu0 0
    %3378 = vmatpush1.bf16.msra.mxu0 %v3350
    %3379 = vmatprep.subr.bf16.mxu0 0
    %3380 = vmatpush1.bf16.msra.mxu0 %v3349
    %3381 = vmatprep.subr.bf16.mxu0 0
    %3382 = vmatpush2.bf16.msra.mxu0 0
    %3383 = vmatprep.subr.bf16.mxu0 0
    %3384 = vmatpush2.bf16.msra.mxu0 0
    %3385 = vmatprep.subr.bf16.mxu0 0
    %3386 = vmatpush2.bf16.msra.mxu0 0
    %3387 = vmatprep.subr.bf16.mxu0 0
    %3388 = vmatpush2.bf16.msra.mxu0 0
    %3389 = vmatprep.subr.bf16.mxu0 0
    %3390 = vmatpush2.bf16.msra.mxu0 0
    %3391 = vmatprep.subr.bf16.mxu0 0
    %3392 = vmatpush2.bf16.msra.mxu0 0
    %3393 = vmatprep.subr.bf16.mxu0 0
    %3394 = vmatpush2.bf16.msra.mxu0 0
    %3395 = vmatprep.subr.bf16.mxu0 0
    %3396 = vmatpush2.bf16.msra.mxu0 0
    %3397 = vmatprep.mubr.bf16.mxu0 0
    %3398 = vmatmul.mubr.bf16.gmra.mxu0 %v3300
    %v3399 = vpop.f32.mrf.mxu0
    %v3400 = vadd.f32 0.0, %v3399
    %v3401 = vpop.f32.mrf.mxu0
    %v3402 = vpop.f32.mrf.mxu0
    %v3403 = vpop.f32.mrf.mxu0
    %3404 = vdwg.mxu0
    %v3405 = vmul.f32 %v3400, 0.125
    %v3406 = vpack.c.bf16 %v3299, %v3299
    %3407 = vmatprep.subr.bf16.mxu0 0
    %3408 = vmatpush1.bf16.msra.mxu0 %v3356
    %3409 = vmatprep.subr.bf16.mxu0 0
    %3410 = vmatpush1.bf16.msra.mxu0 %v3355
    %3411 = vmatprep.subr.bf16.mxu0 0
    %3412 = vmatpush1.bf16.msra.mxu0 %v3354
    %3413 = vmatprep.subr.bf16.mxu0 0
    %3414 = vmatpush1.bf16.msra.mxu0 %v3353
    %3415 = vmatprep.subr.bf16.mxu0 0
    %3416 = vmatpush1.bf16.msra.mxu0 %v3352
    %3417 = vmatprep.subr.bf16.mxu0 0
    %3418 = vmatpush1.bf16.msra.mxu0 %v3351
    %3419 = vmatprep.subr.bf16.mxu0 0
    %3420 = vmatpush1.bf16.msra.mxu0 %v3350
    %3421 = vmatprep.subr.bf16.mxu0 0
    %3422 = vmatpush1.bf16.msra.mxu0 %v3349
    %3423 = vmatprep.subr.bf16.mxu0 0
    %3424 = vmatpush2.bf16.msra.mxu0 0
    %3425 = vmatprep.subr.bf16.mxu0 0
    %3426 = vmatpush2.bf16.msra.mxu0 0
    %3427 = vmatprep.subr.bf16.mxu0 0
    %3428 = vmatpush2.bf16.msra.mxu0 0
    %3429 = vmatprep.subr.bf16.mxu0 0
    %3430 = vmatpush2.bf16.msra.mxu0 0
    %3431 = vmatprep.subr.bf16.mxu0 0
    %3432 = vmatpush2.bf16.msra.mxu0 0
    %3433 = vmatprep.subr.bf16.mxu0 0
    %3434 = vmatpush2.bf16.msra.mxu0 0
    %3435 = vmatprep.subr.bf16.mxu0 0
    %3436 = vmatpush2.bf16.msra.mxu0 0
    %3437 = vmatprep.subr.bf16.mxu0 0
    %3438 = vmatpush2.bf16.msra.mxu0 0
    %3439 = vmatprep.mubr.bf16.mxu0 0
    %3440 = vmatmul.mubr.bf16.gmra.mxu0 %v3406
    %v3441 = vpop.f32.mrf.mxu0
    %v3442 = vadd.f32 0.0, %v3441
    %v3443 = vpop.f32.mrf.mxu0
    %v3444 = vpop.f32.mrf.mxu0
    %v3445 = vpop.f32.mrf.mxu0
    %3446 = vdwg.mxu0
    %v3447 = vmul.f32 %v3442, 0.125
    %v3448 = vmul.f32 %v3405, %v3405
    %v3449 = vsub.f32 %v3447, %v3448
    %v3450 = vmax.f32 %v3449, 0.0
    %v3451 = vadd.f32 %v3450, 1e-05
    %v3452 = vrsqrt.pop %v3451
    %v3453 = vmul.f32 %v3113, %v3452
    %v3454 = vmul.f32 %v3405, %v3453
    %v3455 = vsub.f32 %v3114, %v3454
    %v3456 = vpack.c.bf16 %v3453, %v3453
    %v3457 = vld [vmem:[%s9] sm:$0xf]
    %v3458 = vld [vmem:[%s9 + $0x4] sm:$0xf]
    %v3459 = vld [vmem:[%s9 + $0x8] sm:$0xf]
    %v3460 = vld [vmem:[%s9 + $0xc] sm:$0xf]
    %v3465 = vunpack.c.l.b16 %v3457
    %v3466 = vunpack.c.l.b16 %v3458
    %v3467 = vunpack.c.l.b16 %v3459
    %v3468 = vunpack.c.l.b16 %v3460
    %v3469 = vpack.c.b16 %v3466, %v3465
    %v3470 = vpack.c.b16 %v3468, %v3467
    %vm3473 = vcmask 261120
    %v3475 = vsel %vm3473, %v3456, 0
    %3477 = vmatprep.subr.bf16.mxu0 0
    %3478 = vmatpush1.bf16.msra.mxu0 0
    %3479 = vmatprep.subr.bf16.mxu0 0
    %3480 = vmatpush1.bf16.msra.mxu0 0
    %3481 = vmatprep.subr.bf16.mxu0 0
    %3482 = vmatpush1.bf16.msra.mxu0 0
    %3483 = vmatprep.subr.bf16.mxu0 0
    %3484 = vmatpush1.bf16.msra.mxu0 0
    %3485 = vmatprep.subr.bf16.mxu0 0
    %3486 = vmatpush1.bf16.msra.mxu0 0
    %3487 = vmatprep.subr.bf16.mxu0 0
    %3488 = vmatpush1.bf16.msra.mxu0 0
    %3489 = vmatprep.subr.bf16.mxu0 0
    %3490 = vmatpush1.bf16.msra.mxu0 %v3470
    %3491 = vmatprep.subr.bf16.mxu0 0
    %3492 = vmatpush1.bf16.msra.mxu0 %v3469
    %3493 = vmatprep.subr.bf16.mxu0 0
    %3494 = vmatpush2.bf16.msra.mxu0 0
    %3495 = vmatprep.subr.bf16.mxu0 0
    %3496 = vmatpush2.bf16.msra.mxu0 0
    %3497 = vmatprep.subr.bf16.mxu0 0
    %3498 = vmatpush2.bf16.msra.mxu0 0
    %3499 = vmatprep.subr.bf16.mxu0 0
    %3500 = vmatpush2.bf16.msra.mxu0 0
    %3501 = vmatprep.subr.bf16.mxu0 0
    %3502 = vmatpush2.bf16.msra.mxu0 0
    %3503 = vmatprep.subr.bf16.mxu0 0
    %3504 = vmatpush2.bf16.msra.mxu0 0
    %3505 = vmatprep.subr.bf16.mxu0 0
    %3506 = vmatpush2.bf16.msra.mxu0 0
    %3507 = vmatprep.subr.bf16.mxu0 0
    %3508 = vmatpush2.bf16.msra.mxu0 0
    %3509 = vmatprep.mubr.bf16.mxu0 0
    %3510 = vmatmul.mubr.bf16.gmra.mxu0 %v3475
    %v3511 = vpop.f32.mrf.mxu0
    %v3512 = vadd.f32 0.0, %v3511
    %v3513 = vpop.f32.mrf.mxu0
    %v3514 = vpop.f32.mrf.mxu0
    %v3515 = vpop.f32.mrf.mxu0
    %3516 = vdwg.mxu0
    %v3517 = vpack.c.bf16 %v3455, %v3455
    %v3519 = vsel %vm3473, %v3517, 0
    %3521 = vmatprep.subr.bf16.mxu0 0
    %3522 = vmatpush1.bf16.msra.mxu0 0
    %3523 = vmatprep.subr.bf16.mxu0 0
    %3524 = vmatpush1.bf16.msra.mxu0 0
    %3525 = vmatprep.subr.bf16.mxu0 0
    %3526 = vmatpush1.bf16.msra.mxu0 0
    %3527 = vmatprep.subr.bf16.mxu0 0
    %3528 = vmatpush1.bf16.msra.mxu0 0
    %3529 = vmatprep.subr.bf16.mxu0 0
    %3530 = vmatpush1.bf16.msra.mxu0 0
    %3531 = vmatprep.subr.bf16.mxu0 0
    %3532 = vmatpush1.bf16.msra.mxu0 0
    %3533 = vmatprep.subr.bf16.mxu0 0
    %3534 = vmatpush1.bf16.msra.mxu0 %v3470
    %3535 = vmatprep.subr.bf16.mxu0 0
    %3536 = vmatpush1.bf16.msra.mxu0 %v3469
    %3537 = vmatprep.subr.bf16.mxu0 0
    %3538 = vmatpush2.bf16.msra.mxu0 0
    %3539 = vmatprep.subr.bf16.mxu0 0
    %3540 = vmatpush2.bf16.msra.mxu0 0
    %3541 = vmatprep.subr.bf16.mxu0 0
    %3542 = vmatpush2.bf16.msra.mxu0 0
    %3543 = vmatprep.subr.bf16.mxu0 0
    %3544 = vmatpush2.bf16.msra.mxu0 0
    %3545 = vmatprep.subr.bf16.mxu0 0
    %3546 = vmatpush2.bf16.msra.mxu0 0
    %3547 = vmatprep.subr.bf16.mxu0 0
    %3548 = vmatpush2.bf16.msra.mxu0 0
    %3549 = vmatprep.subr.bf16.mxu0 0
    %3550 = vmatpush2.bf16.msra.mxu0 0
    %3551 = vmatprep.subr.bf16.mxu0 0
    %3552 = vmatpush2.bf16.msra.mxu0 0
    %3553 = vmatprep.mubr.bf16.mxu0 0
    %3554 = vmatmul.mubr.bf16.gmra.mxu0 %v3519
    %v3555 = vpop.f32.mrf.mxu0
    %v3556 = vadd.f32 0.0, %v3555
    %v3557 = vpop.f32.mrf.mxu0
    %v3558 = vpop.f32.mrf.mxu0
    %v3559 = vpop.f32.mrf.mxu0
    %3560 = vdwg.mxu0
    %v3561 = vlaneseq
    %v3562 = vshrl.u32 %v3561, 7
    %v3563 = vsub.s32 0, %v3562
    %v3564 = vrot.slane %v3512, %v3563
    %v3565 = vmul.f32 %v3280, %v3564
    %v3566 = vlaneseq
    %v3567 = vshrl.u32 %v3566, 7
    %v3568 = vsub.s32 0, %v3567
    %v3569 = vrot.slane %v3556, %v3568
    %v3570 = vadd.f32 %v3565, %v3569
    %v3571 = vmax.f32 %v3570, 0.0
    %v3572 = vpack.c.bf16 %v3571, %v3571
    %v3573 = vld [vmem:[%s10] sm:$0xf]
    %v3574 = vld [vmem:[%s10 + $0x4] sm:$0xf]
    %v3575 = vld [vmem:[%s10 + $0x8] sm:$0xf]
    %v3576 = vld [vmem:[%s10 + $0xc] sm:$0xf]
    %v3577 = vld [vmem:[%s10 + $0x10] sm:$0xf]
    %v3578 = vld [vmem:[%s10 + $0x14] sm:$0xf]
    %v3579 = vld [vmem:[%s10 + $0x18] sm:$0xf]
    %v3580 = vld [vmem:[%s10 + $0x1c] sm:$0xf]
    %v3581 = vld [vmem:[%s10 + $0x20] sm:$0xf]
    %v3582 = vld [vmem:[%s10 + $0x24] sm:$0xf]
    %v3583 = vld [vmem:[%s10 + $0x28] sm:$0xf]
    %v3584 = vld [vmem:[%s10 + $0x2c] sm:$0xf]
    %v3585 = vld [vmem:[%s10 + $0x30] sm:$0xf]
    %v3586 = vld [vmem:[%s10 + $0x34] sm:$0xf]
    %v3587 = vld [vmem:[%s10 + $0x38] sm:$0xf]
    %v3588 = vld [vmem:[%s10 + $0x3c] sm:$0xf]
    %v3605 = vunpack.c.l.b16 %v3573
    %v3606 = vunpack.c.l.b16 %v3574
    %v3607 = vunpack.c.l.b16 %v3575
    %v3608 = vunpack.c.l.b16 %v3576
    %v3609 = vunpack.c.l.b16 %v3577
    %v3610 = vunpack.c.l.b16 %v3578
    %v3611 = vunpack.c.l.b16 %v3579
    %v3612 = vunpack.c.l.b16 %v3580
    %v3613 = vunpack.c.l.b16 %v3581
    %v3614 = vunpack.c.l.b16 %v3582
    %v3615 = vunpack.c.l.b16 %v3583
    %v3616 = vunpack.c.l.b16 %v3584
    %v3617 = vunpack.c.l.b16 %v3585
    %v3618 = vunpack.c.l.b16 %v3586
    %v3619 = vunpack.c.l.b16 %v3587
    %v3620 = vunpack.c.l.b16 %v3588
    %v3621 = vpack.c.b16 %v3606, %v3605
    %v3622 = vpack.c.b16 %v3608, %v3607
    %v3623 = vpack.c.b16 %v3610, %v3609
    %v3624 = vpack.c.b16 %v3612, %v3611
    %v3625 = vpack.c.b16 %v3614, %v3613
    %v3626 = vpack.c.b16 %v3616, %v3615
    %v3627 = vpack.c.b16 %v3618, %v3617
    %v3628 = vpack.c.b16 %v3620, %v3619
    %3637 = vmatprep.subr.bf16.mxu0 0
    %3638 = vmatpush1.bf16.msra.mxu0 %v3628
    %3639 = vmatprep.subr.bf16.mxu0 0
    %3640 = vmatpush1.bf16.msra.mxu0 %v3627
    %3641 = vmatprep.subr.bf16.mxu0 0
    %3642 = vmatpush1.bf16.msra.mxu0 %v3626
    %3643 = vmatprep.subr.bf16.mxu0 0
    %3644 = vmatpush1.bf16.msra.mxu0 %v3625
    %3645 = vmatprep.subr.bf16.mxu0 0
    %3646 = vmatpush1.bf16.msra.mxu0 %v3624
    %3647 = vmatprep.subr.bf16.mxu0 0
    %3648 = vmatpush1.bf16.msra.mxu0 %v3623
    %3649 = vmatprep.subr.bf16.mxu0 0
    %3650 = vmatpush1.bf16.msra.mxu0 %v3622
    %3651 = vmatprep.subr.bf16.mxu0 0
    %3652 = vmatpush1.bf16.msra.mxu0 %v3621
    %3653 = vmatprep.subr.bf16.mxu0 0
    %3654 = vmatpush2.bf16.msra.mxu0 0
    %3655 = vmatprep.subr.bf16.mxu0 0
    %3656 = vmatpush2.bf16.msra.mxu0 0
    %3657 = vmatprep.subr.bf16.mxu0 0
    %3658 = vmatpush2.bf16.msra.mxu0 0
    %3659 = vmatprep.subr.bf16.mxu0 0
    %3660 = vmatpush2.bf16.msra.mxu0 0
    %3661 = vmatprep.subr.bf16.mxu0 0
    %3662 = vmatpush2.bf16.msra.mxu0 0
    %3663 = vmatprep.subr.bf16.mxu0 0
    %3664 = vmatpush2.bf16.msra.mxu0 0
    %3665 = vmatprep.subr.bf16.mxu0 0
    %3666 = vmatpush2.bf16.msra.mxu0 0
    %3667 = vmatprep.subr.bf16.mxu0 0
    %3668 = vmatpush2.bf16.msra.mxu0 0
    %3669 = vmatprep.mubr.bf16.mxu0 0
    %3670 = vmatmul.mubr.bf16.gmra.mxu0 %v3572
    %v3671 = vpop.f32.mrf.mxu0
    %v3672 = vadd.f32 0.0, %v3671
    %v3673 = vpop.f32.mrf.mxu0
    %v3674 = vpop.f32.mrf.mxu0
    %v3675 = vpop.f32.mrf.mxu0
    %3676 = vdwg.mxu0
    %vm3677 = vcmask 254976
    %v3678 = vsel %vm3677, %v3672, 0.0
    %v3679 = vrot.slane %v3678, 4
    %v3680 = vadd.f32 %v3678, %v3679
    %v3681 = vrot.slane %v3680, 2
    %v3682 = vadd.f32 %v3680, %v3681
    %v3683 = vrot.slane %v3682, 1
    %v3684 = vadd.f32 %v3682, %v3683
    %v3685 = vrcp.pop 2.0
    %v3686 = vmul.f32 %v3684, %v3685
    %v3687 = vsub.f32 %v3672, %v3686
    %v3688 = vmul.f32 %v3687, %v3687
    %v3689 = vsel %vm3677, %v3688, 0.0
    %v3690 = vrot.slane %v3689, 4
    %v3691 = vadd.f32 %v3689, %v3690
    %v3692 = vrot.slane %v3691, 2
    %v3693 = vadd.f32 %v3691, %v3692
    %v3694 = vrot.slane %v3693, 1
    %v3695 = vadd.f32 %v3693, %v3694
    %v3696 = vmul.f32 %v3695, %v3685
    %v3697 = vld [vmem:[#allocation6 + $0x6] sm:$0x1]
    %v3698 = vld [vmem:[#allocation6 + $0x7] sm:$0x1]
    %v3699 = vadd.f32 %v3696, 1e-05
    %v3700 = vrsqrt.pop %v3699
    %v3701 = vmul.f32 %v3697, %v3700
    %v3702 = vlaneseq
    %v3703 = vshrl.u32 %v3702, 7
    %v3704 = vsub.s32 0, %v3703
    %v3705 = vrot.slane %v3701, %v3704
    %v3706 = vmul.f32 %v3687, %v3705
    %v3707 = vlaneseq
    %v3708 = vshrl.u32 %v3707, 7
    %v3709 = vsub.s32 0, %v3708
    %v3710 = vrot.slane %v3698, %v3709
    %v3711 = vadd.f32 %v3706, %v3710
    %v3712 = vmax.f32 %v3711, 0.0
    %v3713 = vpack.c.bf16 %v3712, %v3712
    %v3714 = vld [vmem:[#allocation4] sm:$0xf]
    %v3715 = vld [vmem:[#allocation4 + $0x4] sm:$0xf]
    %v3716 = vld [vmem:[#allocation4 + $0x8] sm:$0xf]
    %v3717 = vld [vmem:[#allocation4 + $0xc] sm:$0xf]
    %v3718 = vld [vmem:[#allocation6 + $0x8] sm:$0x1]
    %v3719 = vlaneseq
    %v3720 = vshrl.u32 %v3719, 7
    %v3721 = vsub.s32 0, %v3720
    %v3722 = vrot.slane %v3718, %v3721
    %v3727 = vunpack.c.l.b16 %v3714
    %v3728 = vunpack.c.l.b16 %v3715
    %v3729 = vunpack.c.l.b16 %v3716
    %v3730 = vunpack.c.l.b16 %v3717
    %v3731 = vpack.c.b16 %v3728, %v3727
    %v3732 = vpack.c.b16 %v3730, %v3729
    %v3736 = vsel %vm3473, %v3713, 0
    %3738 = vmatprep.subr.bf16.mxu0 0
    %3739 = vmatpush1.bf16.msra.mxu0 0
    %3740 = vmatprep.subr.bf16.mxu0 0
    %3741 = vmatpush1.bf16.msra.mxu0 0
    %3742 = vmatprep.subr.bf16.mxu0 0
    %3743 = vmatpush1.bf16.msra.mxu0 0
    %3744 = vmatprep.subr.bf16.mxu0 0
    %3745 = vmatpush1.bf16.msra.mxu0 0
    %3746 = vmatprep.subr.bf16.mxu0 0
    %3747 = vmatpush1.bf16.msra.mxu0 0
    %3748 = vmatprep.subr.bf16.mxu0 0
    %3749 = vmatpush1.bf16.msra.mxu0 0
    %3750 = vmatprep.subr.bf16.mxu0 0
    %3751 = vmatpush1.bf16.msra.mxu0 %v3732
    %3752 = vmatprep.subr.bf16.mxu0 0
    %3753 = vmatpush1.bf16.msra.mxu0 %v3731
    %3754 = vmatprep.subr.bf16.mxu0 0
    %3755 = vmatpush2.bf16.msra.mxu0 0
    %3756 = vmatprep.subr.bf16.mxu0 0
    %3757 = vmatpush2.bf16.msra.mxu0 0
    %3758 = vmatprep.subr.bf16.mxu0 0
    %3759 = vmatpush2.bf16.msra.mxu0 0
    %3760 = vmatprep.subr.bf16.mxu0 0
    %3761 = vmatpush2.bf16.msra.mxu0 0
    %3762 = vmatprep.subr.bf16.mxu0 0
    %3763 = vmatpush2.bf16.msra.mxu0 0
    %3764 = vmatprep.subr.bf16.mxu0 0
    %3765 = vmatpush2.bf16.msra.mxu0 0
    %3766 = vmatprep.subr.bf16.mxu0 0
    %3767 = vmatpush2.bf16.msra.mxu0 0
    %3768 = vmatprep.subr.bf16.mxu0 0
    %3769 = vmatpush2.bf16.msra.mxu0 0
    %3770 = vmatprep.mubr.bf16.mxu0 0
    %3771 = vmatmul.mubr.bf16.gmra.mxu0 %v3736
    %v3772 = vpop.f32.mrf.mxu0
    %v3773 = vadd.f32 %v3722, %v3772
    %v3774 = vpop.f32.mrf.mxu0
    %v3775 = vpop.f32.mrf.mxu0
    %v3776 = vpop.f32.mrf.mxu0
    %3777 = vdwg.mxu0
    %3778 = vst [vmem:[%s13] sm:$0x3] %v3773
    // Predicated region
    $region66: #{encoder_forward.1} parent=1 // pred_check
      _
    $region67: #{encoder_forward.1} parent=1 // pred_check_branch
      %3780 = sbr.rel (0) target = $region69
    $region68: #{encoder_forward.1} parent=1 // pred_region
      _
    $region69: #{encoder_forward.1} parent=1 // pred_fallthru
      _
    // Predicated region
    $region70: #{encoder_forward.1} parent=1 // pred_check
      _
    $region71: #{encoder_forward.1} parent=1 // pred_check_branch
      %3782 = sbr.rel (0) target = $region73
    $region72: #{encoder_forward.1} parent=1 // pred_region
      _
    $region73: #{encoder_forward.1} parent=1 // pred_fallthru
      _
    %3783 = vsyncpa [#allocation3], 1
    %3784 = vsyncpa [#allocation5], 1

</llo_original>
